<compile_context>
chip_gen: v7x
topology: tpu7x:2x2x1
jax: 0.10.0
libtpu: 0.0.40
codegen_flags: <defaults>
</compile_context>

<pallas_src>
import jax
import jax.numpy as jnp
from jax.experimental import pallas as pl
from jax.experimental.pallas import tpu as pltpu

_EPS = 1e-5
_ALPHA = 0.2          # LeakyReLU negative slope


# ------------------------------ Pallas kernels -------------------------------

def _conv1_lrelu_kernel(x_ref, w_ref, o_ref):
    """Layer 1: conv-as-matmul (bf16 operands, f32 accum) + LeakyReLU."""
    y = jnp.dot(w_ref[...], x_ref[...], preferred_element_type=jnp.float32)
    o_ref[...] = jnp.maximum(y, _ALPHA * y)


def _bn_lrelu(y, g, b, inv_m):
    """Train-mode BatchNorm (one-pass batch stats) + LeakyReLU, all f32."""
    mean = jnp.sum(y, axis=1, keepdims=True) * inv_m
    msq = jnp.sum(y * y, axis=1, keepdims=True) * inv_m
    var = msq - mean * mean                      # biased variance (PyTorch train-mode)
    z = (y - mean) * (g * jax.lax.rsqrt(var + _EPS)) + b
    return jnp.maximum(z, _ALPHA * z)


def _conv_via_gather(a_bf, sel_ref, w_ref, n_taps, m_out):
    """Stride-2 conv entirely in VMEM.

    a_bf   : (Cin, Min)            bf16 input activation (pixel-major columns)
    sel_ref: (Min, n_taps*m_out)   bf16 0/1 selection matrix (in-kernel im2col)
    w_ref  : (Cout, n_taps*Cin)    bf16 weights, column order (tap, cin)
    returns: (Cout, m_out)         f32
    """
    p = jnp.dot(a_bf, sel_ref[...], preferred_element_type=jnp.float32)
    p = p.astype(jnp.bfloat16)                   # exact copies of bf16 activations
    pstk = jnp.concatenate(
        [p[:, t * m_out:(t + 1) * m_out] for t in range(n_taps)], axis=0)
    return jnp.dot(w_ref[...], pstk, preferred_element_type=jnp.float32)


def _make_fused_tail_kernel(m2, m3, m4, n):
    """Layers 2-5 fused: conv+BN+LReLU (x3) then conv+sigmoid, VMEM resident."""
    inv2, inv3, inv4 = 1.0 / m2, 1.0 / m3, 1.0 / m4

    def kernel(x2_ref, w2_ref, g2_ref, b2_ref,
               s3_ref, w3_ref, g3_ref, b3_ref,
               s4_ref, w4_ref, g4_ref, b4_ref,
               w5_ref, o_ref):
        # ---- layer 2: conv (patches precomputed) + BN + LeakyReLU -----------
        y2 = jnp.dot(w2_ref[...], x2_ref[...], preferred_element_type=jnp.float32)
        a2 = _bn_lrelu(y2, g2_ref[...], b2_ref[...], inv2).astype(jnp.bfloat16)

        # ---- layer 3: in-kernel stride-2 im2col (gather matmul) + conv + BN + LReLU
        y3 = _conv_via_gather(a2, s3_ref, w3_ref, 16, m3)
        a3 = _bn_lrelu(y3, g3_ref[...], b3_ref[...], inv3).astype(jnp.bfloat16)

        # ---- layer 4 ---------------------------------------------------------
        y4 = _conv_via_gather(a3, s4_ref, w4_ref, 16, m4)
        a4 = _bn_lrelu(y4, g4_ref[...], b4_ref[...], inv4).astype(jnp.bfloat16)

        # ---- layer 5: 4x4 "full" conv (per-pixel slices) + sigmoid ----------
        a4stk = jnp.concatenate(
            [a4[:, s * n:(s + 1) * n] for s in range(16)], axis=0)   # (16*C4, N)
        y5 = jnp.dot(w5_ref[...], a4stk, preferred_element_type=jnp.float32)
        o_ref[...] = pl.reciprocal(1.0 + jnp.exp(-y5), approx=True)

    return kernel


# --------------------------- layer-level wrappers ----------------------------

def _conv1_lrelu(xT_bf16, w1m_bf16, tm_max=2048):
    """xT: (16, M) bf16, w1m: (dh, 16) bf16 -> (dh, M) f32, tiled over M."""
    Cout, K = w1m_bf16.shape
    _, M = xT_bf16.shape
    tm = min(M, tm_max)
    return pl.pallas_call(
        _conv1_lrelu_kernel,
        out_shape=jax.ShapeDtypeStruct((Cout, M), jnp.float32),
        grid=(pl.cdiv(M, tm),),
        in_specs=[pl.BlockSpec((K, tm), lambda m: (0, m)),
                  pl.BlockSpec((Cout, K), lambda m: (0, 0))],
        out_specs=pl.BlockSpec((Cout, tm), lambda m: (0, m)),
        compiler_params=pltpu.CompilerParams(
            dimension_semantics=("parallel",)),
    )(xT_bf16, w1m_bf16)


def _fused_tail(x2p, w2m, g2, b2, s3, w3m, g3, b3, s4, w4m, g4, b4, w5f, n):
    """Single pallas_call running layers 2-5 with VMEM-resident activations."""
    _, M2 = x2p.shape
    M3 = s3.shape[1] // 16
    M4 = s4.shape[1] // 16

    def col(c):
        return c.reshape(-1, 1).astype(jnp.float32)

    def full(shape):
        return pl.BlockSpec(shape, lambda i: (0, 0))

    args = (x2p, w2m, col(g2), col(b2),
            s3, w3m, col(g3), col(b3),
            s4, w4m, col(g4), col(b4), w5f)
    return pl.pallas_call(
        _make_fused_tail_kernel(M2, M3, M4, n),
        out_shape=jax.ShapeDtypeStruct((1, n), jnp.float32),
        grid=(1,),
        in_specs=[full(a.shape) for a in args],
        out_specs=full((1, n)),
        compiler_params=pltpu.CompilerParams(
            dimension_semantics=("arbitrary",)),
    )(*args)


# ------------------------------- XLA-side glue -------------------------------

def _space_to_depth_T(x):
    """x: (N, 1, 128, 128) -> (16, N*32*32); stride==kernel so no duplication."""
    N = x.shape[0]
    h = x.reshape(N, 32, 4, 32, 4)              # (n, ho, ky, wo, kx)
    h = jnp.transpose(h, (2, 4, 0, 1, 3))       # (ky, kx, n, ho, wo)
    return h.reshape(16, N * 32 * 32)


def _im2col_pixel_major(x_cnhw, k, stride, pad):
    """(C, N, H, W) -> (k*k*C, Ho*Wo*N); rows (tap, c), columns (pixel, n)."""
    C, N, H, W = x_cnhw.shape
    Ho = (H + 2 * pad - k) // stride + 1
    Wo = (W + 2 * pad - k) // stride + 1
    xp = jnp.pad(x_cnhw, ((0, 0), (0, 0), (pad, pad), (pad, pad)))
    taps = []
    for ky in range(k):
        for kx in range(k):
            taps.append(xp[:, :, ky:ky + stride * (Ho - 1) + 1:stride,
                               kx:kx + stride * (Wo - 1) + 1:stride])
    xt = jnp.stack(taps, 0)                     # (k*k, C, N, Ho, Wo)
    xt = jnp.transpose(xt, (0, 1, 3, 4, 2))     # (k*k, C, Ho, Wo, N)
    return xt.reshape(k * k * C, Ho * Wo * N)


def _conv_gather_matrix(h_in, h_out, k, stride, pad, n):
    """0/1 selection matrix (Hin*Hin*N, k*k*Hout*Hout*N) for in-kernel im2col.

    Row index  = (h*h_in + w)*N + batch        (input pixel, batch-minor)
    Col index  = (tap*Hout*Hout + pout)*N + batch
    """
    ky, kx, ho, wo = jnp.meshgrid(jnp.arange(k), jnp.arange(k),
                                  jnp.arange(h_out), jnp.arange(h_out),
                                  indexing="ij")
    sh = stride * ho + ky - pad
    sw = stride * wo + kx - pad
    valid = (sh >= 0) & (sh < h_in) & (sw >= 0) & (sw < h_in)
    src = jnp.where(valid, sh * h_in + sw, -1).reshape(-1)
    gs = (jnp.arange(h_in * h_in)[:, None] == src[None, :]).astype(jnp.float32)
    return jnp.kron(gs, jnp.eye(n, dtype=jnp.float32))


def _wT(w):
    """PyTorch Conv2d weight (Cout, Cin, kh, kw) -> (Cout, kh*kw*Cin)."""
    Cout, Cin, kh, kw = w.shape
    return jnp.transpose(w, (0, 2, 3, 1)).reshape(Cout, kh * kw * Cin)


def discriminator_128_forward(x_nchw, p):
    """Pallas implementation of Discriminator_128.forward. Input NCHW (N,1,128,128)."""
    N = x_nchw.shape[0]
    dh = p["w1"].shape[0]
    bf = lambda a: a.astype(jnp.bfloat16)

    # Layer 1: space-to-depth (pure reshape) + matmul/LReLU kernel.     128 -> 32
    x1 = _space_to_depth_T(x_nchw.astype(jnp.float32))                  # (16, 1024N)
    a1 = _conv1_lrelu(bf(x1), bf(_wT(p["w1"])))                          # (dh, 1024N) f32
    a1 = a1.reshape(dh, N, 32, 32)

    # Layer-2 patches: the only remaining XLA-side im2col.              32 -> 16
    x2p = _im2col_pixel_major(a1, 4, 2, 1)                               # (16dh, 256N)

    # Selection matrices for the in-kernel stride-2 im2col of layers 3/4.
    s3 = _conv_gather_matrix(16, 8, 4, 2, 1, N)                          # (256N, 1024N)
    s4 = _conv_gather_matrix(8, 4, 4, 2, 1, N)                           # (64N,  256N)

    out = _fused_tail(
        bf(x2p), bf(_wT(p["w2"])), p["g2"], p["b2"],
        bf(s3), bf(_wT(p["w3"])), p["g3"], p["b3"],
        bf(s4), bf(_wT(p["w4"])), p["g4"], p["b4"],
        bf(_wT(p["w5"])), N)                                             # (1, N)
    return out.reshape(-1)                                               # (N,)


# ----------------------------- params / reference ----------------------------

def init_params(key, dh):
    ks = jax.random.split(key, 8)

    def cw(k, cout, cin):       # Conv2d weight (Cout, Cin, 4, 4)
        return (0.05 * jax.random.normal(k, (cout, cin, 4, 4))).astype(jnp.float32)

    p = {"w1": cw(ks[0], dh, 1),
         "w2": cw(ks[1], dh * 2, dh),
         "w3": cw(ks[2], dh * 4, dh * 2),
         "w4": cw(ks[3], dh * 8, dh * 4),
         "w5": cw(ks[4], 1, dh * 8)}
    for i, c in zip((2, 3, 4), (dh * 2, dh * 4, dh * 8)):
        kg, kb = jax.random.split(ks[3 + i], 2)
        p[f"g{i}"] = (1.0 + 0.1 * jax.random.normal(kg, (c,))).astype(jnp.float32)
        p[f"b{i}"] = (0.1 * jax.random.normal(kb, (c,))).astype(jnp.float32)
    return p


def _ref_forward(x, p):
    def conv(h, w, stride, pad):
        return jax.lax.conv_general_dilated(
            h, w, window_strides=(stride, stride),
            padding=[(pad, pad), (pad, pad)],
            dimension_numbers=("NCHW", "OIHW", "NCHW"))

    def bn(h, g, b):
        mean = h.mean(axis=(0, 2, 3), keepdims=True)
        var = ((h - mean) ** 2).mean(axis=(0, 2, 3), keepdims=True)
        hn = (h - mean) / jnp.sqrt(var + _EPS)
        return hn * g[None, :, None, None] + b[None, :, None, None]

    def lrelu(h):
        return jnp.where(h > 0, h, _ALPHA * h)

    h = lrelu(conv(x, p["w1"], 4, 0))
    h = lrelu(bn(conv(h, p["w2"], 2, 1), p["g2"], p["b2"]))
    h = lrelu(bn(conv(h, p["w3"], 2, 1), p["g3"], p["b3"]))
    h = lrelu(bn(conv(h, p["w4"], 2, 1), p["g4"], p["b4"]))
    h = jax.nn.sigmoid(conv(h, p["w5"], 1, 0))
    return h.reshape(-1)


# ----------------------------------- main -------------------------------------

if __name__ == "__main__":
    D_HIDDEN, N = 8, 2
    key = jax.random.PRNGKey(0)
    kx, kp = jax.random.split(key)
    params = init_params(kp, D_HIDDEN)
    x = jax.random.normal(kx, (N, 1, 128, 128), jnp.float32)

    out = jax.jit(discriminator_128_forward)(x, params)
    out = jax.block_until_ready(out)
    assert out.shape == (N,), out.shape

    ref = _ref_forward(x, params)
    err = float(jnp.max(jnp.abs(out - ref)))
    assert err < 2.5e-2, f"max abs error vs reference: {err}"
    print("KERNEL_OK")
</pallas_src>

<mosaic_0001>
module attributes {stable_mosaic.version = 11 : i64} {
  func.func @_conv1_lrelu_kernel(%arg0: i32, %arg1: memref<16x2048xbf16, #tpu.memory_space<vmem>>, %arg2: memref<8x16xbf16, #tpu.memory_space<vmem>>, %arg3: memref<8x2048xf32, #tpu.memory_space<vmem>>) attributes {dimension_semantics = [#tpu.dimension_semantics<parallel>], iteration_bounds = array<i64: 1>, scalar_prefetch = 0 : i64, scratch_operands = 0 : i64, tpu.core_type = #tpu.core_type<tc>, window_params = [{transform_indices = @transform_0, window_bounds = array<i64: 16, 2048>}, {pipeline_mode = #tpu.pipeline_mode<synchronous>, transform_indices = @transform_1, window_bounds = array<i64: 8, 16>}, {transform_indices = @transform_2, window_bounds = array<i64: 8, 2048>}]} {
    %c0 = arith.constant 0 : index
    %c0_0 = arith.constant 0 : index
    %0 = vector.load %arg2[%c0, %c0_0] : memref<8x16xbf16, #tpu.memory_space<vmem>>, vector<8x16xbf16>
    %c0_1 = arith.constant 0 : index
    %c0_2 = arith.constant 0 : index
    %1 = vector.load %arg1[%c0_1, %c0_2] : memref<16x2048xbf16, #tpu.memory_space<vmem>>, vector<16x2048xbf16>
    %cst = arith.constant dense<0.000000e+00> : vector<8x2048xf32>
    %2 = tpu.matmul %0, %1, %cst {dimension_numbers = #tpu.dot_dimension_numbers<[1], [0], [0], [1], [0, 0, 1, 1], [], []>} : vector<8x16xbf16>, vector<16x2048xbf16>, vector<8x2048xf32> -> vector<8x2048xf32>
    %cst_3 = arith.constant 2.000000e-01 : f32
    %3 = vector.broadcast %cst_3 : f32 to vector<8x2048xf32>
    %4 = arith.mulf %3, %2 : vector<8x2048xf32>
    %5 = arith.maximumf %2, %4 : vector<8x2048xf32>
    %c0_4 = arith.constant 0 : index
    %c0_5 = arith.constant 0 : index
    %6 = vector.load %arg3[%c0_4, %c0_5] : memref<8x2048xf32, #tpu.memory_space<vmem>>, vector<8x2048xf32>
    tpu.vector_store %arg3[%c0_4, %c0_5], %5 {strides = array<i32>} : memref<8x2048xf32, #tpu.memory_space<vmem>>, vector<8x2048xf32>,
    return
  }
  func.func @transform_0(%arg0: i32) -> (i32, i32) {
    %c0_i32 = arith.constant 0 : i32
    %c0_i32_0 = arith.constant 0 : i32
    return %c0_i32, %arg0 : i32, i32
  }
  func.func @transform_1(%arg0: i32) -> (i32, i32) {
    %c0_i32 = arith.constant 0 : i32
    %c0_i32_0 = arith.constant 0 : i32
    %c0_i32_1 = arith.constant 0 : i32
    return %c0_i32, %c0_i32_0 : i32, i32
  }
  func.func @transform_2(%arg0: i32) -> (i32, i32) {
    %c0_i32 = arith.constant 0 : i32
    %c0_i32_0 = arith.constant 0 : i32
    return %c0_i32, %arg0 : i32, i32
  }
}

module attributes {stable_mosaic.version = 11 : i64} {
  func.func @kernel(%arg0: i32, %arg1: memref<128x512xbf16, #tpu.memory_space<vmem>>, %arg2: memref<16x128xbf16, #tpu.memory_space<vmem>>, %arg3: memref<16x1xf32, #tpu.memory_space<vmem>>, %arg4: memref<16x1xf32, #tpu.memory_space<vmem>>, %arg5: memref<512x2048xbf16, #tpu.memory_space<vmem>>, %arg6: memref<32x256xbf16, #tpu.memory_space<vmem>>, %arg7: memref<32x1xf32, #tpu.memory_space<vmem>>, %arg8: memref<32x1xf32, #tpu.memory_space<vmem>>, %arg9: memref<128x512xbf16, #tpu.memory_space<vmem>>, %arg10: memref<64x512xbf16, #tpu.memory_space<vmem>>, %arg11: memref<64x1xf32, #tpu.memory_space<vmem>>, %arg12: memref<64x1xf32, #tpu.memory_space<vmem>>, %arg13: memref<1x1024xbf16, #tpu.memory_space<vmem>>, %arg14: memref<1x2xf32, #tpu.memory_space<vmem>>) attributes {dimension_semantics = [#tpu.dimension_semantics<arbitrary>], iteration_bounds = array<i64: 1>, scalar_prefetch = 0 : i64, scratch_operands = 0 : i64, tpu.core_type = #tpu.core_type<tc>, window_params = [{pipeline_mode = #tpu.pipeline_mode<synchronous>, transform_indices = @transform_0, window_bounds = array<i64: 128, 512>}, {pipeline_mode = #tpu.pipeline_mode<synchronous>, transform_indices = @transform_1, window_bounds = array<i64: 16, 128>}, {pipeline_mode = #tpu.pipeline_mode<synchronous>, transform_indices = @transform_2, window_bounds = array<i64: 16, 1>}, {pipeline_mode = #tpu.pipeline_mode<synchronous>, transform_indices = @transform_3, window_bounds = array<i64: 16, 1>}, {pipeline_mode = #tpu.pipeline_mode<synchronous>, transform_indices = @transform_4, window_bounds = array<i64: 512, 2048>}, {pipeline_mode = #tpu.pipeline_mode<synchronous>, transform_indices = @transform_5, window_bounds = array<i64: 32, 256>}, {pipeline_mode = #tpu.pipeline_mode<synchronous>, transform_indices = @transform_6, window_bounds = array<i64: 32, 1>}, {pipeline_mode = #tpu.pipeline_mode<synchronous>, transform_indices = @transform_7, window_bounds = array<i64: 32, 1>}, {pipeline_mode = #tpu.pipeline_mode<synchronous>, transform_indices = @transform_8, window_bounds = array<i64: 128, 512>}, {pipeline_mode = #tpu.pipeline_mode<synchronous>, transform_indices = @transform_9, window_bounds = array<i64: 64, 512>}, {pipeline_mode = #tpu.pipeline_mode<synchronous>, transform_indices = @transform_10, window_bounds = array<i64: 64, 1>}, {pipeline_mode = #tpu.pipeline_mode<synchronous>, transform_indices = @transform_11, window_bounds = array<i64: 64, 1>}, {pipeline_mode = #tpu.pipeline_mode<synchronous>, transform_indices = @transform_12, window_bounds = array<i64: 1, 1024>}, {pipeline_mode = #tpu.pipeline_mode<synchronous>, transform_indices = @transform_13, window_bounds = array<i64: 1, 2>}]} {
    %c0 = arith.constant 0 : index
    %c0_0 = arith.constant 0 : index
    %0 = vector.load %arg2[%c0, %c0_0] : memref<16x128xbf16, #tpu.memory_space<vmem>>, vector<16x128xbf16>
    %c0_1 = arith.constant 0 : index
    %c0_2 = arith.constant 0 : index
    %1 = vector.load %arg1[%c0_1, %c0_2] : memref<128x512xbf16, #tpu.memory_space<vmem>>, vector<128x512xbf16>
    %cst = arith.constant dense<0.000000e+00> : vector<16x512xf32>
    %2 = tpu.matmul %0, %1, %cst {dimension_numbers = #tpu.dot_dimension_numbers<[1], [0], [0], [1], [0, 0, 1, 1], [], []>} : vector<16x128xbf16>, vector<128x512xbf16>, vector<16x512xf32> -> vector<16x512xf32>
    %c0_3 = arith.constant 0 : index
    %c0_4 = arith.constant 0 : index
    %3 = vector.load %arg3[%c0_3, %c0_4] : memref<16x1xf32, #tpu.memory_space<vmem>>, vector<16x1xf32>
    %c0_5 = arith.constant 0 : index
    %c0_6 = arith.constant 0 : index
    %4 = vector.load %arg4[%c0_5, %c0_6] : memref<16x1xf32, #tpu.memory_space<vmem>>, vector<16x1xf32>
    %cst_7 = arith.constant dense<0.000000e+00> : vector<16xf32>
    %5 = vector.multi_reduction <add>, %2, %cst_7 [1] : vector<16x512xf32> to vector<16xf32>
    %6 = vector.shape_cast %5 : vector<16xf32> to vector<16x1xf32>
    %cst_8 = arith.constant 0.001953125 : f32
    %7 = vector.broadcast %cst_8 : f32 to vector<16x1xf32>
    %8 = arith.mulf %6, %7 : vector<16x1xf32>
    %9 = arith.mulf %2, %2 : vector<16x512xf32>
    %cst_9 = arith.constant dense<0.000000e+00> : vector<16xf32>
    %10 = vector.multi_reduction <add>, %9, %cst_9 [1] : vector<16x512xf32> to vector<16xf32>
    %11 = vector.shape_cast %10 : vector<16xf32> to vector<16x1xf32>
    %cst_10 = arith.constant 0.001953125 : f32
    %12 = vector.broadcast %cst_10 : f32 to vector<16x1xf32>
    %13 = arith.mulf %11, %12 : vector<16x1xf32>
    %14 = arith.mulf %8, %8 : vector<16x1xf32>
    %15 = arith.subf %13, %14 : vector<16x1xf32>
    %16 = vector.broadcast %8 : vector<16x1xf32> to vector<16x512xf32>
    %17 = arith.subf %2, %16 : vector<16x512xf32>
    %cst_11 = arith.constant 9.99999974E-6 : f32
    %18 = vector.broadcast %cst_11 : f32 to vector<16x1xf32>
    %19 = arith.addf %15, %18 : vector<16x1xf32>
    %20 = math.rsqrt %19 : vector<16x1xf32>
    %21 = arith.mulf %3, %20 : vector<16x1xf32>
    %22 = vector.broadcast %21 : vector<16x1xf32> to vector<16x512xf32>
    %23 = arith.mulf %17, %22 : vector<16x512xf32>
    %24 = vector.broadcast %4 : vector<16x1xf32> to vector<16x512xf32>
    %25 = arith.addf %23, %24 : vector<16x512xf32>
    %cst_12 = arith.constant 2.000000e-01 : f32
    %26 = vector.broadcast %cst_12 : f32 to vector<16x512xf32>
    %27 = arith.mulf %26, %25 : vector<16x512xf32>
    %28 = arith.maximumf %25, %27 : vector<16x512xf32>
    %29 = arith.truncf %28 : vector<16x512xf32> to vector<16x512xbf16>
    %c0_13 = arith.constant 0 : index
    %c0_14 = arith.constant 0 : index
    %30 = vector.load %arg5[%c0_13, %c0_14] : memref<512x2048xbf16, #tpu.memory_space<vmem>>, vector<512x2048xbf16>
    %cst_15 = arith.constant dense<0.000000e+00> : vector<16x2048xf32>
    %31 = tpu.matmul %29, %30, %cst_15 {dimension_numbers = #tpu.dot_dimension_numbers<[1], [0], [0], [1], [0, 0, 1, 1], [], []>} : vector<16x512xbf16>, vector<512x2048xbf16>, vector<16x2048xf32> -> vector<16x2048xf32>
    %32 = arith.truncf %31 : vector<16x2048xf32> to vector<16x2048xbf16>
    %33 = vector.extract_strided_slice %32 {offsets = [0, 0], sizes = [16, 128], strides = [1, 1]} : vector<16x2048xbf16> to vector<16x128xbf16>
    %34 = vector.extract_strided_slice %32 {offsets = [0, 128], sizes = [16, 128], strides = [1, 1]} : vector<16x2048xbf16> to vector<16x128xbf16>
    %35 = vector.extract_strided_slice %32 {offsets = [0, 256], sizes = [16, 128], strides = [1, 1]} : vector<16x2048xbf16> to vector<16x128xbf16>
    %36 = vector.extract_strided_slice %32 {offsets = [0, 384], sizes = [16, 128], strides = [1, 1]} : vector<16x2048xbf16> to vector<16x128xbf16>
    %37 = vector.extract_strided_slice %32 {offsets = [0, 512], sizes = [16, 128], strides = [1, 1]} : vector<16x2048xbf16> to vector<16x128xbf16>
    %38 = vector.extract_strided_slice %32 {offsets = [0, 640], sizes = [16, 128], strides = [1, 1]} : vector<16x2048xbf16> to vector<16x128xbf16>
    %39 = vector.extract_strided_slice %32 {offsets = [0, 768], sizes = [16, 128], strides = [1, 1]} : vector<16x2048xbf16> to vector<16x128xbf16>
    %40 = vector.extract_strided_slice %32 {offsets = [0, 896], sizes = [16, 128], strides = [1, 1]} : vector<16x2048xbf16> to vector<16x128xbf16>
    %41 = vector.extract_strided_slice %32 {offsets = [0, 1024], sizes = [16, 128], strides = [1, 1]} : vector<16x2048xbf16> to vector<16x128xbf16>
    %42 = vector.extract_strided_slice %32 {offsets = [0, 1152], sizes = [16, 128], strides = [1, 1]} : vector<16x2048xbf16> to vector<16x128xbf16>
    %43 = vector.extract_strided_slice %32 {offsets = [0, 1280], sizes = [16, 128], strides = [1, 1]} : vector<16x2048xbf16> to vector<16x128xbf16>
    %44 = vector.extract_strided_slice %32 {offsets = [0, 1408], sizes = [16, 128], strides = [1, 1]} : vector<16x2048xbf16> to vector<16x128xbf16>
    %45 = vector.extract_strided_slice %32 {offsets = [0, 1536], sizes = [16, 128], strides = [1, 1]} : vector<16x2048xbf16> to vector<16x128xbf16>
    %46 = vector.extract_strided_slice %32 {offsets = [0, 1664], sizes = [16, 128], strides = [1, 1]} : vector<16x2048xbf16> to vector<16x128xbf16>
    %47 = vector.extract_strided_slice %32 {offsets = [0, 1792], sizes = [16, 128], strides = [1, 1]} : vector<16x2048xbf16> to vector<16x128xbf16>
    %48 = vector.extract_strided_slice %32 {offsets = [0, 1920], sizes = [16, 128], strides = [1, 1]} : vector<16x2048xbf16> to vector<16x128xbf16>
    %49 = tpu.concatenate %33, %34, %35, %36, %37, %38, %39, %40, %41, %42, %43, %44, %45, %46, %47, %48 in 0 : vector<16x128xbf16>, vector<16x128xbf16>, vector<16x128xbf16>, vector<16x128xbf16>, vector<16x128xbf16>, vector<16x128xbf16>, vector<16x128xbf16>, vector<16x128xbf16>, vector<16x128xbf16>, vector<16x128xbf16>, vector<16x128xbf16>, vector<16x128xbf16>, vector<16x128xbf16>, vector<16x128xbf16>, vector<16x128xbf16>, vector<16x128xbf16> -> vector<256x128xbf16>
    %c0_16 = arith.constant 0 : index
    %c0_17 = arith.constant 0 : index
    %50 = vector.load %arg6[%c0_16, %c0_17] : memref<32x256xbf16, #tpu.memory_space<vmem>>, vector<32x256xbf16>
    %cst_18 = arith.constant dense<0.000000e+00> : vector<32x128xf32>
    %51 = tpu.matmul %50, %49, %cst_18 {dimension_numbers = #tpu.dot_dimension_numbers<[1], [0], [0], [1], [0, 0, 1, 1], [], []>} : vector<32x256xbf16>, vector<256x128xbf16>, vector<32x128xf32> -> vector<32x128xf32>
    %c0_19 = arith.constant 0 : index
    %c0_20 = arith.constant 0 : index
    %52 = vector.load %arg7[%c0_19, %c0_20] : memref<32x1xf32, #tpu.memory_space<vmem>>, vector<32x1xf32>
    %c0_21 = arith.constant 0 : index
    %c0_22 = arith.constant 0 : index
    %53 = vector.load %arg8[%c0_21, %c0_22] : memref<32x1xf32, #tpu.memory_space<vmem>>, vector<32x1xf32>
    %cst_23 = arith.constant dense<0.000000e+00> : vector<32xf32>
    %54 = vector.multi_reduction <add>, %51, %cst_23 [1] : vector<32x128xf32> to vector<32xf32>
    %55 = vector.shape_cast %54 : vector<32xf32> to vector<32x1xf32>
    %cst_24 = arith.constant 7.812500e-03 : f32
    %56 = vector.broadcast %cst_24 : f32 to vector<32x1xf32>
    %57 = arith.mulf %55, %56 : vector<32x1xf32>
    %58 = arith.mulf %51, %51 : vector<32x128xf32>
    %cst_25 = arith.constant dense<0.000000e+00> : vector<32xf32>
    %59 = vector.multi_reduction <add>, %58, %cst_25 [1] : vector<32x128xf32> to vector<32xf32>
    %60 = vector.shape_cast %59 : vector<32xf32> to vector<32x1xf32>
    %cst_26 = arith.constant 7.812500e-03 : f32
    %61 = vector.broadcast %cst_26 : f32 to vector<32x1xf32>
    %62 = arith.mulf %60, %61 : vector<32x1xf32>
    %63 = arith.mulf %57, %57 : vector<32x1xf32>
    %64 = arith.subf %62, %63 : vector<32x1xf32>
    %65 = vector.broadcast %57 : vector<32x1xf32> to vector<32x128xf32>
    %66 = arith.subf %51, %65 : vector<32x128xf32>
    %cst_27 = arith.constant 9.99999974E-6 : f32
    %67 = vector.broadcast %cst_27 : f32 to vector<32x1xf32>
    %68 = arith.addf %64, %67 : vector<32x1xf32>
    %69 = math.rsqrt %68 : vector<32x1xf32>
    %70 = arith.mulf %52, %69 : vector<32x1xf32>
    %71 = vector.broadcast %70 : vector<32x1xf32> to vector<32x128xf32>
    %72 = arith.mulf %66, %71 : vector<32x128xf32>
    %73 = vector.broadcast %53 : vector<32x1xf32> to vector<32x128xf32>
    %74 = arith.addf %72, %73 : vector<32x128xf32>
    %cst_28 = arith.constant 2.000000e-01 : f32
    %75 = vector.broadcast %cst_28 : f32 to vector<32x128xf32>
    %76 = arith.mulf %75, %74 : vector<32x128xf32>
    %77 = arith.maximumf %74, %76 : vector<32x128xf32>
    %78 = arith.truncf %77 : vector<32x128xf32> to vector<32x128xbf16>
    %c0_29 = arith.constant 0 : index
    %c0_30 = arith.constant 0 : index
    %79 = vector.load %arg9[%c0_29, %c0_30] : memref<128x512xbf16, #tpu.memory_space<vmem>>, vector<128x512xbf16>
    %cst_31 = arith.constant dense<0.000000e+00> : vector<32x512xf32>
    %80 = tpu.matmul %78, %79, %cst_31 {dimension_numbers = #tpu.dot_dimension_numbers<[1], [0], [0], [1], [0, 0, 1, 1], [], []>} : vector<32x128xbf16>, vector<128x512xbf16>, vector<32x512xf32> -> vector<32x512xf32>
    %81 = arith.truncf %80 : vector<32x512xf32> to vector<32x512xbf16>
    %82 = vector.extract_strided_slice %81 {offsets = [0, 0], sizes = [32, 32], strides = [1, 1]} : vector<32x512xbf16> to vector<32x32xbf16>
    %83 = vector.extract_strided_slice %81 {offsets = [0, 32], sizes = [32, 32], strides = [1, 1]} : vector<32x512xbf16> to vector<32x32xbf16>
    %84 = vector.extract_strided_slice %81 {offsets = [0, 64], sizes = [32, 32], strides = [1, 1]} : vector<32x512xbf16> to vector<32x32xbf16>
    %85 = vector.extract_strided_slice %81 {offsets = [0, 96], sizes = [32, 32], strides = [1, 1]} : vector<32x512xbf16> to vector<32x32xbf16>
    %86 = vector.extract_strided_slice %81 {offsets = [0, 128], sizes = [32, 32], strides = [1, 1]} : vector<32x512xbf16> to vector<32x32xbf16>
    %87 = vector.extract_strided_slice %81 {offsets = [0, 160], sizes = [32, 32], strides = [1, 1]} : vector<32x512xbf16> to vector<32x32xbf16>
    %88 = vector.extract_strided_slice %81 {offsets = [0, 192], sizes = [32, 32], strides = [1, 1]} : vector<32x512xbf16> to vector<32x32xbf16>
    %89 = vector.extract_strided_slice %81 {offsets = [0, 224], sizes = [32, 32], strides = [1, 1]} : vector<32x512xbf16> to vector<32x32xbf16>
    %90 = vector.extract_strided_slice %81 {offsets = [0, 256], sizes = [32, 32], strides = [1, 1]} : vector<32x512xbf16> to vector<32x32xbf16>
    %91 = vector.extract_strided_slice %81 {offsets = [0, 288], sizes = [32, 32], strides = [1, 1]} : vector<32x512xbf16> to vector<32x32xbf16>
    %92 = vector.extract_strided_slice %81 {offsets = [0, 320], sizes = [32, 32], strides = [1, 1]} : vector<32x512xbf16> to vector<32x32xbf16>
    %93 = vector.extract_strided_slice %81 {offsets = [0, 352], sizes = [32, 32], strides = [1, 1]} : vector<32x512xbf16> to vector<32x32xbf16>
    %94 = vector.extract_strided_slice %81 {offsets = [0, 384], sizes = [32, 32], strides = [1, 1]} : vector<32x512xbf16> to vector<32x32xbf16>
    %95 = vector.extract_strided_slice %81 {offsets = [0, 416], sizes = [32, 32], strides = [1, 1]} : vector<32x512xbf16> to vector<32x32xbf16>
    %96 = vector.extract_strided_slice %81 {offsets = [0, 448], sizes = [32, 32], strides = [1, 1]} : vector<32x512xbf16> to vector<32x32xbf16>
    %97 = vector.extract_strided_slice %81 {offsets = [0, 480], sizes = [32, 32], strides = [1, 1]} : vector<32x512xbf16> to vector<32x32xbf16>
    %98 = tpu.concatenate %82, %83, %84, %85, %86, %87, %88, %89, %90, %91, %92, %93, %94, %95, %96, %97 in 0 : vector<32x32xbf16>, vector<32x32xbf16>, vector<32x32xbf16>, vector<32x32xbf16>, vector<32x32xbf16>, vector<32x32xbf16>, vector<32x32xbf16>, vector<32x32xbf16>, vector<32x32xbf16>, vector<32x32xbf16>, vector<32x32xbf16>, vector<32x32xbf16>, vector<32x32xbf16>, vector<32x32xbf16>, vector<32x32xbf16>, vector<32x32xbf16> -> vector<512x32xbf16>
    %c0_32 = arith.constant 0 : index
    %c0_33 = arith.constant 0 : index
    %99 = vector.load %arg10[%c0_32, %c0_33] : memref<64x512xbf16, #tpu.memory_space<vmem>>, vector<64x512xbf16>
    %cst_34 = arith.constant dense<0.000000e+00> : vector<64x32xf32>
    %100 = tpu.matmul %99, %98, %cst_34 {dimension_numbers = #tpu.dot_dimension_numbers<[1], [0], [0], [1], [0, 0, 1, 1], [], []>} : vector<64x512xbf16>, vector<512x32xbf16>, vector<64x32xf32> -> vector<64x32xf32>
    %c0_35 = arith.constant 0 : index
    %c0_36 = arith.constant 0 : index
    %101 = vector.load %arg11[%c0_35, %c0_36] : memref<64x1xf32, #tpu.memory_space<vmem>>, vector<64x1xf32>
    %c0_37 = arith.constant 0 : index
    %c0_38 = arith.constant 0 : index
    %102 = vector.load %arg12[%c0_37, %c0_38] : memref<64x1xf32, #tpu.memory_space<vmem>>, vector<64x1xf32>
    %cst_39 = arith.constant dense<0.000000e+00> : vector<64xf32>
    %103 = vector.multi_reduction <add>, %100, %cst_39 [1] : vector<64x32xf32> to vector<64xf32>
    %104 = vector.shape_cast %103 : vector<64xf32> to vector<64x1xf32>
    %cst_40 = arith.constant 3.125000e-02 : f32
    %105 = vector.broadcast %cst_40 : f32 to vector<64x1xf32>
    %106 = arith.mulf %104, %105 : vector<64x1xf32>
    %107 = arith.mulf %100, %100 : vector<64x32xf32>
    %cst_41 = arith.constant dense<0.000000e+00> : vector<64xf32>
    %108 = vector.multi_reduction <add>, %107, %cst_41 [1] : vector<64x32xf32> to vector<64xf32>
    %109 = vector.shape_cast %108 : vector<64xf32> to vector<64x1xf32>
    %cst_42 = arith.constant 3.125000e-02 : f32
    %110 = vector.broadcast %cst_42 : f32 to vector<64x1xf32>
    %111 = arith.mulf %109, %110 : vector<64x1xf32>
    %112 = arith.mulf %106, %106 : vector<64x1xf32>
    %113 = arith.subf %111, %112 : vector<64x1xf32>
    %114 = vector.broadcast %106 : vector<64x1xf32> to vector<64x32xf32>
    %115 = arith.subf %100, %114 : vector<64x32xf32>
    %cst_43 = arith.constant 9.99999974E-6 : f32
    %116 = vector.broadcast %cst_43 : f32 to vector<64x1xf32>
    %117 = arith.addf %113, %116 : vector<64x1xf32>
    %118 = math.rsqrt %117 : vector<64x1xf32>
    %119 = arith.mulf %101, %118 : vector<64x1xf32>
    %120 = vector.broadcast %119 : vector<64x1xf32> to vector<64x32xf32>
    %121 = arith.mulf %115, %120 : vector<64x32xf32>
    %122 = vector.broadcast %102 : vector<64x1xf32> to vector<64x32xf32>
    %123 = arith.addf %121, %122 : vector<64x32xf32>
    %cst_44 = arith.constant 2.000000e-01 : f32
    %124 = vector.broadcast %cst_44 : f32 to vector<64x32xf32>
    %125 = arith.mulf %124, %123 : vector<64x32xf32>
    %126 = arith.maximumf %123, %125 : vector<64x32xf32>
    %127 = arith.truncf %126 : vector<64x32xf32> to vector<64x32xbf16>
    %128 = vector.extract_strided_slice %127 {offsets = [0, 0], sizes = [64, 2], strides = [1, 1]} : vector<64x32xbf16> to vector<64x2xbf16>
    %129 = vector.extract_strided_slice %127 {offsets = [0, 2], sizes = [64, 2], strides = [1, 1]} : vector<64x32xbf16> to vector<64x2xbf16>
    %130 = vector.extract_strided_slice %127 {offsets = [0, 4], sizes = [64, 2], strides = [1, 1]} : vector<64x32xbf16> to vector<64x2xbf16>
    %131 = vector.extract_strided_slice %127 {offsets = [0, 6], sizes = [64, 2], strides = [1, 1]} : vector<64x32xbf16> to vector<64x2xbf16>
    %132 = vector.extract_strided_slice %127 {offsets = [0, 8], sizes = [64, 2], strides = [1, 1]} : vector<64x32xbf16> to vector<64x2xbf16>
    %133 = vector.extract_strided_slice %127 {offsets = [0, 10], sizes = [64, 2], strides = [1, 1]} : vector<64x32xbf16> to vector<64x2xbf16>
    %134 = vector.extract_strided_slice %127 {offsets = [0, 12], sizes = [64, 2], strides = [1, 1]} : vector<64x32xbf16> to vector<64x2xbf16>
    %135 = vector.extract_strided_slice %127 {offsets = [0, 14], sizes = [64, 2], strides = [1, 1]} : vector<64x32xbf16> to vector<64x2xbf16>
    %136 = vector.extract_strided_slice %127 {offsets = [0, 16], sizes = [64, 2], strides = [1, 1]} : vector<64x32xbf16> to vector<64x2xbf16>
    %137 = vector.extract_strided_slice %127 {offsets = [0, 18], sizes = [64, 2], strides = [1, 1]} : vector<64x32xbf16> to vector<64x2xbf16>
    %138 = vector.extract_strided_slice %127 {offsets = [0, 20], sizes = [64, 2], strides = [1, 1]} : vector<64x32xbf16> to vector<64x2xbf16>
    %139 = vector.extract_strided_slice %127 {offsets = [0, 22], sizes = [64, 2], strides = [1, 1]} : vector<64x32xbf16> to vector<64x2xbf16>
    %140 = vector.extract_strided_slice %127 {offsets = [0, 24], sizes = [64, 2], strides = [1, 1]} : vector<64x32xbf16> to vector<64x2xbf16>
    %141 = vector.extract_strided_slice %127 {offsets = [0, 26], sizes = [64, 2], strides = [1, 1]} : vector<64x32xbf16> to vector<64x2xbf16>
    %142 = vector.extract_strided_slice %127 {offsets = [0, 28], sizes = [64, 2], strides = [1, 1]} : vector<64x32xbf16> to vector<64x2xbf16>
    %143 = vector.extract_strided_slice %127 {offsets = [0, 30], sizes = [64, 2], strides = [1, 1]} : vector<64x32xbf16> to vector<64x2xbf16>
    %144 = tpu.concatenate %128, %129, %130, %131, %132, %133, %134, %135, %136, %137, %138, %139, %140, %141, %142, %143 in 0 : vector<64x2xbf16>, vector<64x2xbf16>, vector<64x2xbf16>, vector<64x2xbf16>, vector<64x2xbf16>, vector<64x2xbf16>, vector<64x2xbf16>, vector<64x2xbf16>, vector<64x2xbf16>, vector<64x2xbf16>, vector<64x2xbf16>, vector<64x2xbf16>, vector<64x2xbf16>, vector<64x2xbf16>, vector<64x2xbf16>, vector<64x2xbf16> -> vector<1024x2xbf16>
    %c0_45 = arith.constant 0 : index
    %c0_46 = arith.constant 0 : index
    %145 = vector.load %arg13[%c0_45, %c0_46] : memref<1x1024xbf16, #tpu.memory_space<vmem>>, vector<1x1024xbf16>
    %cst_47 = arith.constant dense<0.000000e+00> : vector<1x2xf32>
    %146 = tpu.matmul %145, %144, %cst_47 {dimension_numbers = #tpu.dot_dimension_numbers<[1], [0], [0], [1], [0, 0, 1, 1], [], []>} : vector<1x1024xbf16>, vector<1024x2xbf16>, vector<1x2xf32> -> vector<1x2xf32>
    %cst_48 = arith.constant 0.000000e+00 : f32
    %147 = vector.broadcast %cst_48 : f32 to vector<1x2xf32>
    %148 = arith.subf %147, %146 : vector<1x2xf32>
    %149 = math.exp %148 : vector<1x2xf32>
    %cst_49 = arith.constant 1.000000e+00 : f32
    %150 = vector.broadcast %cst_49 : f32 to vector<1x2xf32>
    %151 = arith.addf %150, %149 : vector<1x2xf32>
    %152 = tpu.reciprocal %151 {approx = true} : vector<1x2xf32> -> vector<1x2xf32>
    %c0_50 = arith.constant 0 : index
    %c0_51 = arith.constant 0 : index
    %153 = vector.load %arg14[%c0_50, %c0_51] : memref<1x2xf32, #tpu.memory_space<vmem>>, vector<1x2xf32>
    tpu.vector_store %arg14[%c0_50, %c0_51], %152 {strides = array<i32>} : memref<1x2xf32, #tpu.memory_space<vmem>>, vector<1x2xf32>,
    return
  }
  func.func @transform_0(%arg0: i32) -> (i32, i32) {
    %c0_i32 = arith.constant 0 : i32
    %c0_i32_0 = arith.constant 0 : i32
    %c0_i32_1 = arith.constant 0 : i32
    return %c0_i32, %c0_i32_0 : i32, i32
  }
  func.func @transform_1(%arg0: i32) -> (i32, i32) {
    %c0_i32 = arith.constant 0 : i32
    %c0_i32_0 = arith.constant 0 : i32
    %c0_i32_1 = arith.constant 0 : i32
    return %c0_i32, %c0_i32_0 : i32, i32
  }
  func.func @transform_2(%arg0: i32) -> (i32, i32) {
    %c0_i32 = arith.constant 0 : i32
    %c0_i32_0 = arith.constant 0 : i32
    %c0_i32_1 = arith.constant 0 : i32
    return %c0_i32, %c0_i32_0 : i32, i32
  }
  func.func @transform_3(%arg0: i32) -> (i32, i32) {
    %c0_i32 = arith.constant 0 : i32
    %c0_i32_0 = arith.constant 0 : i32
    %c0_i32_1 = arith.constant 0 : i32
    return %c0_i32, %c0_i32_0 : i32, i32
  }
  func.func @transform_4(%arg0: i32) -> (i32, i32) {
    %c0_i32 = arith.constant 0 : i32
    %c0_i32_0 = arith.constant 0 : i32
    %c0_i32_1 = arith.constant 0 : i32
    return %c0_i32, %c0_i32_0 : i32, i32
  }
  func.func @transform_5(%arg0: i32) -> (i32, i32) {
    %c0_i32 = arith.constant 0 : i32
    %c0_i32_0 = arith.constant 0 : i32
    %c0_i32_1 = arith.constant 0 : i32
    return %c0_i32, %c0_i32_0 : i32, i32
  }
  func.func @transform_6(%arg0: i32) -> (i32, i32) {
    %c0_i32 = arith.constant 0 : i32
    %c0_i32_0 = arith.constant 0 : i32
    %c0_i32_1 = arith.constant 0 : i32
    return %c0_i32, %c0_i32_0 : i32, i32
  }
  func.func @transform_7(%arg0: i32) -> (i32, i32) {
    %c0_i32 = arith.constant 0 : i32
    %c0_i32_0 = arith.constant 0 : i32
    %c0_i32_1 = arith.constant 0 : i32
    return %c0_i32, %c0_i32_0 : i32, i32
  }
  func.func @transform_8(%arg0: i32) -> (i32, i32) {
    %c0_i32 = arith.constant 0 : i32
    %c0_i32_0 = arith.constant 0 : i32
    %c0_i32_1 = arith.constant 0 : i32
    return %c0_i32, %c0_i32_0 : i32, i32
  }
  func.func @transform_9(%arg0: i32) -> (i32, i32) {
    %c0_i32 = arith.constant 0 : i32
    %c0_i32_0 = arith.constant 0 : i32
    %c0_i32_1 = arith.constant 0 : i32
    return %c0_i32, %c0_i32_0 : i32, i32
  }
  func.func @transform_10(%arg0: i32) -> (i32, i32) {
    %c0_i32 = arith.constant 0 : i32
    %c0_i32_0 = arith.constant 0 : i32
    %c0_i32_1 = arith.constant 0 : i32
    return %c0_i32, %c0_i32_0 : i32, i32
  }
  func.func @transform_11(%arg0: i32) -> (i32, i32) {
    %c0_i32 = arith.constant 0 : i32
    %c0_i32_0 = arith.constant 0 : i32
    %c0_i32_1 = arith.constant 0 : i32
    return %c0_i32, %c0_i32_0 : i32, i32
  }
  func.func @transform_12(%arg0: i32) -> (i32, i32) {
    %c0_i32 = arith.constant 0 : i32
    %c0_i32_0 = arith.constant 0 : i32
    %c0_i32_1 = arith.constant 0 : i32
    return %c0_i32, %c0_i32_0 : i32, i32
  }
  func.func @transform_13(%arg0: i32) -> (i32, i32) {
    %c0_i32 = arith.constant 0 : i32
    %c0_i32_0 = arith.constant 0 : i32
    %c0_i32_1 = arith.constant 0 : i32
    return %c0_i32, %c0_i32_0 : i32, i32
  }
}

</mosaic_0001>

<llo_original>
// kernel: discriminator_128_forward.2
$region0: #{discriminator_128_forward.2}
  #allocation0 [shape = 'u32[]', space=smem, size = 0x4, offset = 0x4, fixed_abs, tag = 'smem constant byte address 0x4 - core index']
  #allocation1 [shape = 'u32[144,128]{1,0:T(1,128)}', space=vmem, size = 0x12000, scoped, tag = 'internal scratch']
  %s0 = inlined_call_operand.vmem [shape: bf16[16,2048], index: 0, kind: input, shape index: {}]
  %s1 = inlined_call_operand.vmem [shape: bf16[8,16], index: 1, kind: input, shape index: {}]
  %s2 = inlined_call_operand.vmem [shape: f32[8,2048], index: 2, kind: output, shape index: {}]
  %s3 = sld [smem:[#allocation0]]
  $region18: #{discriminator_128_forward.2} parent=0
    _
  %s5 = ssub.s32 1, %s3
  %s6 = scalar_select 0, %s5, %s3
  // Predicated region
  $region2: #{discriminator_128_forward.2} parent=0 // pred_check
    _
  $region3: #{discriminator_128_forward.2} parent=0 // pred_check_branch
    %8 = sbr.rel (0) target = $region5
  $region4: #{discriminator_128_forward.2} parent=0 // pred_region
    _
  $region5: #{discriminator_128_forward.2} parent=0 // pred_fallthru
    _
  // Predicated region
  $region6: #{discriminator_128_forward.2} parent=0 // pred_check
    _
  $region7: #{discriminator_128_forward.2} parent=0 // pred_check_branch
    %10 = sbr.rel (0) target = $region9
  $region8: #{discriminator_128_forward.2} parent=0 // pred_region
    _
  $region9: #{discriminator_128_forward.2} parent=0 // pred_fallthru
    _
  %v12 = vld [vmem:[%s1] sm:$0xf]
  %v13 = vld [vmem:[%s0] sm:$0xff]
  %v14 = vld [vmem:[%s0 + $0x8] sm:$0xff]
  %v15 = vld [vmem:[%s0 + $0x10] sm:$0xff]
  %v16 = vld [vmem:[%s0 + $0x18] sm:$0xff]
  %v17 = vld [vmem:[%s0 + $0x20] sm:$0xff]
  %v18 = vld [vmem:[%s0 + $0x28] sm:$0xff]
  %v19 = vld [vmem:[%s0 + $0x30] sm:$0xff]
  %v20 = vld [vmem:[%s0 + $0x38] sm:$0xff]
  %v21 = vld [vmem:[%s0 + $0x40] sm:$0xff]
  %v22 = vld [vmem:[%s0 + $0x48] sm:$0xff]
  %v23 = vld [vmem:[%s0 + $0x50] sm:$0xff]
  %v24 = vld [vmem:[%s0 + $0x58] sm:$0xff]
  %v25 = vld [vmem:[%s0 + $0x60] sm:$0xff]
  %v26 = vld [vmem:[%s0 + $0x68] sm:$0xff]
  %v27 = vld [vmem:[%s0 + $0x70] sm:$0xff]
  %v28 = vld [vmem:[%s0 + $0x78] sm:$0xff]
  %v45 = vunpack.c.l.b16 %v13
  %v46 = vunpack.c.h.b16 %v13
  %v47 = vunpack.c.l.b16 %v14
  %v48 = vunpack.c.h.b16 %v14
  %v49 = vunpack.c.l.b16 %v15
  %v50 = vunpack.c.h.b16 %v15
  %v51 = vunpack.c.l.b16 %v16
  %v52 = vunpack.c.h.b16 %v16
  %v53 = vunpack.c.l.b16 %v17
  %v54 = vunpack.c.h.b16 %v17
  %v55 = vunpack.c.l.b16 %v18
  %v56 = vunpack.c.h.b16 %v18
  %v57 = vunpack.c.l.b16 %v19
  %v58 = vunpack.c.h.b16 %v19
  %v59 = vunpack.c.l.b16 %v20
  %v60 = vunpack.c.h.b16 %v20
  %v61 = vunpack.c.l.b16 %v21
  %v62 = vunpack.c.h.b16 %v21
  %v63 = vunpack.c.l.b16 %v22
  %v64 = vunpack.c.h.b16 %v22
  %v65 = vunpack.c.l.b16 %v23
  %v66 = vunpack.c.h.b16 %v23
  %v67 = vunpack.c.l.b16 %v24
  %v68 = vunpack.c.h.b16 %v24
  %v69 = vunpack.c.l.b16 %v25
  %v70 = vunpack.c.h.b16 %v25
  %v71 = vunpack.c.l.b16 %v26
  %v72 = vunpack.c.h.b16 %v26
  %v73 = vunpack.c.l.b16 %v27
  %v74 = vunpack.c.h.b16 %v27
  %v75 = vunpack.c.l.b16 %v28
  %v76 = vunpack.c.h.b16 %v28
  %v77 = vpack.c.b16 %v61, %v45
  %v78 = vpack.c.b16 %v62, %v46
  %v79 = vpack.c.b16 %v63, %v47
  %v80 = vpack.c.b16 %v64, %v48
  %v81 = vpack.c.b16 %v65, %v49
  %v82 = vpack.c.b16 %v66, %v50
  %v83 = vpack.c.b16 %v67, %v51
  %v84 = vpack.c.b16 %v68, %v52
  %v85 = vpack.c.b16 %v69, %v53
  %v86 = vpack.c.b16 %v70, %v54
  %v87 = vpack.c.b16 %v71, %v55
  %v88 = vpack.c.b16 %v72, %v56
  %v89 = vpack.c.b16 %v73, %v57
  %v90 = vpack.c.b16 %v74, %v58
  %v91 = vpack.c.b16 %v75, %v59
  %v92 = vpack.c.b16 %v76, %v60
  %vm109 = vcmask 130048
  %v111 = vsel %vm109, %v12, 0
  %113 = vmatprep.subr.bf16.mxu0 %v78
  %114 = vmatpush1.bf16.msra.mxu0 %v77
  %115 = vmatprep.subr.bf16.mxu0 0
  %116 = vmatpush1.bf16.msra.mxu0 0
  %117 = vmatprep.subr.bf16.mxu0 0
  %118 = vmatpush1.bf16.msra.mxu0 0
  %119 = vmatprep.subr.bf16.mxu0 0
  %120 = vmatpush1.bf16.msra.mxu0 0
  %121 = vmatprep.subr.bf16.mxu0 0
  %122 = vmatpush1.bf16.msra.mxu0 0
  %123 = vmatprep.subr.bf16.mxu0 0
  %124 = vmatpush1.bf16.msra.mxu0 0
  %125 = vmatprep.subr.bf16.mxu0 0
  %126 = vmatpush1.bf16.msra.mxu0 0
  %127 = vmatprep.subr.bf16.mxu0 0
  %128 = vmatpush1.bf16.msra.mxu0 0
  %129 = vmatprep.subr.bf16.mxu0 0
  %130 = vmatpush1.bf16.msra.mxu0 0
  %131 = vmatprep.subr.bf16.mxu0 0
  %132 = vmatpush1.bf16.msra.mxu0 0
  %133 = vmatprep.subr.bf16.mxu0 0
  %134 = vmatpush1.bf16.msra.mxu0 0
  %135 = vmatprep.subr.bf16.mxu0 0
  %136 = vmatpush1.bf16.msra.mxu0 0
  %137 = vmatprep.subr.bf16.mxu0 0
  %138 = vmatpush1.bf16.msra.mxu0 0
  %139 = vmatprep.subr.bf16.mxu0 0
  %140 = vmatpush1.bf16.msra.mxu0 0
  %141 = vmatprep.subr.bf16.mxu0 0
  %142 = vmatpush1.bf16.msra.mxu0 0
  %143 = vmatprep.subr.bf16.mxu0 0
  %144 = vmatpush1.bf16.msra.mxu0 0
  %145 = vmatprep.mubr.bf16.mxu0 0
  %146 = vmatmul.mubr.bf16.gmra.mrb[0].mxu0 %v111
  %v147 = vpop.f32.mrb[0].mxu0
  %v148 = vadd.f32 0.0, %v147
  %v149 = vpop.f32.mrb[0].mxu0
  %v150 = vadd.f32 0.0, %v149
  %v151 = vpop.f32.mrb[0].mxu0
  %v152 = vpop.f32.mrb[0].mxu0
  %153 = vdwg.mxu0
  %154 = vmatprep.subr.bf16.mxu0 %v80
  %155 = vmatpush1.bf16.msra.mxu0 %v79
  %156 = vmatprep.subr.bf16.mxu0 0
  %157 = vmatpush1.bf16.msra.mxu0 0
  %158 = vmatprep.subr.bf16.mxu0 0
  %159 = vmatpush1.bf16.msra.mxu0 0
  %160 = vmatprep.subr.bf16.mxu0 0
  %161 = vmatpush1.bf16.msra.mxu0 0
  %162 = vmatprep.subr.bf16.mxu0 0
  %163 = vmatpush1.bf16.msra.mxu0 0
  %164 = vmatprep.subr.bf16.mxu0 0
  %165 = vmatpush1.bf16.msra.mxu0 0
  %166 = vmatprep.subr.bf16.mxu0 0
  %167 = vmatpush1.bf16.msra.mxu0 0
  %168 = vmatprep.subr.bf16.mxu0 0
  %169 = vmatpush1.bf16.msra.mxu0 0
  %170 = vmatprep.subr.bf16.mxu0 0
  %171 = vmatpush1.bf16.msra.mxu0 0
  %172 = vmatprep.subr.bf16.mxu0 0
  %173 = vmatpush1.bf16.msra.mxu0 0
  %174 = vmatprep.subr.bf16.mxu0 0
  %175 = vmatpush1.bf16.msra.mxu0 0
  %176 = vmatprep.subr.bf16.mxu0 0
  %177 = vmatpush1.bf16.msra.mxu0 0
  %178 = vmatprep.subr.bf16.mxu0 0
  %179 = vmatpush1.bf16.msra.mxu0 0
  %180 = vmatprep.subr.bf16.mxu0 0
  %181 = vmatpush1.bf16.msra.mxu0 0
  %182 = vmatprep.subr.bf16.mxu0 0
  %183 = vmatpush1.bf16.msra.mxu0 0
  %184 = vmatprep.subr.bf16.mxu0 0
  %185 = vmatpush1.bf16.msra.mxu0 0
  %186 = vmatprep.mubr.bf16.mxu0 0
  %187 = vmatmul.mubr.bf16.gmra.mrb[0].mxu0 %v111
  %v188 = vpop.f32.mrb[0].mxu0
  %v189 = vadd.f32 0.0, %v188
  %v190 = vpop.f32.mrb[0].mxu0
  %v191 = vadd.f32 0.0, %v190
  %v192 = vpop.f32.mrb[0].mxu0
  %v193 = vpop.f32.mrb[0].mxu0
  %194 = vdwg.mxu0
  %195 = vmatprep.subr.bf16.mxu0 %v82
  %196 = vmatpush1.bf16.msra.mxu0 %v81
  %197 = vmatprep.subr.bf16.mxu0 0
  %198 = vmatpush1.bf16.msra.mxu0 0
  %199 = vmatprep.subr.bf16.mxu0 0
  %200 = vmatpush1.bf16.msra.mxu0 0
  %201 = vmatprep.subr.bf16.mxu0 0
  %202 = vmatpush1.bf16.msra.mxu0 0
  %203 = vmatprep.subr.bf16.mxu0 0
  %204 = vmatpush1.bf16.msra.mxu0 0
  %205 = vmatprep.subr.bf16.mxu0 0
  %206 = vmatpush1.bf16.msra.mxu0 0
  %207 = vmatprep.subr.bf16.mxu0 0
  %208 = vmatpush1.bf16.msra.mxu0 0
  %209 = vmatprep.subr.bf16.mxu0 0
  %210 = vmatpush1.bf16.msra.mxu0 0
  %211 = vmatprep.subr.bf16.mxu0 0
  %212 = vmatpush1.bf16.msra.mxu0 0
  %213 = vmatprep.subr.bf16.mxu0 0
  %214 = vmatpush1.bf16.msra.mxu0 0
  %215 = vmatprep.subr.bf16.mxu0 0
  %216 = vmatpush1.bf16.msra.mxu0 0
  %217 = vmatprep.subr.bf16.mxu0 0
  %218 = vmatpush1.bf16.msra.mxu0 0
  %219 = vmatprep.subr.bf16.mxu0 0
  %220 = vmatpush1.bf16.msra.mxu0 0
  %221 = vmatprep.subr.bf16.mxu0 0
  %222 = vmatpush1.bf16.msra.mxu0 0
  %223 = vmatprep.subr.bf16.mxu0 0
  %224 = vmatpush1.bf16.msra.mxu0 0
  %225 = vmatprep.subr.bf16.mxu0 0
  %226 = vmatpush1.bf16.msra.mxu0 0
  %227 = vmatprep.mubr.bf16.mxu0 0
  %228 = vmatmul.mubr.bf16.gmra.mrb[0].mxu0 %v111
  %v229 = vpop.f32.mrb[0].mxu0
  %v230 = vadd.f32 0.0, %v229
  %v231 = vpop.f32.mrb[0].mxu0
  %v232 = vadd.f32 0.0, %v231
  %v233 = vpop.f32.mrb[0].mxu0
  %v234 = vpop.f32.mrb[0].mxu0
  %235 = vdwg.mxu0
  %236 = vmatprep.subr.bf16.mxu0 %v84
  %237 = vmatpush1.bf16.msra.mxu0 %v83
  %238 = vmatprep.subr.bf16.mxu0 0
  %239 = vmatpush1.bf16.msra.mxu0 0
  %240 = vmatprep.subr.bf16.mxu0 0
  %241 = vmatpush1.bf16.msra.mxu0 0
  %242 = vmatprep.subr.bf16.mxu0 0
  %243 = vmatpush1.bf16.msra.mxu0 0
  %244 = vmatprep.subr.bf16.mxu0 0
  %245 = vmatpush1.bf16.msra.mxu0 0
  %246 = vmatprep.subr.bf16.mxu0 0
  %247 = vmatpush1.bf16.msra.mxu0 0
  %248 = vmatprep.subr.bf16.mxu0 0
  %249 = vmatpush1.bf16.msra.mxu0 0
  %250 = vmatprep.subr.bf16.mxu0 0
  %251 = vmatpush1.bf16.msra.mxu0 0
  %252 = vmatprep.subr.bf16.mxu0 0
  %253 = vmatpush1.bf16.msra.mxu0 0
  %254 = vmatprep.subr.bf16.mxu0 0
  %255 = vmatpush1.bf16.msra.mxu0 0
  %256 = vmatprep.subr.bf16.mxu0 0
  %257 = vmatpush1.bf16.msra.mxu0 0
  %258 = vmatprep.subr.bf16.mxu0 0
  %259 = vmatpush1.bf16.msra.mxu0 0
  %260 = vmatprep.subr.bf16.mxu0 0
  %261 = vmatpush1.bf16.msra.mxu0 0
  %262 = vmatprep.subr.bf16.mxu0 0
  %263 = vmatpush1.bf16.msra.mxu0 0
  %264 = vmatprep.subr.bf16.mxu0 0
  %265 = vmatpush1.bf16.msra.mxu0 0
  %266 = vmatprep.subr.bf16.mxu0 0
  %267 = vmatpush1.bf16.msra.mxu0 0
  %268 = vmatprep.mubr.bf16.mxu0 0
  %269 = vmatmul.mubr.bf16.gmra.mrb[0].mxu0 %v111
  %v270 = vpop.f32.mrb[0].mxu0
  %v271 = vadd.f32 0.0, %v270
  %v272 = vpop.f32.mrb[0].mxu0
  %v273 = vadd.f32 0.0, %v272
  %v274 = vpop.f32.mrb[0].mxu0
  %v275 = vpop.f32.mrb[0].mxu0
  %276 = vdwg.mxu0
  %277 = vmatprep.subr.bf16.mxu0 %v86
  %278 = vmatpush1.bf16.msra.mxu0 %v85
  %279 = vmatprep.subr.bf16.mxu0 0
  %280 = vmatpush1.bf16.msra.mxu0 0
  %281 = vmatprep.subr.bf16.mxu0 0
  %282 = vmatpush1.bf16.msra.mxu0 0
  %283 = vmatprep.subr.bf16.mxu0 0
  %284 = vmatpush1.bf16.msra.mxu0 0
  %285 = vmatprep.subr.bf16.mxu0 0
  %286 = vmatpush1.bf16.msra.mxu0 0
  %287 = vmatprep.subr.bf16.mxu0 0
  %288 = vmatpush1.bf16.msra.mxu0 0
  %289 = vmatprep.subr.bf16.mxu0 0
  %290 = vmatpush1.bf16.msra.mxu0 0
  %291 = vmatprep.subr.bf16.mxu0 0
  %292 = vmatpush1.bf16.msra.mxu0 0
  %293 = vmatprep.subr.bf16.mxu0 0
  %294 = vmatpush1.bf16.msra.mxu0 0
  %295 = vmatprep.subr.bf16.mxu0 0
  %296 = vmatpush1.bf16.msra.mxu0 0
  %297 = vmatprep.subr.bf16.mxu0 0
  %298 = vmatpush1.bf16.msra.mxu0 0
  %299 = vmatprep.subr.bf16.mxu0 0
  %300 = vmatpush1.bf16.msra.mxu0 0
  %301 = vmatprep.subr.bf16.mxu0 0
  %302 = vmatpush1.bf16.msra.mxu0 0
  %303 = vmatprep.subr.bf16.mxu0 0
  %304 = vmatpush1.bf16.msra.mxu0 0
  %305 = vmatprep.subr.bf16.mxu0 0
  %306 = vmatpush1.bf16.msra.mxu0 0
  %307 = vmatprep.subr.bf16.mxu0 0
  %308 = vmatpush1.bf16.msra.mxu0 0
  %309 = vmatprep.mubr.bf16.mxu0 0
  %310 = vmatmul.mubr.bf16.gmra.mrb[0].mxu0 %v111
  %v311 = vpop.f32.mrb[0].mxu0
  %v312 = vadd.f32 0.0, %v311
  %v313 = vpop.f32.mrb[0].mxu0
  %v314 = vadd.f32 0.0, %v313
  %v315 = vpop.f32.mrb[0].mxu0
  %v316 = vpop.f32.mrb[0].mxu0
  %317 = vdwg.mxu0
  %318 = vmatprep.subr.bf16.mxu0 %v88
  %319 = vmatpush1.bf16.msra.mxu0 %v87
  %320 = vmatprep.subr.bf16.mxu0 0
  %321 = vmatpush1.bf16.msra.mxu0 0
  %322 = vmatprep.subr.bf16.mxu0 0
  %323 = vmatpush1.bf16.msra.mxu0 0
  %324 = vmatprep.subr.bf16.mxu0 0
  %325 = vmatpush1.bf16.msra.mxu0 0
  %326 = vmatprep.subr.bf16.mxu0 0
  %327 = vmatpush1.bf16.msra.mxu0 0
  %328 = vmatprep.subr.bf16.mxu0 0
  %329 = vmatpush1.bf16.msra.mxu0 0
  %330 = vmatprep.subr.bf16.mxu0 0
  %331 = vmatpush1.bf16.msra.mxu0 0
  %332 = vmatprep.subr.bf16.mxu0 0
  %333 = vmatpush1.bf16.msra.mxu0 0
  %334 = vmatprep.subr.bf16.mxu0 0
  %335 = vmatpush1.bf16.msra.mxu0 0
  %336 = vmatprep.subr.bf16.mxu0 0
  %337 = vmatpush1.bf16.msra.mxu0 0
  %338 = vmatprep.subr.bf16.mxu0 0
  %339 = vmatpush1.bf16.msra.mxu0 0
  %340 = vmatprep.subr.bf16.mxu0 0
  %341 = vmatpush1.bf16.msra.mxu0 0
  %342 = vmatprep.subr.bf16.mxu0 0
  %343 = vmatpush1.bf16.msra.mxu0 0
  %344 = vmatprep.subr.bf16.mxu0 0
  %345 = vmatpush1.bf16.msra.mxu0 0
  %346 = vmatprep.subr.bf16.mxu0 0
  %347 = vmatpush1.bf16.msra.mxu0 0
  %348 = vmatprep.subr.bf16.mxu0 0
  %349 = vmatpush1.bf16.msra.mxu0 0
  %350 = vmatprep.mubr.bf16.mxu0 0
  %351 = vmatmul.mubr.bf16.gmra.mrb[0].mxu0 %v111
  %v352 = vpop.f32.mrb[0].mxu0
  %v353 = vadd.f32 0.0, %v352
  %v354 = vpop.f32.mrb[0].mxu0
  %v355 = vadd.f32 0.0, %v354
  %v356 = vpop.f32.mrb[0].mxu0
  %v357 = vpop.f32.mrb[0].mxu0
  %358 = vdwg.mxu0
  %359 = vmatprep.subr.bf16.mxu0 %v90
  %360 = vmatpush1.bf16.msra.mxu0 %v89
  %361 = vmatprep.subr.bf16.mxu0 0
  %362 = vmatpush1.bf16.msra.mxu0 0
  %363 = vmatprep.subr.bf16.mxu0 0
  %364 = vmatpush1.bf16.msra.mxu0 0
  %365 = vmatprep.subr.bf16.mxu0 0
  %366 = vmatpush1.bf16.msra.mxu0 0
  %367 = vmatprep.subr.bf16.mxu0 0
  %368 = vmatpush1.bf16.msra.mxu0 0
  %369 = vmatprep.subr.bf16.mxu0 0
  %370 = vmatpush1.bf16.msra.mxu0 0
  %371 = vmatprep.subr.bf16.mxu0 0
  %372 = vmatpush1.bf16.msra.mxu0 0
  %373 = vmatprep.subr.bf16.mxu0 0
  %374 = vmatpush1.bf16.msra.mxu0 0
  %375 = vmatprep.subr.bf16.mxu0 0
  %376 = vmatpush1.bf16.msra.mxu0 0
  %377 = vmatprep.subr.bf16.mxu0 0
  %378 = vmatpush1.bf16.msra.mxu0 0
  %379 = vmatprep.subr.bf16.mxu0 0
  %380 = vmatpush1.bf16.msra.mxu0 0
  %381 = vmatprep.subr.bf16.mxu0 0
  %382 = vmatpush1.bf16.msra.mxu0 0
  %383 = vmatprep.subr.bf16.mxu0 0
  %384 = vmatpush1.bf16.msra.mxu0 0
  %385 = vmatprep.subr.bf16.mxu0 0
  %386 = vmatpush1.bf16.msra.mxu0 0
  %387 = vmatprep.subr.bf16.mxu0 0
  %388 = vmatpush1.bf16.msra.mxu0 0
  %389 = vmatprep.subr.bf16.mxu0 0
  %390 = vmatpush1.bf16.msra.mxu0 0
  %391 = vmatprep.mubr.bf16.mxu0 0
  %392 = vmatmul.mubr.bf16.gmra.mrb[0].mxu0 %v111
  %v393 = vpop.f32.mrb[0].mxu0
  %v394 = vadd.f32 0.0, %v393
  %v395 = vpop.f32.mrb[0].mxu0
  %v396 = vadd.f32 0.0, %v395
  %v397 = vpop.f32.mrb[0].mxu0
  %v398 = vpop.f32.mrb[0].mxu0
  %399 = vdwg.mxu0
  %400 = vmatprep.subr.bf16.mxu0 %v92
  %401 = vmatpush1.bf16.msra.mxu0 %v91
  %402 = vmatprep.subr.bf16.mxu0 0
  %403 = vmatpush1.bf16.msra.mxu0 0
  %404 = vmatprep.subr.bf16.mxu0 0
  %405 = vmatpush1.bf16.msra.mxu0 0
  %406 = vmatprep.subr.bf16.mxu0 0
  %407 = vmatpush1.bf16.msra.mxu0 0
  %408 = vmatprep.subr.bf16.mxu0 0
  %409 = vmatpush1.bf16.msra.mxu0 0
  %410 = vmatprep.subr.bf16.mxu0 0
  %411 = vmatpush1.bf16.msra.mxu0 0
  %412 = vmatprep.subr.bf16.mxu0 0
  %413 = vmatpush1.bf16.msra.mxu0 0
  %414 = vmatprep.subr.bf16.mxu0 0
  %415 = vmatpush1.bf16.msra.mxu0 0
  %416 = vmatprep.subr.bf16.mxu0 0
  %417 = vmatpush1.bf16.msra.mxu0 0
  %418 = vmatprep.subr.bf16.mxu0 0
  %419 = vmatpush1.bf16.msra.mxu0 0
  %420 = vmatprep.subr.bf16.mxu0 0
  %421 = vmatpush1.bf16.msra.mxu0 0
  %422 = vmatprep.subr.bf16.mxu0 0
  %423 = vmatpush1.bf16.msra.mxu0 0
  %424 = vmatprep.subr.bf16.mxu0 0
  %425 = vmatpush1.bf16.msra.mxu0 0
  %426 = vmatprep.subr.bf16.mxu0 0
  %427 = vmatpush1.bf16.msra.mxu0 0
  %428 = vmatprep.subr.bf16.mxu0 0
  %429 = vmatpush1.bf16.msra.mxu0 0
  %430 = vmatprep.subr.bf16.mxu0 0
  %431 = vmatpush1.bf16.msra.mxu0 0
  %432 = vmatprep.mubr.bf16.mxu0 0
  %433 = vmatmul.mubr.bf16.gmra.mrb[0].mxu0 %v111
  %v434 = vpop.f32.mrb[0].mxu0
  %v435 = vadd.f32 0.0, %v434
  %v436 = vpop.f32.mrb[0].mxu0
  %v437 = vadd.f32 0.0, %v436
  %v438 = vpop.f32.mrb[0].mxu0
  %v439 = vpop.f32.mrb[0].mxu0
  %440 = vdwg.mxu0
  %v441 = vmul.f32 %v148, 0.2
  %v442 = vmul.f32 %v150, 0.2
  %v443 = vmul.f32 %v189, 0.2
  %v444 = vmul.f32 %v191, 0.2
  %v445 = vmul.f32 %v230, 0.2
  %v446 = vmul.f32 %v232, 0.2
  %v447 = vmul.f32 %v271, 0.2
  %v448 = vmul.f32 %v273, 0.2
  %v449 = vmul.f32 %v312, 0.2
  %v450 = vmul.f32 %v314, 0.2
  %v451 = vmul.f32 %v353, 0.2
  %v452 = vmul.f32 %v355, 0.2
  %v453 = vmul.f32 %v394, 0.2
  %v454 = vmul.f32 %v396, 0.2
  %v455 = vmul.f32 %v435, 0.2
  %v456 = vmul.f32 %v437, 0.2
  %v457 = vmax.f32 %v148, %v441
  %v458 = vmax.f32 %v150, %v442
  %v459 = vmax.f32 %v189, %v443
  %v460 = vmax.f32 %v191, %v444
  %v461 = vmax.f32 %v230, %v445
  %v462 = vmax.f32 %v232, %v446
  %v463 = vmax.f32 %v271, %v447
  %v464 = vmax.f32 %v273, %v448
  %v465 = vmax.f32 %v312, %v449
  %v466 = vmax.f32 %v314, %v450
  %v467 = vmax.f32 %v353, %v451
  %v468 = vmax.f32 %v355, %v452
  %v469 = vmax.f32 %v394, %v453
  %v470 = vmax.f32 %v396, %v454
  %v471 = vmax.f32 %v435, %v455
  %v472 = vmax.f32 %v437, %v456
  %473 = vst [vmem:[%s2] sm:$0xff] %v457
  %474 = vst [vmem:[%s2 + $0x8] sm:$0xff] %v458
  %475 = vst [vmem:[%s2 + $0x10] sm:$0xff] %v459
  %476 = vst [vmem:[%s2 + $0x18] sm:$0xff] %v460
  %477 = vst [vmem:[%s2 + $0x20] sm:$0xff] %v461
  %478 = vst [vmem:[%s2 + $0x28] sm:$0xff] %v462
  %479 = vst [vmem:[%s2 + $0x30] sm:$0xff] %v463
  %480 = vst [vmem:[%s2 + $0x38] sm:$0xff] %v464
  %481 = vst [vmem:[%s2 + $0x40] sm:$0xff] %v465
  %482 = vst [vmem:[%s2 + $0x48] sm:$0xff] %v466
  %483 = vst [vmem:[%s2 + $0x50] sm:$0xff] %v467
  %484 = vst [vmem:[%s2 + $0x58] sm:$0xff] %v468
  %485 = vst [vmem:[%s2 + $0x60] sm:$0xff] %v469
  %486 = vst [vmem:[%s2 + $0x68] sm:$0xff] %v470
  %487 = vst [vmem:[%s2 + $0x70] sm:$0xff] %v471
  %488 = vst [vmem:[%s2 + $0x78] sm:$0xff] %v472
  // Predicated region
  $region10: #{discriminator_128_forward.2} parent=0 // pred_check
    _
  $region11: #{discriminator_128_forward.2} parent=0 // pred_check_branch
    %490 = sbr.rel (0) target = $region13
  $region12: #{discriminator_128_forward.2} parent=0 // pred_region
    _
  $region13: #{discriminator_128_forward.2} parent=0 // pred_fallthru
    _
  // Predicated region
  $region14: #{discriminator_128_forward.2} parent=0 // pred_check
    _
  $region15: #{discriminator_128_forward.2} parent=0 // pred_check_branch
    %492 = sbr.rel (0) target = $region17
  $region16: #{discriminator_128_forward.2} parent=0 // pred_region
    _
  $region17: #{discriminator_128_forward.2} parent=0 // pred_fallthru
    _

// kernel: discriminator_128_forward.3
$region0: #{discriminator_128_forward.3}
  #allocation0 [shape = 'u32[]', space=smem, size = 0x4, offset = 0x4, fixed_abs, tag = 'smem constant byte address 0x4 - core index']
  #allocation1 [shape = 'u32[144,128]{1,0:T(1,128)}', space=vmem, size = 0x12000, scoped, tag = 'internal scratch']
  %s0 = inlined_call_operand.vmem [shape: bf16[128,512], index: 0, kind: input, shape index: {}]
  %s1 = inlined_call_operand.vmem [shape: bf16[16,128], index: 1, kind: input, shape index: {}]
  %s2 = inlined_call_operand.vmem [shape: f32[16,1], index: 2, kind: input, shape index: {}]
  %s3 = inlined_call_operand.vmem [shape: f32[16,1], index: 3, kind: input, shape index: {}]
  %s4 = inlined_call_operand.vmem [shape: bf16[512,2048], index: 4, kind: input, shape index: {}]
  %s5 = inlined_call_operand.vmem [shape: bf16[32,256], index: 5, kind: input, shape index: {}]
  %s6 = inlined_call_operand.vmem [shape: f32[32,1], index: 6, kind: input, shape index: {}]
  %s7 = inlined_call_operand.vmem [shape: f32[32,1], index: 7, kind: input, shape index: {}]
  %s8 = inlined_call_operand.vmem [shape: bf16[128,512], index: 8, kind: input, shape index: {}]
  %s9 = inlined_call_operand.vmem [shape: bf16[64,512], index: 9, kind: input, shape index: {}]
  %s10 = inlined_call_operand.vmem [shape: f32[64,1], index: 10, kind: input, shape index: {}]
  %s11 = inlined_call_operand.vmem [shape: f32[64,1], index: 11, kind: input, shape index: {}]
  %s12 = inlined_call_operand.vmem [shape: bf16[1,1024], index: 12, kind: input, shape index: {}]
  %s13 = inlined_call_operand.hbm [shape: f32[1,2], index: 13, kind: output, shape index: {}]
  %s14 = sld [smem:[#allocation0]]
  $region62: #{discriminator_128_forward.3} parent=0
    _
  %s16 = ssub.s32 1, %s14
  %s17 = scalar_select 0, %s16, %s14
  $region1: #{discriminator_128_forward.3} parent=0
    #allocation2 [shape = 'u8[512]{0}', space=vmem, size = 0x400, scoped, tag = 'output window, operand 0, single buffered']
    #allocation3 [shape = 's32[1]{0}', space=sflag, size = 0x4, scoped, tag = 'scoped memory for discriminator_128_forward.3']
    %18 = vsyncpa [#allocation3], 0
    // Predicated region
    $region2: #{discriminator_128_forward.3} parent=1 // pred_check
      _
    $region3: #{discriminator_128_forward.3} parent=1 // pred_check_branch
      %20 = sbr.rel (0) target = $region5
    $region4: #{discriminator_128_forward.3} parent=1 // pred_region
      _
    $region5: #{discriminator_128_forward.3} parent=1 // pred_fallthru
      _
    // Predicated region
    $region6: #{discriminator_128_forward.3} parent=1 // pred_check
      _
    $region7: #{discriminator_128_forward.3} parent=1 // pred_check_branch
      %22 = sbr.rel (0) target = $region9
    $region8: #{discriminator_128_forward.3} parent=1 // pred_region
      _
    $region9: #{discriminator_128_forward.3} parent=1 // pred_fallthru
      _
    // Predicated region
    $region10: #{discriminator_128_forward.3} parent=1 // pred_check
      _
    $region11: #{discriminator_128_forward.3} parent=1 // pred_check_branch
      %24 = sbr.rel (0) target = $region13
    $region12: #{discriminator_128_forward.3} parent=1 // pred_region
      _
    $region13: #{discriminator_128_forward.3} parent=1 // pred_fallthru
      _
    // Predicated region
    $region14: #{discriminator_128_forward.3} parent=1 // pred_check
      _
    $region15: #{discriminator_128_forward.3} parent=1 // pred_check_branch
      %26 = sbr.rel (0) target = $region17
    $region16: #{discriminator_128_forward.3} parent=1 // pred_region
      _
    $region17: #{discriminator_128_forward.3} parent=1 // pred_fallthru
      _
    // Predicated region
    $region18: #{discriminator_128_forward.3} parent=1 // pred_check
      _
    $region19: #{discriminator_128_forward.3} parent=1 // pred_check_branch
      %28 = sbr.rel (0) target = $region21
    $region20: #{discriminator_128_forward.3} parent=1 // pred_region
      _
    $region21: #{discriminator_128_forward.3} parent=1 // pred_fallthru
      _
    // Predicated region
    $region22: #{discriminator_128_forward.3} parent=1 // pred_check
      _
    $region23: #{discriminator_128_forward.3} parent=1 // pred_check_branch
      %30 = sbr.rel (0) target = $region25
    $region24: #{discriminator_128_forward.3} parent=1 // pred_region
      _
    $region25: #{discriminator_128_forward.3} parent=1 // pred_fallthru
      _
    // Predicated region
    $region26: #{discriminator_128_forward.3} parent=1 // pred_check
      _
    $region27: #{discriminator_128_forward.3} parent=1 // pred_check_branch
      %32 = sbr.rel (0) target = $region29
    $region28: #{discriminator_128_forward.3} parent=1 // pred_region
      _
    $region29: #{discriminator_128_forward.3} parent=1 // pred_fallthru
      _
    // Predicated region
    $region30: #{discriminator_128_forward.3} parent=1 // pred_check
      _
    $region31: #{discriminator_128_forward.3} parent=1 // pred_check_branch
      %34 = sbr.rel (0) target = $region33
    $region32: #{discriminator_128_forward.3} parent=1 // pred_region
      _
    $region33: #{discriminator_128_forward.3} parent=1 // pred_fallthru
      _
    // Predicated region
    $region34: #{discriminator_128_forward.3} parent=1 // pred_check
      _
    $region35: #{discriminator_128_forward.3} parent=1 // pred_check_branch
      %36 = sbr.rel (0) target = $region37
    $region36: #{discriminator_128_forward.3} parent=1 // pred_region
      _
    $region37: #{discriminator_128_forward.3} parent=1 // pred_fallthru
      _
    // Predicated region
    $region38: #{discriminator_128_forward.3} parent=1 // pred_check
      _
    $region39: #{discriminator_128_forward.3} parent=1 // pred_check_branch
      %38 = sbr.rel (0) target = $region41
    $region40: #{discriminator_128_forward.3} parent=1 // pred_region
      _
    $region41: #{discriminator_128_forward.3} parent=1 // pred_fallthru
      _
    // Predicated region
    $region42: #{discriminator_128_forward.3} parent=1 // pred_check
      _
    $region43: #{discriminator_128_forward.3} parent=1 // pred_check_branch
      %40 = sbr.rel (0) target = $region45
    $region44: #{discriminator_128_forward.3} parent=1 // pred_region
      _
    $region45: #{discriminator_128_forward.3} parent=1 // pred_fallthru
      _
    // Predicated region
    $region46: #{discriminator_128_forward.3} parent=1 // pred_check
      _
    $region47: #{discriminator_128_forward.3} parent=1 // pred_check_branch
      %42 = sbr.rel (0) target = $region49
    $region48: #{discriminator_128_forward.3} parent=1 // pred_region
      _
    $region49: #{discriminator_128_forward.3} parent=1 // pred_fallthru
      _
    // Predicated region
    $region50: #{discriminator_128_forward.3} parent=1 // pred_check
      _
    $region51: #{discriminator_128_forward.3} parent=1 // pred_check_branch
      %44 = sbr.rel (0) target = $region53
    $region52: #{discriminator_128_forward.3} parent=1 // pred_region
      _
    $region53: #{discriminator_128_forward.3} parent=1 // pred_fallthru
      _
    %v46 = vld [vmem:[%s1] sm:$0xf]
    %v47 = vld [vmem:[%s1 + $0x4] sm:$0xf]
    %v48 = vld [vmem:[%s0] sm:$0xff]
    %v49 = vld [vmem:[%s0 + $0x8] sm:$0xff]
    %v50 = vld [vmem:[%s0 + $0x10] sm:$0xff]
    %v51 = vld [vmem:[%s0 + $0x18] sm:$0xff]
    %v52 = vld [vmem:[%s0 + $0x20] sm:$0xff]
    %v53 = vld [vmem:[%s0 + $0x28] sm:$0xff]
    %v54 = vld [vmem:[%s0 + $0x30] sm:$0xff]
    %v55 = vld [vmem:[%s0 + $0x38] sm:$0xff]
    %v56 = vld [vmem:[%s0 + $0x40] sm:$0xff]
    %v57 = vld [vmem:[%s0 + $0x48] sm:$0xff]
    %v58 = vld [vmem:[%s0 + $0x50] sm:$0xff]
    %v59 = vld [vmem:[%s0 + $0x58] sm:$0xff]
    %v60 = vld [vmem:[%s0 + $0x60] sm:$0xff]
    %v61 = vld [vmem:[%s0 + $0x68] sm:$0xff]
    %v62 = vld [vmem:[%s0 + $0x70] sm:$0xff]
    %v63 = vld [vmem:[%s0 + $0x78] sm:$0xff]
    %v64 = vld [vmem:[%s0 + $0x80] sm:$0xff]
    %v65 = vld [vmem:[%s0 + $0x88] sm:$0xff]
    %v66 = vld [vmem:[%s0 + $0x90] sm:$0xff]
    %v67 = vld [vmem:[%s0 + $0x98] sm:$0xff]
    %v68 = vld [vmem:[%s0 + $0xa0] sm:$0xff]
    %v69 = vld [vmem:[%s0 + $0xa8] sm:$0xff]
    %v70 = vld [vmem:[%s0 + $0xb0] sm:$0xff]
    %v71 = vld [vmem:[%s0 + $0xb8] sm:$0xff]
    %v72 = vld [vmem:[%s0 + $0xc0] sm:$0xff]
    %v73 = vld [vmem:[%s0 + $0xc8] sm:$0xff]
    %v74 = vld [vmem:[%s0 + $0xd0] sm:$0xff]
    %v75 = vld [vmem:[%s0 + $0xd8] sm:$0xff]
    %v76 = vld [vmem:[%s0 + $0xe0] sm:$0xff]
    %v77 = vld [vmem:[%s0 + $0xe8] sm:$0xff]
    %v78 = vld [vmem:[%s0 + $0xf0] sm:$0xff]
    %v79 = vld [vmem:[%s0 + $0xf8] sm:$0xff]
    %v82 = vunpack.c.l.b16 %v46
    %v83 = vunpack.c.l.b16 %v47
    %v84 = vpack.c.b16 %v83, %v82
    %v118 = vunpack.c.l.b16 %v48
    %v119 = vunpack.c.h.b16 %v48
    %v120 = vunpack.c.l.b16 %v49
    %v121 = vunpack.c.h.b16 %v49
    %v122 = vunpack.c.l.b16 %v50
    %v123 = vunpack.c.h.b16 %v50
    %v124 = vunpack.c.l.b16 %v51
    %v125 = vunpack.c.h.b16 %v51
    %v126 = vunpack.c.l.b16 %v52
    %v127 = vunpack.c.h.b16 %v52
    %v128 = vunpack.c.l.b16 %v53
    %v129 = vunpack.c.h.b16 %v53
    %v130 = vunpack.c.l.b16 %v54
    %v131 = vunpack.c.h.b16 %v54
    %v132 = vunpack.c.l.b16 %v55
    %v133 = vunpack.c.h.b16 %v55
    %v134 = vunpack.c.l.b16 %v56
    %v135 = vunpack.c.h.b16 %v56
    %v136 = vunpack.c.l.b16 %v57
    %v137 = vunpack.c.h.b16 %v57
    %v138 = vunpack.c.l.b16 %v58
    %v139 = vunpack.c.h.b16 %v58
    %v140 = vunpack.c.l.b16 %v59
    %v141 = vunpack.c.h.b16 %v59
    %v142 = vunpack.c.l.b16 %v60
    %v143 = vunpack.c.h.b16 %v60
    %v144 = vunpack.c.l.b16 %v61
    %v145 = vunpack.c.h.b16 %v61
    %v146 = vunpack.c.l.b16 %v62
    %v147 = vunpack.c.h.b16 %v62
    %v148 = vunpack.c.l.b16 %v63
    %v149 = vunpack.c.h.b16 %v63
    %v150 = vunpack.c.l.b16 %v64
    %v151 = vunpack.c.h.b16 %v64
    %v152 = vunpack.c.l.b16 %v65
    %v153 = vunpack.c.h.b16 %v65
    %v154 = vunpack.c.l.b16 %v66
    %v155 = vunpack.c.h.b16 %v66
    %v156 = vunpack.c.l.b16 %v67
    %v157 = vunpack.c.h.b16 %v67
    %v158 = vunpack.c.l.b16 %v68
    %v159 = vunpack.c.h.b16 %v68
    %v160 = vunpack.c.l.b16 %v69
    %v161 = vunpack.c.h.b16 %v69
    %v162 = vunpack.c.l.b16 %v70
    %v163 = vunpack.c.h.b16 %v70
    %v164 = vunpack.c.l.b16 %v71
    %v165 = vunpack.c.h.b16 %v71
    %v166 = vunpack.c.l.b16 %v72
    %v167 = vunpack.c.h.b16 %v72
    %v168 = vunpack.c.l.b16 %v73
    %v169 = vunpack.c.h.b16 %v73
    %v170 = vunpack.c.l.b16 %v74
    %v171 = vunpack.c.h.b16 %v74
    %v172 = vunpack.c.l.b16 %v75
    %v173 = vunpack.c.h.b16 %v75
    %v174 = vunpack.c.l.b16 %v76
    %v175 = vunpack.c.h.b16 %v76
    %v176 = vunpack.c.l.b16 %v77
    %v177 = vunpack.c.h.b16 %v77
    %v178 = vunpack.c.l.b16 %v78
    %v179 = vunpack.c.h.b16 %v78
    %v180 = vunpack.c.l.b16 %v79
    %v181 = vunpack.c.h.b16 %v79
    %v182 = vpack.c.b16 %v122, %v118
    %v183 = vpack.c.b16 %v123, %v119
    %v184 = vpack.c.b16 %v124, %v120
    %v185 = vpack.c.b16 %v125, %v121
    %v186 = vpack.c.b16 %v130, %v126
    %v187 = vpack.c.b16 %v131, %v127
    %v188 = vpack.c.b16 %v132, %v128
    %v189 = vpack.c.b16 %v133, %v129
    %v190 = vpack.c.b16 %v138, %v134
    %v191 = vpack.c.b16 %v139, %v135
    %v192 = vpack.c.b16 %v140, %v136
    %v193 = vpack.c.b16 %v141, %v137
    %v194 = vpack.c.b16 %v146, %v142
    %v195 = vpack.c.b16 %v147, %v143
    %v196 = vpack.c.b16 %v148, %v144
    %v197 = vpack.c.b16 %v149, %v145
    %v198 = vpack.c.b16 %v154, %v150
    %v199 = vpack.c.b16 %v155, %v151
    %v200 = vpack.c.b16 %v156, %v152
    %v201 = vpack.c.b16 %v157, %v153
    %v202 = vpack.c.b16 %v162, %v158
    %v203 = vpack.c.b16 %v163, %v159
    %v204 = vpack.c.b16 %v164, %v160
    %v205 = vpack.c.b16 %v165, %v161
    %v206 = vpack.c.b16 %v170, %v166
    %v207 = vpack.c.b16 %v171, %v167
    %v208 = vpack.c.b16 %v172, %v168
    %v209 = vpack.c.b16 %v173, %v169
    %v210 = vpack.c.b16 %v178, %v174
    %v211 = vpack.c.b16 %v179, %v175
    %v212 = vpack.c.b16 %v180, %v176
    %v213 = vpack.c.b16 %v181, %v177
    %246 = vmatprep.subr.bf16.mxu0 %v183
    %247 = vmatpush1.bf16.msra.mxu0 %v182
    %248 = vmatprep.subr.bf16.mxu0 %v187
    %249 = vmatpush1.bf16.msra.mxu0 %v186
    %250 = vmatprep.subr.bf16.mxu0 %v191
    %251 = vmatpush1.bf16.msra.mxu0 %v190
    %252 = vmatprep.subr.bf16.mxu0 %v195
    %253 = vmatpush1.bf16.msra.mxu0 %v194
    %254 = vmatprep.subr.bf16.mxu0 %v199
    %255 = vmatpush1.bf16.msra.mxu0 %v198
    %256 = vmatprep.subr.bf16.mxu0 %v203
    %257 = vmatpush1.bf16.msra.mxu0 %v202
    %258 = vmatprep.subr.bf16.mxu0 %v207
    %259 = vmatpush1.bf16.msra.mxu0 %v206
    %260 = vmatprep.subr.bf16.mxu0 %v211
    %261 = vmatpush1.bf16.msra.mxu0 %v210
    %262 = vmatprep.subr.bf16.mxu0 0
    %263 = vmatpush1.bf16.msra.mxu0 0
    %264 = vmatprep.subr.bf16.mxu0 0
    %265 = vmatpush1.bf16.msra.mxu0 0
    %266 = vmatprep.subr.bf16.mxu0 0
    %267 = vmatpush1.bf16.msra.mxu0 0
    %268 = vmatprep.subr.bf16.mxu0 0
    %269 = vmatpush1.bf16.msra.mxu0 0
    %270 = vmatprep.subr.bf16.mxu0 0
    %271 = vmatpush1.bf16.msra.mxu0 0
    %272 = vmatprep.subr.bf16.mxu0 0
    %273 = vmatpush1.bf16.msra.mxu0 0
    %274 = vmatprep.subr.bf16.mxu0 0
    %275 = vmatpush1.bf16.msra.mxu0 0
    %276 = vmatprep.subr.bf16.mxu0 0
    %277 = vmatpush1.bf16.msra.mxu0 0
    %278 = vmatprep.mubr.bf16.mxu0 0
    %279 = vmatmul.mubr.bf16.gmra.mrb[0].mxu0 %v84
    %v280 = vpop.f32.mrb[0].mxu0
    %v281 = vadd.f32 0.0, %v280
    %v282 = vpop.f32.mrb[0].mxu0
    %v283 = vadd.f32 0.0, %v282
    %v284 = vpop.f32.mrb[0].mxu0
    %v285 = vadd.f32 0.0, %v284
    %v286 = vpop.f32.mrb[0].mxu0
    %v287 = vadd.f32 0.0, %v286
    %288 = vdwg.mxu0
    %289 = vmatprep.subr.bf16.mxu0 %v185
    %290 = vmatpush1.bf16.msra.mxu0 %v184
    %291 = vmatprep.subr.bf16.mxu0 %v189
    %292 = vmatpush1.bf16.msra.mxu0 %v188
    %293 = vmatprep.subr.bf16.mxu0 %v193
    %294 = vmatpush1.bf16.msra.mxu0 %v192
    %295 = vmatprep.subr.bf16.mxu0 %v197
    %296 = vmatpush1.bf16.msra.mxu0 %v196
    %297 = vmatprep.subr.bf16.mxu0 %v201
    %298 = vmatpush1.bf16.msra.mxu0 %v200
    %299 = vmatprep.subr.bf16.mxu0 %v205
    %300 = vmatpush1.bf16.msra.mxu0 %v204
    %301 = vmatprep.subr.bf16.mxu0 %v209
    %302 = vmatpush1.bf16.msra.mxu0 %v208
    %303 = vmatprep.subr.bf16.mxu0 %v213
    %304 = vmatpush1.bf16.msra.mxu0 %v212
    %305 = vmatprep.subr.bf16.mxu0 0
    %306 = vmatpush1.bf16.msra.mxu0 0
    %307 = vmatprep.subr.bf16.mxu0 0
    %308 = vmatpush1.bf16.msra.mxu0 0
    %309 = vmatprep.subr.bf16.mxu0 0
    %310 = vmatpush1.bf16.msra.mxu0 0
    %311 = vmatprep.subr.bf16.mxu0 0
    %312 = vmatpush1.bf16.msra.mxu0 0
    %313 = vmatprep.subr.bf16.mxu0 0
    %314 = vmatpush1.bf16.msra.mxu0 0
    %315 = vmatprep.subr.bf16.mxu0 0
    %316 = vmatpush1.bf16.msra.mxu0 0
    %317 = vmatprep.subr.bf16.mxu0 0
    %318 = vmatpush1.bf16.msra.mxu0 0
    %319 = vmatprep.subr.bf16.mxu0 0
    %320 = vmatpush1.bf16.msra.mxu0 0
    %321 = vmatprep.mubr.bf16.mxu0 0
    %322 = vmatmul.mubr.bf16.gmra.mrb[0].mxu0 %v84
    %v323 = vpop.f32.mrb[0].mxu0
    %v324 = vadd.f32 0.0, %v323
    %v325 = vpop.f32.mrb[0].mxu0
    %v326 = vadd.f32 0.0, %v325
    %v327 = vpop.f32.mrb[0].mxu0
    %v328 = vadd.f32 0.0, %v327
    %v329 = vpop.f32.mrb[0].mxu0
    %v330 = vadd.f32 0.0, %v329
    %331 = vdwg.mxu0
    %v332 = vld [vmem:[%s2] sm:$0xff]
    %v333 = vld [vmem:[%s2 + $0x8] sm:$0xff]
    %v334 = vld [vmem:[%s3] sm:$0xff]
    %v335 = vld [vmem:[%s3 + $0x8] sm:$0xff]
    %v336 = vadd.f32 %v281, %v283
    %v337 = vadd.f32 %v336, %v324
    %v338 = vadd.f32 %v337, %v326
    %339 = vadd.xlane.f32.xlu0 %v338
    %v340 = vpop.xlane.xlu0 %339
    %v341 = vadd.f32 %v285, %v287
    %v342 = vadd.f32 %v341, %v328
    %v343 = vadd.f32 %v342, %v330
    %344 = vadd.xlane.f32.xlu0 %v343
    %v345 = vpop.xlane.xlu0 %344
    %v346 = vmul.f32 %v340, 0.001953125
    %v347 = vmul.f32 %v345, 0.001953125
    %v348 = vmul.f32 %v281, %v281
    %v349 = vmul.f32 %v283, %v283
    %v350 = vmul.f32 %v324, %v324
    %v351 = vmul.f32 %v326, %v326
    %v352 = vmul.f32 %v285, %v285
    %v353 = vmul.f32 %v287, %v287
    %v354 = vmul.f32 %v328, %v328
    %v355 = vmul.f32 %v330, %v330
    %v356 = vadd.f32 %v348, %v349
    %v357 = vadd.f32 %v356, %v350
    %v358 = vadd.f32 %v357, %v351
    %359 = vadd.xlane.f32.xlu0 %v358
    %v360 = vpop.xlane.xlu0 %359
    %v361 = vadd.f32 %v352, %v353
    %v362 = vadd.f32 %v361, %v354
    %v363 = vadd.f32 %v362, %v355
    %364 = vadd.xlane.f32.xlu0 %v363
    %v365 = vpop.xlane.xlu0 %364
    %v366 = vmul.f32 %v360, 0.001953125
    %v367 = vmul.f32 %v365, 0.001953125
    %v368 = vmul.f32 %v346, %v346
    %v369 = vmul.f32 %v347, %v347
    %v370 = vsub.f32 %v366, %v368
    %v371 = vsub.f32 %v367, %v369
    %v372 = vsub.f32 %v281, %v346
    %v373 = vsub.f32 %v283, %v346
    %v374 = vsub.f32 %v324, %v346
    %v375 = vsub.f32 %v326, %v346
    %v376 = vsub.f32 %v285, %v347
    %v377 = vsub.f32 %v287, %v347
    %v378 = vsub.f32 %v328, %v347
    %v379 = vsub.f32 %v330, %v347
    %v380 = vadd.f32 %v370, 1e-05
    %v381 = vadd.f32 %v371, 1e-05
    %v382 = vrsqrt.pop %v380
    %v383 = vrsqrt.pop %v381
    %v384 = vmul.f32 %v332, %v382
    %v385 = vmul.f32 %v333, %v383
    %387 = vset.pattern.permute.xlu0 0
    %388 = vperm.xlu0 %387, %v384
    %v389 = vpop.permute.xlu0 %388
    %392 = vset.pattern.permute.xlu0 0
    %393 = vperm.xlu0 %392, %v385
    %v394 = vpop.permute.xlu0 %393
    %v396 = vmul.f32 %v372, %v389
    %v397 = vmul.f32 %v373, %v389
    %v398 = vmul.f32 %v374, %v389
    %v399 = vmul.f32 %v375, %v389
    %v400 = vmul.f32 %v376, %v394
    %v401 = vmul.f32 %v377, %v394
    %v402 = vmul.f32 %v378, %v394
    %v403 = vmul.f32 %v379, %v394
    %405 = vset.pattern.permute.xlu0 0
    %406 = vperm.xlu0 %405, %v334
    %v407 = vpop.permute.xlu0 %406
    %410 = vset.pattern.permute.xlu0 0
    %411 = vperm.xlu0 %410, %v335
    %v412 = vpop.permute.xlu0 %411
    %v414 = vadd.f32 %v396, %v407
    %v415 = vadd.f32 %v397, %v407
    %v416 = vadd.f32 %v398, %v407
    %v417 = vadd.f32 %v399, %v407
    %v418 = vadd.f32 %v400, %v412
    %v419 = vadd.f32 %v401, %v412
    %v420 = vadd.f32 %v402, %v412
    %v421 = vadd.f32 %v403, %v412
    %v422 = vmul.f32 %v414, 0.2
    %v423 = vmul.f32 %v415, 0.2
    %v424 = vmul.f32 %v416, 0.2
    %v425 = vmul.f32 %v417, 0.2
    %v426 = vmul.f32 %v418, 0.2
    %v427 = vmul.f32 %v419, 0.2
    %v428 = vmul.f32 %v420, 0.2
    %v429 = vmul.f32 %v421, 0.2
    %v430 = vmax.f32 %v414, %v422
    %v431 = vmax.f32 %v415, %v423
    %v432 = vmax.f32 %v416, %v424
    %v433 = vmax.f32 %v417, %v425
    %v434 = vmax.f32 %v418, %v426
    %v435 = vmax.f32 %v419, %v427
    %v436 = vmax.f32 %v420, %v428
    %v437 = vmax.f32 %v421, %v429
    %v438 = vpack.c.bf16 %v434, %v430
    %v439 = vpack.c.bf16 %v435, %v431
    %v440 = vpack.c.bf16 %v436, %v432
    %v441 = vpack.c.bf16 %v437, %v433
    %v442 = vld [vmem:[%s4] sm:$0xff]
    %v443 = vld [vmem:[%s4 + $0x8] sm:$0xff]
    %v444 = vld [vmem:[%s4 + $0x10] sm:$0xff]
    %v445 = vld [vmem:[%s4 + $0x18] sm:$0xff]
    %v446 = vld [vmem:[%s4 + $0x20] sm:$0xff]
    %v447 = vld [vmem:[%s4 + $0x28] sm:$0xff]
    %v448 = vld [vmem:[%s4 + $0x30] sm:$0xff]
    %v449 = vld [vmem:[%s4 + $0x38] sm:$0xff]
    %v450 = vld [vmem:[%s4 + $0x40] sm:$0xff]
    %v451 = vld [vmem:[%s4 + $0x48] sm:$0xff]
    %v452 = vld [vmem:[%s4 + $0x50] sm:$0xff]
    %v453 = vld [vmem:[%s4 + $0x58] sm:$0xff]
    %v454 = vld [vmem:[%s4 + $0x60] sm:$0xff]
    %v455 = vld [vmem:[%s4 + $0x68] sm:$0xff]
    %v456 = vld [vmem:[%s4 + $0x70] sm:$0xff]
    %v457 = vld [vmem:[%s4 + $0x78] sm:$0xff]
    %v458 = vld [vmem:[%s4 + $0x80] sm:$0xff]
    %v459 = vld [vmem:[%s4 + $0x88] sm:$0xff]
    %v460 = vld [vmem:[%s4 + $0x90] sm:$0xff]
    %v461 = vld [vmem:[%s4 + $0x98] sm:$0xff]
    %v462 = vld [vmem:[%s4 + $0xa0] sm:$0xff]
    %v463 = vld [vmem:[%s4 + $0xa8] sm:$0xff]
    %v464 = vld [vmem:[%s4 + $0xb0] sm:$0xff]
    %v465 = vld [vmem:[%s4 + $0xb8] sm:$0xff]
    %v466 = vld [vmem:[%s4 + $0xc0] sm:$0xff]
    %v467 = vld [vmem:[%s4 + $0xc8] sm:$0xff]
    %v468 = vld [vmem:[%s4 + $0xd0] sm:$0xff]
    %v469 = vld [vmem:[%s4 + $0xd8] sm:$0xff]
    %v470 = vld [vmem:[%s4 + $0xe0] sm:$0xff]
    %v471 = vld [vmem:[%s4 + $0xe8] sm:$0xff]
    %v472 = vld [vmem:[%s4 + $0xf0] sm:$0xff]
    %v473 = vld [vmem:[%s4 + $0xf8] sm:$0xff]
    %v474 = vld [vmem:[%s4 + $0x100] sm:$0xff]
    %v475 = vld [vmem:[%s4 + $0x108] sm:$0xff]
    %v476 = vld [vmem:[%s4 + $0x110] sm:$0xff]
    %v477 = vld [vmem:[%s4 + $0x118] sm:$0xff]
    %v478 = vld [vmem:[%s4 + $0x120] sm:$0xff]
    %v479 = vld [vmem:[%s4 + $0x128] sm:$0xff]
    %v480 = vld [vmem:[%s4 + $0x130] sm:$0xff]
    %v481 = vld [vmem:[%s4 + $0x138] sm:$0xff]
    %v482 = vld [vmem:[%s4 + $0x140] sm:$0xff]
    %v483 = vld [vmem:[%s4 + $0x148] sm:$0xff]
    %v484 = vld [vmem:[%s4 + $0x150] sm:$0xff]
    %v485 = vld [vmem:[%s4 + $0x158] sm:$0xff]
    %v486 = vld [vmem:[%s4 + $0x160] sm:$0xff]
    %v487 = vld [vmem:[%s4 + $0x168] sm:$0xff]
    %v488 = vld [vmem:[%s4 + $0x170] sm:$0xff]
    %v489 = vld [vmem:[%s4 + $0x178] sm:$0xff]
    %v490 = vld [vmem:[%s4 + $0x180] sm:$0xff]
    %v491 = vld [vmem:[%s4 + $0x188] sm:$0xff]
    %v492 = vld [vmem:[%s4 + $0x190] sm:$0xff]
    %v493 = vld [vmem:[%s4 + $0x198] sm:$0xff]
    %v494 = vld [vmem:[%s4 + $0x1a0] sm:$0xff]
    %v495 = vld [vmem:[%s4 + $0x1a8] sm:$0xff]
    %v496 = vld [vmem:[%s4 + $0x1b0] sm:$0xff]
    %v497 = vld [vmem:[%s4 + $0x1b8] sm:$0xff]
    %v498 = vld [vmem:[%s4 + $0x1c0] sm:$0xff]
    %v499 = vld [vmem:[%s4 + $0x1c8] sm:$0xff]
    %v500 = vld [vmem:[%s4 + $0x1d0] sm:$0xff]
    %v501 = vld [vmem:[%s4 + $0x1d8] sm:$0xff]
    %v502 = vld [vmem:[%s4 + $0x1e0] sm:$0xff]
    %v503 = vld [vmem:[%s4 + $0x1e8] sm:$0xff]
    %v504 = vld [vmem:[%s4 + $0x1f0] sm:$0xff]
    %v505 = vld [vmem:[%s4 + $0x1f8] sm:$0xff]
    %v506 = vld [vmem:[%s4 + $0x200] sm:$0xff]
    %v507 = vld [vmem:[%s4 + $0x208] sm:$0xff]
    %v508 = vld [vmem:[%s4 + $0x210] sm:$0xff]
    %v509 = vld [vmem:[%s4 + $0x218] sm:$0xff]
    %v510 = vld [vmem:[%s4 + $0x220] sm:$0xff]
    %v511 = vld [vmem:[%s4 + $0x228] sm:$0xff]
    %v512 = vld [vmem:[%s4 + $0x230] sm:$0xff]
    %v513 = vld [vmem:[%s4 + $0x238] sm:$0xff]
    %v514 = vld [vmem:[%s4 + $0x240] sm:$0xff]
    %v515 = vld [vmem:[%s4 + $0x248] sm:$0xff]
    %v516 = vld [vmem:[%s4 + $0x250] sm:$0xff]
    %v517 = vld [vmem:[%s4 + $0x258] sm:$0xff]
    %v518 = vld [vmem:[%s4 + $0x260] sm:$0xff]
    %v519 = vld [vmem:[%s4 + $0x268] sm:$0xff]
    %v520 = vld [vmem:[%s4 + $0x270] sm:$0xff]
    %v521 = vld [vmem:[%s4 + $0x278] sm:$0xff]
    %v522 = vld [vmem:[%s4 + $0x280] sm:$0xff]
    %v523 = vld [vmem:[%s4 + $0x288] sm:$0xff]
    %v524 = vld [vmem:[%s4 + $0x290] sm:$0xff]
    %v525 = vld [vmem:[%s4 + $0x298] sm:$0xff]
    %v526 = vld [vmem:[%s4 + $0x2a0] sm:$0xff]
    %v527 = vld [vmem:[%s4 + $0x2a8] sm:$0xff]
    %v528 = vld [vmem:[%s4 + $0x2b0] sm:$0xff]
    %v529 = vld [vmem:[%s4 + $0x2b8] sm:$0xff]
    %v530 = vld [vmem:[%s4 + $0x2c0] sm:$0xff]
    %v531 = vld [vmem:[%s4 + $0x2c8] sm:$0xff]
    %v532 = vld [vmem:[%s4 + $0x2d0] sm:$0xff]
    %v533 = vld [vmem:[%s4 + $0x2d8] sm:$0xff]
    %v534 = vld [vmem:[%s4 + $0x2e0] sm:$0xff]
    %v535 = vld [vmem:[%s4 + $0x2e8] sm:$0xff]
    %v536 = vld [vmem:[%s4 + $0x2f0] sm:$0xff]
    %v537 = vld [vmem:[%s4 + $0x2f8] sm:$0xff]
    %v538 = vld [vmem:[%s4 + $0x300] sm:$0xff]
    %v539 = vld [vmem:[%s4 + $0x308] sm:$0xff]
    %v540 = vld [vmem:[%s4 + $0x310] sm:$0xff]
    %v541 = vld [vmem:[%s4 + $0x318] sm:$0xff]
    %v542 = vld [vmem:[%s4 + $0x320] sm:$0xff]
    %v543 = vld [vmem:[%s4 + $0x328] sm:$0xff]
    %v544 = vld [vmem:[%s4 + $0x330] sm:$0xff]
    %v545 = vld [vmem:[%s4 + $0x338] sm:$0xff]
    %v546 = vld [vmem:[%s4 + $0x340] sm:$0xff]
    %v547 = vld [vmem:[%s4 + $0x348] sm:$0xff]
    %v548 = vld [vmem:[%s4 + $0x350] sm:$0xff]
    %v549 = vld [vmem:[%s4 + $0x358] sm:$0xff]
    %v550 = vld [vmem:[%s4 + $0x360] sm:$0xff]
    %v551 = vld [vmem:[%s4 + $0x368] sm:$0xff]
    %v552 = vld [vmem:[%s4 + $0x370] sm:$0xff]
    %v553 = vld [vmem:[%s4 + $0x378] sm:$0xff]
    %v554 = vld [vmem:[%s4 + $0x380] sm:$0xff]
    %v555 = vld [vmem:[%s4 + $0x388] sm:$0xff]
    %v556 = vld [vmem:[%s4 + $0x390] sm:$0xff]
    %v557 = vld [vmem:[%s4 + $0x398] sm:$0xff]
    %v558 = vld [vmem:[%s4 + $0x3a0] sm:$0xff]
    %v559 = vld [vmem:[%s4 + $0x3a8] sm:$0xff]
    %v560 = vld [vmem:[%s4 + $0x3b0] sm:$0xff]
    %v561 = vld [vmem:[%s4 + $0x3b8] sm:$0xff]
    %v562 = vld [vmem:[%s4 + $0x3c0] sm:$0xff]
    %v563 = vld [vmem:[%s4 + $0x3c8] sm:$0xff]
    %v564 = vld [vmem:[%s4 + $0x3d0] sm:$0xff]
    %v565 = vld [vmem:[%s4 + $0x3d8] sm:$0xff]
    %v566 = vld [vmem:[%s4 + $0x3e0] sm:$0xff]
    %v567 = vld [vmem:[%s4 + $0x3e8] sm:$0xff]
    %v568 = vld [vmem:[%s4 + $0x3f0] sm:$0xff]
    %v569 = vld [vmem:[%s4 + $0x3f8] sm:$0xff]
    %v570 = vld [vmem:[%s4 + $0x400] sm:$0xff]
    %v571 = vld [vmem:[%s4 + $0x408] sm:$0xff]
    %v572 = vld [vmem:[%s4 + $0x410] sm:$0xff]
    %v573 = vld [vmem:[%s4 + $0x418] sm:$0xff]
    %v574 = vld [vmem:[%s4 + $0x420] sm:$0xff]
    %v575 = vld [vmem:[%s4 + $0x428] sm:$0xff]
    %v576 = vld [vmem:[%s4 + $0x430] sm:$0xff]
    %v577 = vld [vmem:[%s4 + $0x438] sm:$0xff]
    %v578 = vld [vmem:[%s4 + $0x440] sm:$0xff]
    %v579 = vld [vmem:[%s4 + $0x448] sm:$0xff]
    %v580 = vld [vmem:[%s4 + $0x450] sm:$0xff]
    %v581 = vld [vmem:[%s4 + $0x458] sm:$0xff]
    %v582 = vld [vmem:[%s4 + $0x460] sm:$0xff]
    %v583 = vld [vmem:[%s4 + $0x468] sm:$0xff]
    %v584 = vld [vmem:[%s4 + $0x470] sm:$0xff]
    %v585 = vld [vmem:[%s4 + $0x478] sm:$0xff]
    %v586 = vld [vmem:[%s4 + $0x480] sm:$0xff]
    %v587 = vld [vmem:[%s4 + $0x488] sm:$0xff]
    %v588 = vld [vmem:[%s4 + $0x490] sm:$0xff]
    %v589 = vld [vmem:[%s4 + $0x498] sm:$0xff]
    %v590 = vld [vmem:[%s4 + $0x4a0] sm:$0xff]
    %v591 = vld [vmem:[%s4 + $0x4a8] sm:$0xff]
    %v592 = vld [vmem:[%s4 + $0x4b0] sm:$0xff]
    %v593 = vld [vmem:[%s4 + $0x4b8] sm:$0xff]
    %v594 = vld [vmem:[%s4 + $0x4c0] sm:$0xff]
    %v595 = vld [vmem:[%s4 + $0x4c8] sm:$0xff]
    %v596 = vld [vmem:[%s4 + $0x4d0] sm:$0xff]
    %v597 = vld [vmem:[%s4 + $0x4d8] sm:$0xff]
    %v598 = vld [vmem:[%s4 + $0x4e0] sm:$0xff]
    %v599 = vld [vmem:[%s4 + $0x4e8] sm:$0xff]
    %v600 = vld [vmem:[%s4 + $0x4f0] sm:$0xff]
    %v601 = vld [vmem:[%s4 + $0x4f8] sm:$0xff]
    %v602 = vld [vmem:[%s4 + $0x500] sm:$0xff]
    %v603 = vld [vmem:[%s4 + $0x508] sm:$0xff]
    %v604 = vld [vmem:[%s4 + $0x510] sm:$0xff]
    %v605 = vld [vmem:[%s4 + $0x518] sm:$0xff]
    %v606 = vld [vmem:[%s4 + $0x520] sm:$0xff]
    %v607 = vld [vmem:[%s4 + $0x528] sm:$0xff]
    %v608 = vld [vmem:[%s4 + $0x530] sm:$0xff]
    %v609 = vld [vmem:[%s4 + $0x538] sm:$0xff]
    %v610 = vld [vmem:[%s4 + $0x540] sm:$0xff]
    %v611 = vld [vmem:[%s4 + $0x548] sm:$0xff]
    %v612 = vld [vmem:[%s4 + $0x550] sm:$0xff]
    %v613 = vld [vmem:[%s4 + $0x558] sm:$0xff]
    %v614 = vld [vmem:[%s4 + $0x560] sm:$0xff]
    %v615 = vld [vmem:[%s4 + $0x568] sm:$0xff]
    %v616 = vld [vmem:[%s4 + $0x570] sm:$0xff]
    %v617 = vld [vmem:[%s4 + $0x578] sm:$0xff]
    %v618 = vld [vmem:[%s4 + $0x580] sm:$0xff]
    %v619 = vld [vmem:[%s4 + $0x588] sm:$0xff]
    %v620 = vld [vmem:[%s4 + $0x590] sm:$0xff]
    %v621 = vld [vmem:[%s4 + $0x598] sm:$0xff]
    %v622 = vld [vmem:[%s4 + $0x5a0] sm:$0xff]
    %v623 = vld [vmem:[%s4 + $0x5a8] sm:$0xff]
    %v624 = vld [vmem:[%s4 + $0x5b0] sm:$0xff]
    %v625 = vld [vmem:[%s4 + $0x5b8] sm:$0xff]
    %v626 = vld [vmem:[%s4 + $0x5c0] sm:$0xff]
    %v627 = vld [vmem:[%s4 + $0x5c8] sm:$0xff]
    %v628 = vld [vmem:[%s4 + $0x5d0] sm:$0xff]
    %v629 = vld [vmem:[%s4 + $0x5d8] sm:$0xff]
    %v630 = vld [vmem:[%s4 + $0x5e0] sm:$0xff]
    %v631 = vld [vmem:[%s4 + $0x5e8] sm:$0xff]
    %v632 = vld [vmem:[%s4 + $0x5f0] sm:$0xff]
    %v633 = vld [vmem:[%s4 + $0x5f8] sm:$0xff]
    %v634 = vld [vmem:[%s4 + $0x600] sm:$0xff]
    %v635 = vld [vmem:[%s4 + $0x608] sm:$0xff]
    %v636 = vld [vmem:[%s4 + $0x610] sm:$0xff]
    %v637 = vld [vmem:[%s4 + $0x618] sm:$0xff]
    %v638 = vld [vmem:[%s4 + $0x620] sm:$0xff]
    %v639 = vld [vmem:[%s4 + $0x628] sm:$0xff]
    %v640 = vld [vmem:[%s4 + $0x630] sm:$0xff]
    %v641 = vld [vmem:[%s4 + $0x638] sm:$0xff]
    %v642 = vld [vmem:[%s4 + $0x640] sm:$0xff]
    %v643 = vld [vmem:[%s4 + $0x648] sm:$0xff]
    %v644 = vld [vmem:[%s4 + $0x650] sm:$0xff]
    %v645 = vld [vmem:[%s4 + $0x658] sm:$0xff]
    %v646 = vld [vmem:[%s4 + $0x660] sm:$0xff]
    %v647 = vld [vmem:[%s4 + $0x668] sm:$0xff]
    %v648 = vld [vmem:[%s4 + $0x670] sm:$0xff]
    %v649 = vld [vmem:[%s4 + $0x678] sm:$0xff]
    %v650 = vld [vmem:[%s4 + $0x680] sm:$0xff]
    %v651 = vld [vmem:[%s4 + $0x688] sm:$0xff]
    %v652 = vld [vmem:[%s4 + $0x690] sm:$0xff]
    %v653 = vld [vmem:[%s4 + $0x698] sm:$0xff]
    %v654 = vld [vmem:[%s4 + $0x6a0] sm:$0xff]
    %v655 = vld [vmem:[%s4 + $0x6a8] sm:$0xff]
    %v656 = vld [vmem:[%s4 + $0x6b0] sm:$0xff]
    %v657 = vld [vmem:[%s4 + $0x6b8] sm:$0xff]
    %v658 = vld [vmem:[%s4 + $0x6c0] sm:$0xff]
    %v659 = vld [vmem:[%s4 + $0x6c8] sm:$0xff]
    %v660 = vld [vmem:[%s4 + $0x6d0] sm:$0xff]
    %v661 = vld [vmem:[%s4 + $0x6d8] sm:$0xff]
    %v662 = vld [vmem:[%s4 + $0x6e0] sm:$0xff]
    %v663 = vld [vmem:[%s4 + $0x6e8] sm:$0xff]
    %v664 = vld [vmem:[%s4 + $0x6f0] sm:$0xff]
    %v665 = vld [vmem:[%s4 + $0x6f8] sm:$0xff]
    %v666 = vld [vmem:[%s4 + $0x700] sm:$0xff]
    %v667 = vld [vmem:[%s4 + $0x708] sm:$0xff]
    %v668 = vld [vmem:[%s4 + $0x710] sm:$0xff]
    %v669 = vld [vmem:[%s4 + $0x718] sm:$0xff]
    %v670 = vld [vmem:[%s4 + $0x720] sm:$0xff]
    %v671 = vld [vmem:[%s4 + $0x728] sm:$0xff]
    %v672 = vld [vmem:[%s4 + $0x730] sm:$0xff]
    %v673 = vld [vmem:[%s4 + $0x738] sm:$0xff]
    %v674 = vld [vmem:[%s4 + $0x740] sm:$0xff]
    %v675 = vld [vmem:[%s4 + $0x748] sm:$0xff]
    %v676 = vld [vmem:[%s4 + $0x750] sm:$0xff]
    %v677 = vld [vmem:[%s4 + $0x758] sm:$0xff]
    %v678 = vld [vmem:[%s4 + $0x760] sm:$0xff]
    %v679 = vld [vmem:[%s4 + $0x768] sm:$0xff]
    %v680 = vld [vmem:[%s4 + $0x770] sm:$0xff]
    %v681 = vld [vmem:[%s4 + $0x778] sm:$0xff]
    %v682 = vld [vmem:[%s4 + $0x780] sm:$0xff]
    %v683 = vld [vmem:[%s4 + $0x788] sm:$0xff]
    %v684 = vld [vmem:[%s4 + $0x790] sm:$0xff]
    %v685 = vld [vmem:[%s4 + $0x798] sm:$0xff]
    %v686 = vld [vmem:[%s4 + $0x7a0] sm:$0xff]
    %v687 = vld [vmem:[%s4 + $0x7a8] sm:$0xff]
    %v688 = vld [vmem:[%s4 + $0x7b0] sm:$0xff]
    %v689 = vld [vmem:[%s4 + $0x7b8] sm:$0xff]
    %v690 = vld [vmem:[%s4 + $0x7c0] sm:$0xff]
    %v691 = vld [vmem:[%s4 + $0x7c8] sm:$0xff]
    %v692 = vld [vmem:[%s4 + $0x7d0] sm:$0xff]
    %v693 = vld [vmem:[%s4 + $0x7d8] sm:$0xff]
    %v694 = vld [vmem:[%s4 + $0x7e0] sm:$0xff]
    %v695 = vld [vmem:[%s4 + $0x7e8] sm:$0xff]
    %v696 = vld [vmem:[%s4 + $0x7f0] sm:$0xff]
    %v697 = vld [vmem:[%s4 + $0x7f8] sm:$0xff]
    %v698 = vld [vmem:[%s4 + $0x800] sm:$0xff]
    %v699 = vld [vmem:[%s4 + $0x808] sm:$0xff]
    %v700 = vld [vmem:[%s4 + $0x810] sm:$0xff]
    %v701 = vld [vmem:[%s4 + $0x818] sm:$0xff]
    %v702 = vld [vmem:[%s4 + $0x820] sm:$0xff]
    %v703 = vld [vmem:[%s4 + $0x828] sm:$0xff]
    %v704 = vld [vmem:[%s4 + $0x830] sm:$0xff]
    %v705 = vld [vmem:[%s4 + $0x838] sm:$0xff]
    %v706 = vld [vmem:[%s4 + $0x840] sm:$0xff]
    %v707 = vld [vmem:[%s4 + $0x848] sm:$0xff]
    %v708 = vld [vmem:[%s4 + $0x850] sm:$0xff]
    %v709 = vld [vmem:[%s4 + $0x858] sm:$0xff]
    %v710 = vld [vmem:[%s4 + $0x860] sm:$0xff]
    %v711 = vld [vmem:[%s4 + $0x868] sm:$0xff]
    %v712 = vld [vmem:[%s4 + $0x870] sm:$0xff]
    %v713 = vld [vmem:[%s4 + $0x878] sm:$0xff]
    %v714 = vld [vmem:[%s4 + $0x880] sm:$0xff]
    %v715 = vld [vmem:[%s4 + $0x888] sm:$0xff]
    %v716 = vld [vmem:[%s4 + $0x890] sm:$0xff]
    %v717 = vld [vmem:[%s4 + $0x898] sm:$0xff]
    %v718 = vld [vmem:[%s4 + $0x8a0] sm:$0xff]
    %v719 = vld [vmem:[%s4 + $0x8a8] sm:$0xff]
    %v720 = vld [vmem:[%s4 + $0x8b0] sm:$0xff]
    %v721 = vld [vmem:[%s4 + $0x8b8] sm:$0xff]
    %v722 = vld [vmem:[%s4 + $0x8c0] sm:$0xff]
    %v723 = vld [vmem:[%s4 + $0x8c8] sm:$0xff]
    %v724 = vld [vmem:[%s4 + $0x8d0] sm:$0xff]
    %v725 = vld [vmem:[%s4 + $0x8d8] sm:$0xff]
    %v726 = vld [vmem:[%s4 + $0x8e0] sm:$0xff]
    %v727 = vld [vmem:[%s4 + $0x8e8] sm:$0xff]
    %v728 = vld [vmem:[%s4 + $0x8f0] sm:$0xff]
    %v729 = vld [vmem:[%s4 + $0x8f8] sm:$0xff]
    %v730 = vld [vmem:[%s4 + $0x900] sm:$0xff]
    %v731 = vld [vmem:[%s4 + $0x908] sm:$0xff]
    %v732 = vld [vmem:[%s4 + $0x910] sm:$0xff]
    %v733 = vld [vmem:[%s4 + $0x918] sm:$0xff]
    %v734 = vld [vmem:[%s4 + $0x920] sm:$0xff]
    %v735 = vld [vmem:[%s4 + $0x928] sm:$0xff]
    %v736 = vld [vmem:[%s4 + $0x930] sm:$0xff]
    %v737 = vld [vmem:[%s4 + $0x938] sm:$0xff]
    %v738 = vld [vmem:[%s4 + $0x940] sm:$0xff]
    %v739 = vld [vmem:[%s4 + $0x948] sm:$0xff]
    %v740 = vld [vmem:[%s4 + $0x950] sm:$0xff]
    %v741 = vld [vmem:[%s4 + $0x958] sm:$0xff]
    %v742 = vld [vmem:[%s4 + $0x960] sm:$0xff]
    %v743 = vld [vmem:[%s4 + $0x968] sm:$0xff]
    %v744 = vld [vmem:[%s4 + $0x970] sm:$0xff]
    %v745 = vld [vmem:[%s4 + $0x978] sm:$0xff]
    %v746 = vld [vmem:[%s4 + $0x980] sm:$0xff]
    %v747 = vld [vmem:[%s4 + $0x988] sm:$0xff]
    %v748 = vld [vmem:[%s4 + $0x990] sm:$0xff]
    %v749 = vld [vmem:[%s4 + $0x998] sm:$0xff]
    %v750 = vld [vmem:[%s4 + $0x9a0] sm:$0xff]
    %v751 = vld [vmem:[%s4 + $0x9a8] sm:$0xff]
    %v752 = vld [vmem:[%s4 + $0x9b0] sm:$0xff]
    %v753 = vld [vmem:[%s4 + $0x9b8] sm:$0xff]
    %v754 = vld [vmem:[%s4 + $0x9c0] sm:$0xff]
    %v755 = vld [vmem:[%s4 + $0x9c8] sm:$0xff]
    %v756 = vld [vmem:[%s4 + $0x9d0] sm:$0xff]
    %v757 = vld [vmem:[%s4 + $0x9d8] sm:$0xff]
    %v758 = vld [vmem:[%s4 + $0x9e0] sm:$0xff]
    %v759 = vld [vmem:[%s4 + $0x9e8] sm:$0xff]
    %v760 = vld [vmem:[%s4 + $0x9f0] sm:$0xff]
    %v761 = vld [vmem:[%s4 + $0x9f8] sm:$0xff]
    %v762 = vld [vmem:[%s4 + $0xa00] sm:$0xff]
    %v763 = vld [vmem:[%s4 + $0xa08] sm:$0xff]
    %v764 = vld [vmem:[%s4 + $0xa10] sm:$0xff]
    %v765 = vld [vmem:[%s4 + $0xa18] sm:$0xff]
    %v766 = vld [vmem:[%s4 + $0xa20] sm:$0xff]
    %v767 = vld [vmem:[%s4 + $0xa28] sm:$0xff]
    %v768 = vld [vmem:[%s4 + $0xa30] sm:$0xff]
    %v769 = vld [vmem:[%s4 + $0xa38] sm:$0xff]
    %v770 = vld [vmem:[%s4 + $0xa40] sm:$0xff]
    %v771 = vld [vmem:[%s4 + $0xa48] sm:$0xff]
    %v772 = vld [vmem:[%s4 + $0xa50] sm:$0xff]
    %v773 = vld [vmem:[%s4 + $0xa58] sm:$0xff]
    %v774 = vld [vmem:[%s4 + $0xa60] sm:$0xff]
    %v775 = vld [vmem:[%s4 + $0xa68] sm:$0xff]
    %v776 = vld [vmem:[%s4 + $0xa70] sm:$0xff]
    %v777 = vld [vmem:[%s4 + $0xa78] sm:$0xff]
    %v778 = vld [vmem:[%s4 + $0xa80] sm:$0xff]
    %v779 = vld [vmem:[%s4 + $0xa88] sm:$0xff]
    %v780 = vld [vmem:[%s4 + $0xa90] sm:$0xff]
    %v781 = vld [vmem:[%s4 + $0xa98] sm:$0xff]
    %v782 = vld [vmem:[%s4 + $0xaa0] sm:$0xff]
    %v783 = vld [vmem:[%s4 + $0xaa8] sm:$0xff]
    %v784 = vld [vmem:[%s4 + $0xab0] sm:$0xff]
    %v785 = vld [vmem:[%s4 + $0xab8] sm:$0xff]
    %v786 = vld [vmem:[%s4 + $0xac0] sm:$0xff]
    %v787 = vld [vmem:[%s4 + $0xac8] sm:$0xff]
    %v788 = vld [vmem:[%s4 + $0xad0] sm:$0xff]
    %v789 = vld [vmem:[%s4 + $0xad8] sm:$0xff]
    %v790 = vld [vmem:[%s4 + $0xae0] sm:$0xff]
    %v791 = vld [vmem:[%s4 + $0xae8] sm:$0xff]
    %v792 = vld [vmem:[%s4 + $0xaf0] sm:$0xff]
    %v793 = vld [vmem:[%s4 + $0xaf8] sm:$0xff]
    %v794 = vld [vmem:[%s4 + $0xb00] sm:$0xff]
    %v795 = vld [vmem:[%s4 + $0xb08] sm:$0xff]
    %v796 = vld [vmem:[%s4 + $0xb10] sm:$0xff]
    %v797 = vld [vmem:[%s4 + $0xb18] sm:$0xff]
    %v798 = vld [vmem:[%s4 + $0xb20] sm:$0xff]
    %v799 = vld [vmem:[%s4 + $0xb28] sm:$0xff]
    %v800 = vld [vmem:[%s4 + $0xb30] sm:$0xff]
    %v801 = vld [vmem:[%s4 + $0xb38] sm:$0xff]
    %v802 = vld [vmem:[%s4 + $0xb40] sm:$0xff]
    %v803 = vld [vmem:[%s4 + $0xb48] sm:$0xff]
    %v804 = vld [vmem:[%s4 + $0xb50] sm:$0xff]
    %v805 = vld [vmem:[%s4 + $0xb58] sm:$0xff]
    %v806 = vld [vmem:[%s4 + $0xb60] sm:$0xff]
    %v807 = vld [vmem:[%s4 + $0xb68] sm:$0xff]
    %v808 = vld [vmem:[%s4 + $0xb70] sm:$0xff]
    %v809 = vld [vmem:[%s4 + $0xb78] sm:$0xff]
    %v810 = vld [vmem:[%s4 + $0xb80] sm:$0xff]
    %v811 = vld [vmem:[%s4 + $0xb88] sm:$0xff]
    %v812 = vld [vmem:[%s4 + $0xb90] sm:$0xff]
    %v813 = vld [vmem:[%s4 + $0xb98] sm:$0xff]
    %v814 = vld [vmem:[%s4 + $0xba0] sm:$0xff]
    %v815 = vld [vmem:[%s4 + $0xba8] sm:$0xff]
    %v816 = vld [vmem:[%s4 + $0xbb0] sm:$0xff]
    %v817 = vld [vmem:[%s4 + $0xbb8] sm:$0xff]
    %v818 = vld [vmem:[%s4 + $0xbc0] sm:$0xff]
    %v819 = vld [vmem:[%s4 + $0xbc8] sm:$0xff]
    %v820 = vld [vmem:[%s4 + $0xbd0] sm:$0xff]
    %v821 = vld [vmem:[%s4 + $0xbd8] sm:$0xff]
    %v822 = vld [vmem:[%s4 + $0xbe0] sm:$0xff]
    %v823 = vld [vmem:[%s4 + $0xbe8] sm:$0xff]
    %v824 = vld [vmem:[%s4 + $0xbf0] sm:$0xff]
    %v825 = vld [vmem:[%s4 + $0xbf8] sm:$0xff]
    %v826 = vld [vmem:[%s4 + $0xc00] sm:$0xff]
    %v827 = vld [vmem:[%s4 + $0xc08] sm:$0xff]
    %v828 = vld [vmem:[%s4 + $0xc10] sm:$0xff]
    %v829 = vld [vmem:[%s4 + $0xc18] sm:$0xff]
    %v830 = vld [vmem:[%s4 + $0xc20] sm:$0xff]
    %v831 = vld [vmem:[%s4 + $0xc28] sm:$0xff]
    %v832 = vld [vmem:[%s4 + $0xc30] sm:$0xff]
    %v833 = vld [vmem:[%s4 + $0xc38] sm:$0xff]
    %v834 = vld [vmem:[%s4 + $0xc40] sm:$0xff]
    %v835 = vld [vmem:[%s4 + $0xc48] sm:$0xff]
    %v836 = vld [vmem:[%s4 + $0xc50] sm:$0xff]
    %v837 = vld [vmem:[%s4 + $0xc58] sm:$0xff]
    %v838 = vld [vmem:[%s4 + $0xc60] sm:$0xff]
    %v839 = vld [vmem:[%s4 + $0xc68] sm:$0xff]
    %v840 = vld [vmem:[%s4 + $0xc70] sm:$0xff]
    %v841 = vld [vmem:[%s4 + $0xc78] sm:$0xff]
    %v842 = vld [vmem:[%s4 + $0xc80] sm:$0xff]
    %v843 = vld [vmem:[%s4 + $0xc88] sm:$0xff]
    %v844 = vld [vmem:[%s4 + $0xc90] sm:$0xff]
    %v845 = vld [vmem:[%s4 + $0xc98] sm:$0xff]
    %v846 = vld [vmem:[%s4 + $0xca0] sm:$0xff]
    %v847 = vld [vmem:[%s4 + $0xca8] sm:$0xff]
    %v848 = vld [vmem:[%s4 + $0xcb0] sm:$0xff]
    %v849 = vld [vmem:[%s4 + $0xcb8] sm:$0xff]
    %v850 = vld [vmem:[%s4 + $0xcc0] sm:$0xff]
    %v851 = vld [vmem:[%s4 + $0xcc8] sm:$0xff]
    %v852 = vld [vmem:[%s4 + $0xcd0] sm:$0xff]
    %v853 = vld [vmem:[%s4 + $0xcd8] sm:$0xff]
    %v854 = vld [vmem:[%s4 + $0xce0] sm:$0xff]
    %v855 = vld [vmem:[%s4 + $0xce8] sm:$0xff]
    %v856 = vld [vmem:[%s4 + $0xcf0] sm:$0xff]
    %v857 = vld [vmem:[%s4 + $0xcf8] sm:$0xff]
    %v858 = vld [vmem:[%s4 + $0xd00] sm:$0xff]
    %v859 = vld [vmem:[%s4 + $0xd08] sm:$0xff]
    %v860 = vld [vmem:[%s4 + $0xd10] sm:$0xff]
    %v861 = vld [vmem:[%s4 + $0xd18] sm:$0xff]
    %v862 = vld [vmem:[%s4 + $0xd20] sm:$0xff]
    %v863 = vld [vmem:[%s4 + $0xd28] sm:$0xff]
    %v864 = vld [vmem:[%s4 + $0xd30] sm:$0xff]
    %v865 = vld [vmem:[%s4 + $0xd38] sm:$0xff]
    %v866 = vld [vmem:[%s4 + $0xd40] sm:$0xff]
    %v867 = vld [vmem:[%s4 + $0xd48] sm:$0xff]
    %v868 = vld [vmem:[%s4 + $0xd50] sm:$0xff]
    %v869 = vld [vmem:[%s4 + $0xd58] sm:$0xff]
    %v870 = vld [vmem:[%s4 + $0xd60] sm:$0xff]
    %v871 = vld [vmem:[%s4 + $0xd68] sm:$0xff]
    %v872 = vld [vmem:[%s4 + $0xd70] sm:$0xff]
    %v873 = vld [vmem:[%s4 + $0xd78] sm:$0xff]
    %v874 = vld [vmem:[%s4 + $0xd80] sm:$0xff]
    %v875 = vld [vmem:[%s4 + $0xd88] sm:$0xff]
    %v876 = vld [vmem:[%s4 + $0xd90] sm:$0xff]
    %v877 = vld [vmem:[%s4 + $0xd98] sm:$0xff]
    %v878 = vld [vmem:[%s4 + $0xda0] sm:$0xff]
    %v879 = vld [vmem:[%s4 + $0xda8] sm:$0xff]
    %v880 = vld [vmem:[%s4 + $0xdb0] sm:$0xff]
    %v881 = vld [vmem:[%s4 + $0xdb8] sm:$0xff]
    %v882 = vld [vmem:[%s4 + $0xdc0] sm:$0xff]
    %v883 = vld [vmem:[%s4 + $0xdc8] sm:$0xff]
    %v884 = vld [vmem:[%s4 + $0xdd0] sm:$0xff]
    %v885 = vld [vmem:[%s4 + $0xdd8] sm:$0xff]
    %v886 = vld [vmem:[%s4 + $0xde0] sm:$0xff]
    %v887 = vld [vmem:[%s4 + $0xde8] sm:$0xff]
    %v888 = vld [vmem:[%s4 + $0xdf0] sm:$0xff]
    %v889 = vld [vmem:[%s4 + $0xdf8] sm:$0xff]
    %v890 = vld [vmem:[%s4 + $0xe00] sm:$0xff]
    %v891 = vld [vmem:[%s4 + $0xe08] sm:$0xff]
    %v892 = vld [vmem:[%s4 + $0xe10] sm:$0xff]
    %v893 = vld [vmem:[%s4 + $0xe18] sm:$0xff]
    %v894 = vld [vmem:[%s4 + $0xe20] sm:$0xff]
    %v895 = vld [vmem:[%s4 + $0xe28] sm:$0xff]
    %v896 = vld [vmem:[%s4 + $0xe30] sm:$0xff]
    %v897 = vld [vmem:[%s4 + $0xe38] sm:$0xff]
    %v898 = vld [vmem:[%s4 + $0xe40] sm:$0xff]
    %v899 = vld [vmem:[%s4 + $0xe48] sm:$0xff]
    %v900 = vld [vmem:[%s4 + $0xe50] sm:$0xff]
    %v901 = vld [vmem:[%s4 + $0xe58] sm:$0xff]
    %v902 = vld [vmem:[%s4 + $0xe60] sm:$0xff]
    %v903 = vld [vmem:[%s4 + $0xe68] sm:$0xff]
    %v904 = vld [vmem:[%s4 + $0xe70] sm:$0xff]
    %v905 = vld [vmem:[%s4 + $0xe78] sm:$0xff]
    %v906 = vld [vmem:[%s4 + $0xe80] sm:$0xff]
    %v907 = vld [vmem:[%s4 + $0xe88] sm:$0xff]
    %v908 = vld [vmem:[%s4 + $0xe90] sm:$0xff]
    %v909 = vld [vmem:[%s4 + $0xe98] sm:$0xff]
    %v910 = vld [vmem:[%s4 + $0xea0] sm:$0xff]
    %v911 = vld [vmem:[%s4 + $0xea8] sm:$0xff]
    %v912 = vld [vmem:[%s4 + $0xeb0] sm:$0xff]
    %v913 = vld [vmem:[%s4 + $0xeb8] sm:$0xff]
    %v914 = vld [vmem:[%s4 + $0xec0] sm:$0xff]
    %v915 = vld [vmem:[%s4 + $0xec8] sm:$0xff]
    %v916 = vld [vmem:[%s4 + $0xed0] sm:$0xff]
    %v917 = vld [vmem:[%s4 + $0xed8] sm:$0xff]
    %v918 = vld [vmem:[%s4 + $0xee0] sm:$0xff]
    %v919 = vld [vmem:[%s4 + $0xee8] sm:$0xff]
    %v920 = vld [vmem:[%s4 + $0xef0] sm:$0xff]
    %v921 = vld [vmem:[%s4 + $0xef8] sm:$0xff]
    %v922 = vld [vmem:[%s4 + $0xf00] sm:$0xff]
    %v923 = vld [vmem:[%s4 + $0xf08] sm:$0xff]
    %v924 = vld [vmem:[%s4 + $0xf10] sm:$0xff]
    %v925 = vld [vmem:[%s4 + $0xf18] sm:$0xff]
    %v926 = vld [vmem:[%s4 + $0xf20] sm:$0xff]
    %v927 = vld [vmem:[%s4 + $0xf28] sm:$0xff]
    %v928 = vld [vmem:[%s4 + $0xf30] sm:$0xff]
    %v929 = vld [vmem:[%s4 + $0xf38] sm:$0xff]
    %v930 = vld [vmem:[%s4 + $0xf40] sm:$0xff]
    %v931 = vld [vmem:[%s4 + $0xf48] sm:$0xff]
    %v932 = vld [vmem:[%s4 + $0xf50] sm:$0xff]
    %v933 = vld [vmem:[%s4 + $0xf58] sm:$0xff]
    %v934 = vld [vmem:[%s4 + $0xf60] sm:$0xff]
    %v935 = vld [vmem:[%s4 + $0xf68] sm:$0xff]
    %v936 = vld [vmem:[%s4 + $0xf70] sm:$0xff]
    %v937 = vld [vmem:[%s4 + $0xf78] sm:$0xff]
    %v938 = vld [vmem:[%s4 + $0xf80] sm:$0xff]
    %v939 = vld [vmem:[%s4 + $0xf88] sm:$0xff]
    %v940 = vld [vmem:[%s4 + $0xf90] sm:$0xff]
    %v941 = vld [vmem:[%s4 + $0xf98] sm:$0xff]
    %v942 = vld [vmem:[%s4 + $0xfa0] sm:$0xff]
    %v943 = vld [vmem:[%s4 + $0xfa8] sm:$0xff]
    %v944 = vld [vmem:[%s4 + $0xfb0] sm:$0xff]
    %v945 = vld [vmem:[%s4 + $0xfb8] sm:$0xff]
    %v946 = vld [vmem:[%s4 + $0xfc0] sm:$0xff]
    %v947 = vld [vmem:[%s4 + $0xfc8] sm:$0xff]
    %v948 = vld [vmem:[%s4 + $0xfd0] sm:$0xff]
    %v949 = vld [vmem:[%s4 + $0xfd8] sm:$0xff]
    %v950 = vld [vmem:[%s4 + $0xfe0] sm:$0xff]
    %v951 = vld [vmem:[%s4 + $0xfe8] sm:$0xff]
    %v952 = vld [vmem:[%s4 + $0xff0] sm:$0xff]
    %v953 = vld [vmem:[%s4 + $0xff8] sm:$0xff]
    %v1466 = vunpack.c.l.b16 %v442
    %v1467 = vunpack.c.h.b16 %v442
    %v1468 = vunpack.c.l.b16 %v443
    %v1469 = vunpack.c.h.b16 %v443
    %v1470 = vunpack.c.l.b16 %v444
    %v1471 = vunpack.c.h.b16 %v444
    %v1472 = vunpack.c.l.b16 %v445
    %v1473 = vunpack.c.h.b16 %v445
    %v1474 = vunpack.c.l.b16 %v446
    %v1475 = vunpack.c.h.b16 %v446
    %v1476 = vunpack.c.l.b16 %v447
    %v1477 = vunpack.c.h.b16 %v447
    %v1478 = vunpack.c.l.b16 %v448
    %v1479 = vunpack.c.h.b16 %v448
    %v1480 = vunpack.c.l.b16 %v449
    %v1481 = vunpack.c.h.b16 %v449
    %v1482 = vunpack.c.l.b16 %v450
    %v1483 = vunpack.c.h.b16 %v450
    %v1484 = vunpack.c.l.b16 %v451
    %v1485 = vunpack.c.h.b16 %v451
    %v1486 = vunpack.c.l.b16 %v452
    %v1487 = vunpack.c.h.b16 %v452
    %v1488 = vunpack.c.l.b16 %v453
    %v1489 = vunpack.c.h.b16 %v453
    %v1490 = vunpack.c.l.b16 %v454
    %v1491 = vunpack.c.h.b16 %v454
    %v1492 = vunpack.c.l.b16 %v455
    %v1493 = vunpack.c.h.b16 %v455
    %v1494 = vunpack.c.l.b16 %v456
    %v1495 = vunpack.c.h.b16 %v456
    %v1496 = vunpack.c.l.b16 %v457
    %v1497 = vunpack.c.h.b16 %v457
    %v1498 = vunpack.c.l.b16 %v458
    %v1499 = vunpack.c.h.b16 %v458
    %v1500 = vunpack.c.l.b16 %v459
    %v1501 = vunpack.c.h.b16 %v459
    %v1502 = vunpack.c.l.b16 %v460
    %v1503 = vunpack.c.h.b16 %v460
    %v1504 = vunpack.c.l.b16 %v461
    %v1505 = vunpack.c.h.b16 %v461
    %v1506 = vunpack.c.l.b16 %v462
    %v1507 = vunpack.c.h.b16 %v462
    %v1508 = vunpack.c.l.b16 %v463
    %v1509 = vunpack.c.h.b16 %v463
    %v1510 = vunpack.c.l.b16 %v464
    %v1511 = vunpack.c.h.b16 %v464
    %v1512 = vunpack.c.l.b16 %v465
    %v1513 = vunpack.c.h.b16 %v465
    %v1514 = vunpack.c.l.b16 %v466
    %v1515 = vunpack.c.h.b16 %v466
    %v1516 = vunpack.c.l.b16 %v467
    %v1517 = vunpack.c.h.b16 %v467
    %v1518 = vunpack.c.l.b16 %v468
    %v1519 = vunpack.c.h.b16 %v468
    %v1520 = vunpack.c.l.b16 %v469
    %v1521 = vunpack.c.h.b16 %v469
    %v1522 = vunpack.c.l.b16 %v470
    %v1523 = vunpack.c.h.b16 %v470
    %v1524 = vunpack.c.l.b16 %v471
    %v1525 = vunpack.c.h.b16 %v471
    %v1526 = vunpack.c.l.b16 %v472
    %v1527 = vunpack.c.h.b16 %v472
    %v1528 = vunpack.c.l.b16 %v473
    %v1529 = vunpack.c.h.b16 %v473
    %v1530 = vunpack.c.l.b16 %v474
    %v1531 = vunpack.c.h.b16 %v474
    %v1532 = vunpack.c.l.b16 %v475
    %v1533 = vunpack.c.h.b16 %v475
    %v1534 = vunpack.c.l.b16 %v476
    %v1535 = vunpack.c.h.b16 %v476
    %v1536 = vunpack.c.l.b16 %v477
    %v1537 = vunpack.c.h.b16 %v477
    %v1538 = vunpack.c.l.b16 %v478
    %v1539 = vunpack.c.h.b16 %v478
    %v1540 = vunpack.c.l.b16 %v479
    %v1541 = vunpack.c.h.b16 %v479
    %v1542 = vunpack.c.l.b16 %v480
    %v1543 = vunpack.c.h.b16 %v480
    %v1544 = vunpack.c.l.b16 %v481
    %v1545 = vunpack.c.h.b16 %v481
    %v1546 = vunpack.c.l.b16 %v482
    %v1547 = vunpack.c.h.b16 %v482
    %v1548 = vunpack.c.l.b16 %v483
    %v1549 = vunpack.c.h.b16 %v483
    %v1550 = vunpack.c.l.b16 %v484
    %v1551 = vunpack.c.h.b16 %v484
    %v1552 = vunpack.c.l.b16 %v485
    %v1553 = vunpack.c.h.b16 %v485
    %v1554 = vunpack.c.l.b16 %v486
    %v1555 = vunpack.c.h.b16 %v486
    %v1556 = vunpack.c.l.b16 %v487
    %v1557 = vunpack.c.h.b16 %v487
    %v1558 = vunpack.c.l.b16 %v488
    %v1559 = vunpack.c.h.b16 %v488
    %v1560 = vunpack.c.l.b16 %v489
    %v1561 = vunpack.c.h.b16 %v489
    %v1562 = vunpack.c.l.b16 %v490
    %v1563 = vunpack.c.h.b16 %v490
    %v1564 = vunpack.c.l.b16 %v491
    %v1565 = vunpack.c.h.b16 %v491
    %v1566 = vunpack.c.l.b16 %v492
    %v1567 = vunpack.c.h.b16 %v492
    %v1568 = vunpack.c.l.b16 %v493
    %v1569 = vunpack.c.h.b16 %v493
    %v1570 = vunpack.c.l.b16 %v494
    %v1571 = vunpack.c.h.b16 %v494
    %v1572 = vunpack.c.l.b16 %v495
    %v1573 = vunpack.c.h.b16 %v495
    %v1574 = vunpack.c.l.b16 %v496
    %v1575 = vunpack.c.h.b16 %v496
    %v1576 = vunpack.c.l.b16 %v497
    %v1577 = vunpack.c.h.b16 %v497
    %v1578 = vunpack.c.l.b16 %v498
    %v1579 = vunpack.c.h.b16 %v498
    %v1580 = vunpack.c.l.b16 %v499
    %v1581 = vunpack.c.h.b16 %v499
    %v1582 = vunpack.c.l.b16 %v500
    %v1583 = vunpack.c.h.b16 %v500
    %v1584 = vunpack.c.l.b16 %v501
    %v1585 = vunpack.c.h.b16 %v501
    %v1586 = vunpack.c.l.b16 %v502
    %v1587 = vunpack.c.h.b16 %v502
    %v1588 = vunpack.c.l.b16 %v503
    %v1589 = vunpack.c.h.b16 %v503
    %v1590 = vunpack.c.l.b16 %v504
    %v1591 = vunpack.c.h.b16 %v504
    %v1592 = vunpack.c.l.b16 %v505
    %v1593 = vunpack.c.h.b16 %v505
    %v1594 = vunpack.c.l.b16 %v506
    %v1595 = vunpack.c.h.b16 %v506
    %v1596 = vunpack.c.l.b16 %v507
    %v1597 = vunpack.c.h.b16 %v507
    %v1598 = vunpack.c.l.b16 %v508
    %v1599 = vunpack.c.h.b16 %v508
    %v1600 = vunpack.c.l.b16 %v509
    %v1601 = vunpack.c.h.b16 %v509
    %v1602 = vunpack.c.l.b16 %v510
    %v1603 = vunpack.c.h.b16 %v510
    %v1604 = vunpack.c.l.b16 %v511
    %v1605 = vunpack.c.h.b16 %v511
    %v1606 = vunpack.c.l.b16 %v512
    %v1607 = vunpack.c.h.b16 %v512
    %v1608 = vunpack.c.l.b16 %v513
    %v1609 = vunpack.c.h.b16 %v513
    %v1610 = vunpack.c.l.b16 %v514
    %v1611 = vunpack.c.h.b16 %v514
    %v1612 = vunpack.c.l.b16 %v515
    %v1613 = vunpack.c.h.b16 %v515
    %v1614 = vunpack.c.l.b16 %v516
    %v1615 = vunpack.c.h.b16 %v516
    %v1616 = vunpack.c.l.b16 %v517
    %v1617 = vunpack.c.h.b16 %v517
    %v1618 = vunpack.c.l.b16 %v518
    %v1619 = vunpack.c.h.b16 %v518
    %v1620 = vunpack.c.l.b16 %v519
    %v1621 = vunpack.c.h.b16 %v519
    %v1622 = vunpack.c.l.b16 %v520
    %v1623 = vunpack.c.h.b16 %v520
    %v1624 = vunpack.c.l.b16 %v521
    %v1625 = vunpack.c.h.b16 %v521
    %v1626 = vunpack.c.l.b16 %v522
    %v1627 = vunpack.c.h.b16 %v522
    %v1628 = vunpack.c.l.b16 %v523
    %v1629 = vunpack.c.h.b16 %v523
    %v1630 = vunpack.c.l.b16 %v524
    %v1631 = vunpack.c.h.b16 %v524
    %v1632 = vunpack.c.l.b16 %v525
    %v1633 = vunpack.c.h.b16 %v525
    %v1634 = vunpack.c.l.b16 %v526
    %v1635 = vunpack.c.h.b16 %v526
    %v1636 = vunpack.c.l.b16 %v527
    %v1637 = vunpack.c.h.b16 %v527
    %v1638 = vunpack.c.l.b16 %v528
    %v1639 = vunpack.c.h.b16 %v528
    %v1640 = vunpack.c.l.b16 %v529
    %v1641 = vunpack.c.h.b16 %v529
    %v1642 = vunpack.c.l.b16 %v530
    %v1643 = vunpack.c.h.b16 %v530
    %v1644 = vunpack.c.l.b16 %v531
    %v1645 = vunpack.c.h.b16 %v531
    %v1646 = vunpack.c.l.b16 %v532
    %v1647 = vunpack.c.h.b16 %v532
    %v1648 = vunpack.c.l.b16 %v533
    %v1649 = vunpack.c.h.b16 %v533
    %v1650 = vunpack.c.l.b16 %v534
    %v1651 = vunpack.c.h.b16 %v534
    %v1652 = vunpack.c.l.b16 %v535
    %v1653 = vunpack.c.h.b16 %v535
    %v1654 = vunpack.c.l.b16 %v536
    %v1655 = vunpack.c.h.b16 %v536
    %v1656 = vunpack.c.l.b16 %v537
    %v1657 = vunpack.c.h.b16 %v537
    %v1658 = vunpack.c.l.b16 %v538
    %v1659 = vunpack.c.h.b16 %v538
    %v1660 = vunpack.c.l.b16 %v539
    %v1661 = vunpack.c.h.b16 %v539
    %v1662 = vunpack.c.l.b16 %v540
    %v1663 = vunpack.c.h.b16 %v540
    %v1664 = vunpack.c.l.b16 %v541
    %v1665 = vunpack.c.h.b16 %v541
    %v1666 = vunpack.c.l.b16 %v542
    %v1667 = vunpack.c.h.b16 %v542
    %v1668 = vunpack.c.l.b16 %v543
    %v1669 = vunpack.c.h.b16 %v543
    %v1670 = vunpack.c.l.b16 %v544
    %v1671 = vunpack.c.h.b16 %v544
    %v1672 = vunpack.c.l.b16 %v545
    %v1673 = vunpack.c.h.b16 %v545
    %v1674 = vunpack.c.l.b16 %v546
    %v1675 = vunpack.c.h.b16 %v546
    %v1676 = vunpack.c.l.b16 %v547
    %v1677 = vunpack.c.h.b16 %v547
    %v1678 = vunpack.c.l.b16 %v548
    %v1679 = vunpack.c.h.b16 %v548
    %v1680 = vunpack.c.l.b16 %v549
    %v1681 = vunpack.c.h.b16 %v549
    %v1682 = vunpack.c.l.b16 %v550
    %v1683 = vunpack.c.h.b16 %v550
    %v1684 = vunpack.c.l.b16 %v551
    %v1685 = vunpack.c.h.b16 %v551
    %v1686 = vunpack.c.l.b16 %v552
    %v1687 = vunpack.c.h.b16 %v552
    %v1688 = vunpack.c.l.b16 %v553
    %v1689 = vunpack.c.h.b16 %v553
    %v1690 = vunpack.c.l.b16 %v554
    %v1691 = vunpack.c.h.b16 %v554
    %v1692 = vunpack.c.l.b16 %v555
    %v1693 = vunpack.c.h.b16 %v555
    %v1694 = vunpack.c.l.b16 %v556
    %v1695 = vunpack.c.h.b16 %v556
    %v1696 = vunpack.c.l.b16 %v557
    %v1697 = vunpack.c.h.b16 %v557
    %v1698 = vunpack.c.l.b16 %v558
    %v1699 = vunpack.c.h.b16 %v558
    %v1700 = vunpack.c.l.b16 %v559
    %v1701 = vunpack.c.h.b16 %v559
    %v1702 = vunpack.c.l.b16 %v560
    %v1703 = vunpack.c.h.b16 %v560
    %v1704 = vunpack.c.l.b16 %v561
    %v1705 = vunpack.c.h.b16 %v561
    %v1706 = vunpack.c.l.b16 %v562
    %v1707 = vunpack.c.h.b16 %v562
    %v1708 = vunpack.c.l.b16 %v563
    %v1709 = vunpack.c.h.b16 %v563
    %v1710 = vunpack.c.l.b16 %v564
    %v1711 = vunpack.c.h.b16 %v564
    %v1712 = vunpack.c.l.b16 %v565
    %v1713 = vunpack.c.h.b16 %v565
    %v1714 = vunpack.c.l.b16 %v566
    %v1715 = vunpack.c.h.b16 %v566
    %v1716 = vunpack.c.l.b16 %v567
    %v1717 = vunpack.c.h.b16 %v567
    %v1718 = vunpack.c.l.b16 %v568
    %v1719 = vunpack.c.h.b16 %v568
    %v1720 = vunpack.c.l.b16 %v569
    %v1721 = vunpack.c.h.b16 %v569
    %v1722 = vunpack.c.l.b16 %v570
    %v1723 = vunpack.c.h.b16 %v570
    %v1724 = vunpack.c.l.b16 %v571
    %v1725 = vunpack.c.h.b16 %v571
    %v1726 = vunpack.c.l.b16 %v572
    %v1727 = vunpack.c.h.b16 %v572
    %v1728 = vunpack.c.l.b16 %v573
    %v1729 = vunpack.c.h.b16 %v573
    %v1730 = vunpack.c.l.b16 %v574
    %v1731 = vunpack.c.h.b16 %v574
    %v1732 = vunpack.c.l.b16 %v575
    %v1733 = vunpack.c.h.b16 %v575
    %v1734 = vunpack.c.l.b16 %v576
    %v1735 = vunpack.c.h.b16 %v576
    %v1736 = vunpack.c.l.b16 %v577
    %v1737 = vunpack.c.h.b16 %v577
    %v1738 = vunpack.c.l.b16 %v578
    %v1739 = vunpack.c.h.b16 %v578
    %v1740 = vunpack.c.l.b16 %v579
    %v1741 = vunpack.c.h.b16 %v579
    %v1742 = vunpack.c.l.b16 %v580
    %v1743 = vunpack.c.h.b16 %v580
    %v1744 = vunpack.c.l.b16 %v581
    %v1745 = vunpack.c.h.b16 %v581
    %v1746 = vunpack.c.l.b16 %v582
    %v1747 = vunpack.c.h.b16 %v582
    %v1748 = vunpack.c.l.b16 %v583
    %v1749 = vunpack.c.h.b16 %v583
    %v1750 = vunpack.c.l.b16 %v584
    %v1751 = vunpack.c.h.b16 %v584
    %v1752 = vunpack.c.l.b16 %v585
    %v1753 = vunpack.c.h.b16 %v585
    %v1754 = vunpack.c.l.b16 %v586
    %v1755 = vunpack.c.h.b16 %v586
    %v1756 = vunpack.c.l.b16 %v587
    %v1757 = vunpack.c.h.b16 %v587
    %v1758 = vunpack.c.l.b16 %v588
    %v1759 = vunpack.c.h.b16 %v588
    %v1760 = vunpack.c.l.b16 %v589
    %v1761 = vunpack.c.h.b16 %v589
    %v1762 = vunpack.c.l.b16 %v590
    %v1763 = vunpack.c.h.b16 %v590
    %v1764 = vunpack.c.l.b16 %v591
    %v1765 = vunpack.c.h.b16 %v591
    %v1766 = vunpack.c.l.b16 %v592
    %v1767 = vunpack.c.h.b16 %v592
    %v1768 = vunpack.c.l.b16 %v593
    %v1769 = vunpack.c.h.b16 %v593
    %v1770 = vunpack.c.l.b16 %v594
    %v1771 = vunpack.c.h.b16 %v594
    %v1772 = vunpack.c.l.b16 %v595
    %v1773 = vunpack.c.h.b16 %v595
    %v1774 = vunpack.c.l.b16 %v596
    %v1775 = vunpack.c.h.b16 %v596
    %v1776 = vunpack.c.l.b16 %v597
    %v1777 = vunpack.c.h.b16 %v597
    %v1778 = vunpack.c.l.b16 %v598
    %v1779 = vunpack.c.h.b16 %v598
    %v1780 = vunpack.c.l.b16 %v599
    %v1781 = vunpack.c.h.b16 %v599
    %v1782 = vunpack.c.l.b16 %v600
    %v1783 = vunpack.c.h.b16 %v600
    %v1784 = vunpack.c.l.b16 %v601
    %v1785 = vunpack.c.h.b16 %v601
    %v1786 = vunpack.c.l.b16 %v602
    %v1787 = vunpack.c.h.b16 %v602
    %v1788 = vunpack.c.l.b16 %v603
    %v1789 = vunpack.c.h.b16 %v603
    %v1790 = vunpack.c.l.b16 %v604
    %v1791 = vunpack.c.h.b16 %v604
    %v1792 = vunpack.c.l.b16 %v605
    %v1793 = vunpack.c.h.b16 %v605
    %v1794 = vunpack.c.l.b16 %v606
    %v1795 = vunpack.c.h.b16 %v606
    %v1796 = vunpack.c.l.b16 %v607
    %v1797 = vunpack.c.h.b16 %v607
    %v1798 = vunpack.c.l.b16 %v608
    %v1799 = vunpack.c.h.b16 %v608
    %v1800 = vunpack.c.l.b16 %v609
    %v1801 = vunpack.c.h.b16 %v609
    %v1802 = vunpack.c.l.b16 %v610
    %v1803 = vunpack.c.h.b16 %v610
    %v1804 = vunpack.c.l.b16 %v611
    %v1805 = vunpack.c.h.b16 %v611
    %v1806 = vunpack.c.l.b16 %v612
    %v1807 = vunpack.c.h.b16 %v612
    %v1808 = vunpack.c.l.b16 %v613
    %v1809 = vunpack.c.h.b16 %v613
    %v1810 = vunpack.c.l.b16 %v614
    %v1811 = vunpack.c.h.b16 %v614
    %v1812 = vunpack.c.l.b16 %v615
    %v1813 = vunpack.c.h.b16 %v615
    %v1814 = vunpack.c.l.b16 %v616
    %v1815 = vunpack.c.h.b16 %v616
    %v1816 = vunpack.c.l.b16 %v617
    %v1817 = vunpack.c.h.b16 %v617
    %v1818 = vunpack.c.l.b16 %v618
    %v1819 = vunpack.c.h.b16 %v618
    %v1820 = vunpack.c.l.b16 %v619
    %v1821 = vunpack.c.h.b16 %v619
    %v1822 = vunpack.c.l.b16 %v620
    %v1823 = vunpack.c.h.b16 %v620
    %v1824 = vunpack.c.l.b16 %v621
    %v1825 = vunpack.c.h.b16 %v621
    %v1826 = vunpack.c.l.b16 %v622
    %v1827 = vunpack.c.h.b16 %v622
    %v1828 = vunpack.c.l.b16 %v623
    %v1829 = vunpack.c.h.b16 %v623
    %v1830 = vunpack.c.l.b16 %v624
    %v1831 = vunpack.c.h.b16 %v624
    %v1832 = vunpack.c.l.b16 %v625
    %v1833 = vunpack.c.h.b16 %v625
    %v1834 = vunpack.c.l.b16 %v626
    %v1835 = vunpack.c.h.b16 %v626
    %v1836 = vunpack.c.l.b16 %v627
    %v1837 = vunpack.c.h.b16 %v627
    %v1838 = vunpack.c.l.b16 %v628
    %v1839 = vunpack.c.h.b16 %v628
    %v1840 = vunpack.c.l.b16 %v629
    %v1841 = vunpack.c.h.b16 %v629
    %v1842 = vunpack.c.l.b16 %v630
    %v1843 = vunpack.c.h.b16 %v630
    %v1844 = vunpack.c.l.b16 %v631
    %v1845 = vunpack.c.h.b16 %v631
    %v1846 = vunpack.c.l.b16 %v632
    %v1847 = vunpack.c.h.b16 %v632
    %v1848 = vunpack.c.l.b16 %v633
    %v1849 = vunpack.c.h.b16 %v633
    %v1850 = vunpack.c.l.b16 %v634
    %v1851 = vunpack.c.h.b16 %v634
    %v1852 = vunpack.c.l.b16 %v635
    %v1853 = vunpack.c.h.b16 %v635
    %v1854 = vunpack.c.l.b16 %v636
    %v1855 = vunpack.c.h.b16 %v636
    %v1856 = vunpack.c.l.b16 %v637
    %v1857 = vunpack.c.h.b16 %v637
    %v1858 = vunpack.c.l.b16 %v638
    %v1859 = vunpack.c.h.b16 %v638
    %v1860 = vunpack.c.l.b16 %v639
    %v1861 = vunpack.c.h.b16 %v639
    %v1862 = vunpack.c.l.b16 %v640
    %v1863 = vunpack.c.h.b16 %v640
    %v1864 = vunpack.c.l.b16 %v641
    %v1865 = vunpack.c.h.b16 %v641
    %v1866 = vunpack.c.l.b16 %v642
    %v1867 = vunpack.c.h.b16 %v642
    %v1868 = vunpack.c.l.b16 %v643
    %v1869 = vunpack.c.h.b16 %v643
    %v1870 = vunpack.c.l.b16 %v644
    %v1871 = vunpack.c.h.b16 %v644
    %v1872 = vunpack.c.l.b16 %v645
    %v1873 = vunpack.c.h.b16 %v645
    %v1874 = vunpack.c.l.b16 %v646
    %v1875 = vunpack.c.h.b16 %v646
    %v1876 = vunpack.c.l.b16 %v647
    %v1877 = vunpack.c.h.b16 %v647
    %v1878 = vunpack.c.l.b16 %v648
    %v1879 = vunpack.c.h.b16 %v648
    %v1880 = vunpack.c.l.b16 %v649
    %v1881 = vunpack.c.h.b16 %v649
    %v1882 = vunpack.c.l.b16 %v650
    %v1883 = vunpack.c.h.b16 %v650
    %v1884 = vunpack.c.l.b16 %v651
    %v1885 = vunpack.c.h.b16 %v651
    %v1886 = vunpack.c.l.b16 %v652
    %v1887 = vunpack.c.h.b16 %v652
    %v1888 = vunpack.c.l.b16 %v653
    %v1889 = vunpack.c.h.b16 %v653
    %v1890 = vunpack.c.l.b16 %v654
    %v1891 = vunpack.c.h.b16 %v654
    %v1892 = vunpack.c.l.b16 %v655
    %v1893 = vunpack.c.h.b16 %v655
    %v1894 = vunpack.c.l.b16 %v656
    %v1895 = vunpack.c.h.b16 %v656
    %v1896 = vunpack.c.l.b16 %v657
    %v1897 = vunpack.c.h.b16 %v657
    %v1898 = vunpack.c.l.b16 %v658
    %v1899 = vunpack.c.h.b16 %v658
    %v1900 = vunpack.c.l.b16 %v659
    %v1901 = vunpack.c.h.b16 %v659
    %v1902 = vunpack.c.l.b16 %v660
    %v1903 = vunpack.c.h.b16 %v660
    %v1904 = vunpack.c.l.b16 %v661
    %v1905 = vunpack.c.h.b16 %v661
    %v1906 = vunpack.c.l.b16 %v662
    %v1907 = vunpack.c.h.b16 %v662
    %v1908 = vunpack.c.l.b16 %v663
    %v1909 = vunpack.c.h.b16 %v663
    %v1910 = vunpack.c.l.b16 %v664
    %v1911 = vunpack.c.h.b16 %v664
    %v1912 = vunpack.c.l.b16 %v665
    %v1913 = vunpack.c.h.b16 %v665
    %v1914 = vunpack.c.l.b16 %v666
    %v1915 = vunpack.c.h.b16 %v666
    %v1916 = vunpack.c.l.b16 %v667
    %v1917 = vunpack.c.h.b16 %v667
    %v1918 = vunpack.c.l.b16 %v668
    %v1919 = vunpack.c.h.b16 %v668
    %v1920 = vunpack.c.l.b16 %v669
    %v1921 = vunpack.c.h.b16 %v669
    %v1922 = vunpack.c.l.b16 %v670
    %v1923 = vunpack.c.h.b16 %v670
    %v1924 = vunpack.c.l.b16 %v671
    %v1925 = vunpack.c.h.b16 %v671
    %v1926 = vunpack.c.l.b16 %v672
    %v1927 = vunpack.c.h.b16 %v672
    %v1928 = vunpack.c.l.b16 %v673
    %v1929 = vunpack.c.h.b16 %v673
    %v1930 = vunpack.c.l.b16 %v674
    %v1931 = vunpack.c.h.b16 %v674
    %v1932 = vunpack.c.l.b16 %v675
    %v1933 = vunpack.c.h.b16 %v675
    %v1934 = vunpack.c.l.b16 %v676
    %v1935 = vunpack.c.h.b16 %v676
    %v1936 = vunpack.c.l.b16 %v677
    %v1937 = vunpack.c.h.b16 %v677
    %v1938 = vunpack.c.l.b16 %v678
    %v1939 = vunpack.c.h.b16 %v678
    %v1940 = vunpack.c.l.b16 %v679
    %v1941 = vunpack.c.h.b16 %v679
    %v1942 = vunpack.c.l.b16 %v680
    %v1943 = vunpack.c.h.b16 %v680
    %v1944 = vunpack.c.l.b16 %v681
    %v1945 = vunpack.c.h.b16 %v681
    %v1946 = vunpack.c.l.b16 %v682
    %v1947 = vunpack.c.h.b16 %v682
    %v1948 = vunpack.c.l.b16 %v683
    %v1949 = vunpack.c.h.b16 %v683
    %v1950 = vunpack.c.l.b16 %v684
    %v1951 = vunpack.c.h.b16 %v684
    %v1952 = vunpack.c.l.b16 %v685
    %v1953 = vunpack.c.h.b16 %v685
    %v1954 = vunpack.c.l.b16 %v686
    %v1955 = vunpack.c.h.b16 %v686
    %v1956 = vunpack.c.l.b16 %v687
    %v1957 = vunpack.c.h.b16 %v687
    %v1958 = vunpack.c.l.b16 %v688
    %v1959 = vunpack.c.h.b16 %v688
    %v1960 = vunpack.c.l.b16 %v689
    %v1961 = vunpack.c.h.b16 %v689
    %v1962 = vunpack.c.l.b16 %v690
    %v1963 = vunpack.c.h.b16 %v690
    %v1964 = vunpack.c.l.b16 %v691
    %v1965 = vunpack.c.h.b16 %v691
    %v1966 = vunpack.c.l.b16 %v692
    %v1967 = vunpack.c.h.b16 %v692
    %v1968 = vunpack.c.l.b16 %v693
    %v1969 = vunpack.c.h.b16 %v693
    %v1970 = vunpack.c.l.b16 %v694
    %v1971 = vunpack.c.h.b16 %v694
    %v1972 = vunpack.c.l.b16 %v695
    %v1973 = vunpack.c.h.b16 %v695
    %v1974 = vunpack.c.l.b16 %v696
    %v1975 = vunpack.c.h.b16 %v696
    %v1976 = vunpack.c.l.b16 %v697
    %v1977 = vunpack.c.h.b16 %v697
    %v1978 = vunpack.c.l.b16 %v698
    %v1979 = vunpack.c.h.b16 %v698
    %v1980 = vunpack.c.l.b16 %v699
    %v1981 = vunpack.c.h.b16 %v699
    %v1982 = vunpack.c.l.b16 %v700
    %v1983 = vunpack.c.h.b16 %v700
    %v1984 = vunpack.c.l.b16 %v701
    %v1985 = vunpack.c.h.b16 %v701
    %v1986 = vunpack.c.l.b16 %v702
    %v1987 = vunpack.c.h.b16 %v702
    %v1988 = vunpack.c.l.b16 %v703
    %v1989 = vunpack.c.h.b16 %v703
    %v1990 = vunpack.c.l.b16 %v704
    %v1991 = vunpack.c.h.b16 %v704
    %v1992 = vunpack.c.l.b16 %v705
    %v1993 = vunpack.c.h.b16 %v705
    %v1994 = vunpack.c.l.b16 %v706
    %v1995 = vunpack.c.h.b16 %v706
    %v1996 = vunpack.c.l.b16 %v707
    %v1997 = vunpack.c.h.b16 %v707
    %v1998 = vunpack.c.l.b16 %v708
    %v1999 = vunpack.c.h.b16 %v708
    %v2000 = vunpack.c.l.b16 %v709
    %v2001 = vunpack.c.h.b16 %v709
    %v2002 = vunpack.c.l.b16 %v710
    %v2003 = vunpack.c.h.b16 %v710
    %v2004 = vunpack.c.l.b16 %v711
    %v2005 = vunpack.c.h.b16 %v711
    %v2006 = vunpack.c.l.b16 %v712
    %v2007 = vunpack.c.h.b16 %v712
    %v2008 = vunpack.c.l.b16 %v713
    %v2009 = vunpack.c.h.b16 %v713
    %v2010 = vunpack.c.l.b16 %v714
    %v2011 = vunpack.c.h.b16 %v714
    %v2012 = vunpack.c.l.b16 %v715
    %v2013 = vunpack.c.h.b16 %v715
    %v2014 = vunpack.c.l.b16 %v716
    %v2015 = vunpack.c.h.b16 %v716
    %v2016 = vunpack.c.l.b16 %v717
    %v2017 = vunpack.c.h.b16 %v717
    %v2018 = vunpack.c.l.b16 %v718
    %v2019 = vunpack.c.h.b16 %v718
    %v2020 = vunpack.c.l.b16 %v719
    %v2021 = vunpack.c.h.b16 %v719
    %v2022 = vunpack.c.l.b16 %v720
    %v2023 = vunpack.c.h.b16 %v720
    %v2024 = vunpack.c.l.b16 %v721
    %v2025 = vunpack.c.h.b16 %v721
    %v2026 = vunpack.c.l.b16 %v722
    %v2027 = vunpack.c.h.b16 %v722
    %v2028 = vunpack.c.l.b16 %v723
    %v2029 = vunpack.c.h.b16 %v723
    %v2030 = vunpack.c.l.b16 %v724
    %v2031 = vunpack.c.h.b16 %v724
    %v2032 = vunpack.c.l.b16 %v725
    %v2033 = vunpack.c.h.b16 %v725
    %v2034 = vunpack.c.l.b16 %v726
    %v2035 = vunpack.c.h.b16 %v726
    %v2036 = vunpack.c.l.b16 %v727
    %v2037 = vunpack.c.h.b16 %v727
    %v2038 = vunpack.c.l.b16 %v728
    %v2039 = vunpack.c.h.b16 %v728
    %v2040 = vunpack.c.l.b16 %v729
    %v2041 = vunpack.c.h.b16 %v729
    %v2042 = vunpack.c.l.b16 %v730
    %v2043 = vunpack.c.h.b16 %v730
    %v2044 = vunpack.c.l.b16 %v731
    %v2045 = vunpack.c.h.b16 %v731
    %v2046 = vunpack.c.l.b16 %v732
    %v2047 = vunpack.c.h.b16 %v732
    %v2048 = vunpack.c.l.b16 %v733
    %v2049 = vunpack.c.h.b16 %v733
    %v2050 = vunpack.c.l.b16 %v734
    %v2051 = vunpack.c.h.b16 %v734
    %v2052 = vunpack.c.l.b16 %v735
    %v2053 = vunpack.c.h.b16 %v735
    %v2054 = vunpack.c.l.b16 %v736
    %v2055 = vunpack.c.h.b16 %v736
    %v2056 = vunpack.c.l.b16 %v737
    %v2057 = vunpack.c.h.b16 %v737
    %v2058 = vunpack.c.l.b16 %v738
    %v2059 = vunpack.c.h.b16 %v738
    %v2060 = vunpack.c.l.b16 %v739
    %v2061 = vunpack.c.h.b16 %v739
    %v2062 = vunpack.c.l.b16 %v740
    %v2063 = vunpack.c.h.b16 %v740
    %v2064 = vunpack.c.l.b16 %v741
    %v2065 = vunpack.c.h.b16 %v741
    %v2066 = vunpack.c.l.b16 %v742
    %v2067 = vunpack.c.h.b16 %v742
    %v2068 = vunpack.c.l.b16 %v743
    %v2069 = vunpack.c.h.b16 %v743
    %v2070 = vunpack.c.l.b16 %v744
    %v2071 = vunpack.c.h.b16 %v744
    %v2072 = vunpack.c.l.b16 %v745
    %v2073 = vunpack.c.h.b16 %v745
    %v2074 = vunpack.c.l.b16 %v746
    %v2075 = vunpack.c.h.b16 %v746
    %v2076 = vunpack.c.l.b16 %v747
    %v2077 = vunpack.c.h.b16 %v747
    %v2078 = vunpack.c.l.b16 %v748
    %v2079 = vunpack.c.h.b16 %v748
    %v2080 = vunpack.c.l.b16 %v749
    %v2081 = vunpack.c.h.b16 %v749
    %v2082 = vunpack.c.l.b16 %v750
    %v2083 = vunpack.c.h.b16 %v750
    %v2084 = vunpack.c.l.b16 %v751
    %v2085 = vunpack.c.h.b16 %v751
    %v2086 = vunpack.c.l.b16 %v752
    %v2087 = vunpack.c.h.b16 %v752
    %v2088 = vunpack.c.l.b16 %v753
    %v2089 = vunpack.c.h.b16 %v753
    %v2090 = vunpack.c.l.b16 %v754
    %v2091 = vunpack.c.h.b16 %v754
    %v2092 = vunpack.c.l.b16 %v755
    %v2093 = vunpack.c.h.b16 %v755
    %v2094 = vunpack.c.l.b16 %v756
    %v2095 = vunpack.c.h.b16 %v756
    %v2096 = vunpack.c.l.b16 %v757
    %v2097 = vunpack.c.h.b16 %v757
    %v2098 = vunpack.c.l.b16 %v758
    %v2099 = vunpack.c.h.b16 %v758
    %v2100 = vunpack.c.l.b16 %v759
    %v2101 = vunpack.c.h.b16 %v759
    %v2102 = vunpack.c.l.b16 %v760
    %v2103 = vunpack.c.h.b16 %v760
    %v2104 = vunpack.c.l.b16 %v761
    %v2105 = vunpack.c.h.b16 %v761
    %v2106 = vunpack.c.l.b16 %v762
    %v2107 = vunpack.c.h.b16 %v762
    %v2108 = vunpack.c.l.b16 %v763
    %v2109 = vunpack.c.h.b16 %v763
    %v2110 = vunpack.c.l.b16 %v764
    %v2111 = vunpack.c.h.b16 %v764
    %v2112 = vunpack.c.l.b16 %v765
    %v2113 = vunpack.c.h.b16 %v765
    %v2114 = vunpack.c.l.b16 %v766
    %v2115 = vunpack.c.h.b16 %v766
    %v2116 = vunpack.c.l.b16 %v767
    %v2117 = vunpack.c.h.b16 %v767
    %v2118 = vunpack.c.l.b16 %v768
    %v2119 = vunpack.c.h.b16 %v768
    %v2120 = vunpack.c.l.b16 %v769
    %v2121 = vunpack.c.h.b16 %v769
    %v2122 = vunpack.c.l.b16 %v770
    %v2123 = vunpack.c.h.b16 %v770
    %v2124 = vunpack.c.l.b16 %v771
    %v2125 = vunpack.c.h.b16 %v771
    %v2126 = vunpack.c.l.b16 %v772
    %v2127 = vunpack.c.h.b16 %v772
    %v2128 = vunpack.c.l.b16 %v773
    %v2129 = vunpack.c.h.b16 %v773
    %v2130 = vunpack.c.l.b16 %v774
    %v2131 = vunpack.c.h.b16 %v774
    %v2132 = vunpack.c.l.b16 %v775
    %v2133 = vunpack.c.h.b16 %v775
    %v2134 = vunpack.c.l.b16 %v776
    %v2135 = vunpack.c.h.b16 %v776
    %v2136 = vunpack.c.l.b16 %v777
    %v2137 = vunpack.c.h.b16 %v777
    %v2138 = vunpack.c.l.b16 %v778
    %v2139 = vunpack.c.h.b16 %v778
    %v2140 = vunpack.c.l.b16 %v779
    %v2141 = vunpack.c.h.b16 %v779
    %v2142 = vunpack.c.l.b16 %v780
    %v2143 = vunpack.c.h.b16 %v780
    %v2144 = vunpack.c.l.b16 %v781
    %v2145 = vunpack.c.h.b16 %v781
    %v2146 = vunpack.c.l.b16 %v782
    %v2147 = vunpack.c.h.b16 %v782
    %v2148 = vunpack.c.l.b16 %v783
    %v2149 = vunpack.c.h.b16 %v783
    %v2150 = vunpack.c.l.b16 %v784
    %v2151 = vunpack.c.h.b16 %v784
    %v2152 = vunpack.c.l.b16 %v785
    %v2153 = vunpack.c.h.b16 %v785
    %v2154 = vunpack.c.l.b16 %v786
    %v2155 = vunpack.c.h.b16 %v786
    %v2156 = vunpack.c.l.b16 %v787
    %v2157 = vunpack.c.h.b16 %v787
    %v2158 = vunpack.c.l.b16 %v788
    %v2159 = vunpack.c.h.b16 %v788
    %v2160 = vunpack.c.l.b16 %v789
    %v2161 = vunpack.c.h.b16 %v789
    %v2162 = vunpack.c.l.b16 %v790
    %v2163 = vunpack.c.h.b16 %v790
    %v2164 = vunpack.c.l.b16 %v791
    %v2165 = vunpack.c.h.b16 %v791
    %v2166 = vunpack.c.l.b16 %v792
    %v2167 = vunpack.c.h.b16 %v792
    %v2168 = vunpack.c.l.b16 %v793
    %v2169 = vunpack.c.h.b16 %v793
    %v2170 = vunpack.c.l.b16 %v794
    %v2171 = vunpack.c.h.b16 %v794
    %v2172 = vunpack.c.l.b16 %v795
    %v2173 = vunpack.c.h.b16 %v795
    %v2174 = vunpack.c.l.b16 %v796
    %v2175 = vunpack.c.h.b16 %v796
    %v2176 = vunpack.c.l.b16 %v797
    %v2177 = vunpack.c.h.b16 %v797
    %v2178 = vunpack.c.l.b16 %v798
    %v2179 = vunpack.c.h.b16 %v798
    %v2180 = vunpack.c.l.b16 %v799
    %v2181 = vunpack.c.h.b16 %v799
    %v2182 = vunpack.c.l.b16 %v800
    %v2183 = vunpack.c.h.b16 %v800
    %v2184 = vunpack.c.l.b16 %v801
    %v2185 = vunpack.c.h.b16 %v801
    %v2186 = vunpack.c.l.b16 %v802
    %v2187 = vunpack.c.h.b16 %v802
    %v2188 = vunpack.c.l.b16 %v803
    %v2189 = vunpack.c.h.b16 %v803
    %v2190 = vunpack.c.l.b16 %v804
    %v2191 = vunpack.c.h.b16 %v804
    %v2192 = vunpack.c.l.b16 %v805
    %v2193 = vunpack.c.h.b16 %v805
    %v2194 = vunpack.c.l.b16 %v806
    %v2195 = vunpack.c.h.b16 %v806
    %v2196 = vunpack.c.l.b16 %v807
    %v2197 = vunpack.c.h.b16 %v807
    %v2198 = vunpack.c.l.b16 %v808
    %v2199 = vunpack.c.h.b16 %v808
    %v2200 = vunpack.c.l.b16 %v809
    %v2201 = vunpack.c.h.b16 %v809
    %v2202 = vunpack.c.l.b16 %v810
    %v2203 = vunpack.c.h.b16 %v810
    %v2204 = vunpack.c.l.b16 %v811
    %v2205 = vunpack.c.h.b16 %v811
    %v2206 = vunpack.c.l.b16 %v812
    %v2207 = vunpack.c.h.b16 %v812
    %v2208 = vunpack.c.l.b16 %v813
    %v2209 = vunpack.c.h.b16 %v813
    %v2210 = vunpack.c.l.b16 %v814
    %v2211 = vunpack.c.h.b16 %v814
    %v2212 = vunpack.c.l.b16 %v815
    %v2213 = vunpack.c.h.b16 %v815
    %v2214 = vunpack.c.l.b16 %v816
    %v2215 = vunpack.c.h.b16 %v816
    %v2216 = vunpack.c.l.b16 %v817
    %v2217 = vunpack.c.h.b16 %v817
    %v2218 = vunpack.c.l.b16 %v818
    %v2219 = vunpack.c.h.b16 %v818
    %v2220 = vunpack.c.l.b16 %v819
    %v2221 = vunpack.c.h.b16 %v819
    %v2222 = vunpack.c.l.b16 %v820
    %v2223 = vunpack.c.h.b16 %v820
    %v2224 = vunpack.c.l.b16 %v821
    %v2225 = vunpack.c.h.b16 %v821
    %v2226 = vunpack.c.l.b16 %v822
    %v2227 = vunpack.c.h.b16 %v822
    %v2228 = vunpack.c.l.b16 %v823
    %v2229 = vunpack.c.h.b16 %v823
    %v2230 = vunpack.c.l.b16 %v824
    %v2231 = vunpack.c.h.b16 %v824
    %v2232 = vunpack.c.l.b16 %v825
    %v2233 = vunpack.c.h.b16 %v825
    %v2234 = vunpack.c.l.b16 %v826
    %v2235 = vunpack.c.h.b16 %v826
    %v2236 = vunpack.c.l.b16 %v827
    %v2237 = vunpack.c.h.b16 %v827
    %v2238 = vunpack.c.l.b16 %v828
    %v2239 = vunpack.c.h.b16 %v828
    %v2240 = vunpack.c.l.b16 %v829
    %v2241 = vunpack.c.h.b16 %v829
    %v2242 = vunpack.c.l.b16 %v830
    %v2243 = vunpack.c.h.b16 %v830
    %v2244 = vunpack.c.l.b16 %v831
    %v2245 = vunpack.c.h.b16 %v831
    %v2246 = vunpack.c.l.b16 %v832
    %v2247 = vunpack.c.h.b16 %v832
    %v2248 = vunpack.c.l.b16 %v833
    %v2249 = vunpack.c.h.b16 %v833
    %v2250 = vunpack.c.l.b16 %v834
    %v2251 = vunpack.c.h.b16 %v834
    %v2252 = vunpack.c.l.b16 %v835
    %v2253 = vunpack.c.h.b16 %v835
    %v2254 = vunpack.c.l.b16 %v836
    %v2255 = vunpack.c.h.b16 %v836
    %v2256 = vunpack.c.l.b16 %v837
    %v2257 = vunpack.c.h.b16 %v837
    %v2258 = vunpack.c.l.b16 %v838
    %v2259 = vunpack.c.h.b16 %v838
    %v2260 = vunpack.c.l.b16 %v839
    %v2261 = vunpack.c.h.b16 %v839
    %v2262 = vunpack.c.l.b16 %v840
    %v2263 = vunpack.c.h.b16 %v840
    %v2264 = vunpack.c.l.b16 %v841
    %v2265 = vunpack.c.h.b16 %v841
    %v2266 = vunpack.c.l.b16 %v842
    %v2267 = vunpack.c.h.b16 %v842
    %v2268 = vunpack.c.l.b16 %v843
    %v2269 = vunpack.c.h.b16 %v843
    %v2270 = vunpack.c.l.b16 %v844
    %v2271 = vunpack.c.h.b16 %v844
    %v2272 = vunpack.c.l.b16 %v845
    %v2273 = vunpack.c.h.b16 %v845
    %v2274 = vunpack.c.l.b16 %v846
    %v2275 = vunpack.c.h.b16 %v846
    %v2276 = vunpack.c.l.b16 %v847
    %v2277 = vunpack.c.h.b16 %v847
    %v2278 = vunpack.c.l.b16 %v848
    %v2279 = vunpack.c.h.b16 %v848
    %v2280 = vunpack.c.l.b16 %v849
    %v2281 = vunpack.c.h.b16 %v849
    %v2282 = vunpack.c.l.b16 %v850
    %v2283 = vunpack.c.h.b16 %v850
    %v2284 = vunpack.c.l.b16 %v851
    %v2285 = vunpack.c.h.b16 %v851
    %v2286 = vunpack.c.l.b16 %v852
    %v2287 = vunpack.c.h.b16 %v852
    %v2288 = vunpack.c.l.b16 %v853
    %v2289 = vunpack.c.h.b16 %v853
    %v2290 = vunpack.c.l.b16 %v854
    %v2291 = vunpack.c.h.b16 %v854
    %v2292 = vunpack.c.l.b16 %v855
    %v2293 = vunpack.c.h.b16 %v855
    %v2294 = vunpack.c.l.b16 %v856
    %v2295 = vunpack.c.h.b16 %v856
    %v2296 = vunpack.c.l.b16 %v857
    %v2297 = vunpack.c.h.b16 %v857
    %v2298 = vunpack.c.l.b16 %v858
    %v2299 = vunpack.c.h.b16 %v858
    %v2300 = vunpack.c.l.b16 %v859
    %v2301 = vunpack.c.h.b16 %v859
    %v2302 = vunpack.c.l.b16 %v860
    %v2303 = vunpack.c.h.b16 %v860
    %v2304 = vunpack.c.l.b16 %v861
    %v2305 = vunpack.c.h.b16 %v861
    %v2306 = vunpack.c.l.b16 %v862
    %v2307 = vunpack.c.h.b16 %v862
    %v2308 = vunpack.c.l.b16 %v863
    %v2309 = vunpack.c.h.b16 %v863
    %v2310 = vunpack.c.l.b16 %v864
    %v2311 = vunpack.c.h.b16 %v864
    %v2312 = vunpack.c.l.b16 %v865
    %v2313 = vunpack.c.h.b16 %v865
    %v2314 = vunpack.c.l.b16 %v866
    %v2315 = vunpack.c.h.b16 %v866
    %v2316 = vunpack.c.l.b16 %v867
    %v2317 = vunpack.c.h.b16 %v867
    %v2318 = vunpack.c.l.b16 %v868
    %v2319 = vunpack.c.h.b16 %v868
    %v2320 = vunpack.c.l.b16 %v869
    %v2321 = vunpack.c.h.b16 %v869
    %v2322 = vunpack.c.l.b16 %v870
    %v2323 = vunpack.c.h.b16 %v870
    %v2324 = vunpack.c.l.b16 %v871
    %v2325 = vunpack.c.h.b16 %v871
    %v2326 = vunpack.c.l.b16 %v872
    %v2327 = vunpack.c.h.b16 %v872
    %v2328 = vunpack.c.l.b16 %v873
    %v2329 = vunpack.c.h.b16 %v873
    %v2330 = vunpack.c.l.b16 %v874
    %v2331 = vunpack.c.h.b16 %v874
    %v2332 = vunpack.c.l.b16 %v875
    %v2333 = vunpack.c.h.b16 %v875
    %v2334 = vunpack.c.l.b16 %v876
    %v2335 = vunpack.c.h.b16 %v876
    %v2336 = vunpack.c.l.b16 %v877
    %v2337 = vunpack.c.h.b16 %v877
    %v2338 = vunpack.c.l.b16 %v878
    %v2339 = vunpack.c.h.b16 %v878
    %v2340 = vunpack.c.l.b16 %v879
    %v2341 = vunpack.c.h.b16 %v879
    %v2342 = vunpack.c.l.b16 %v880
    %v2343 = vunpack.c.h.b16 %v880
    %v2344 = vunpack.c.l.b16 %v881
    %v2345 = vunpack.c.h.b16 %v881
    %v2346 = vunpack.c.l.b16 %v882
    %v2347 = vunpack.c.h.b16 %v882
    %v2348 = vunpack.c.l.b16 %v883
    %v2349 = vunpack.c.h.b16 %v883
    %v2350 = vunpack.c.l.b16 %v884
    %v2351 = vunpack.c.h.b16 %v884
    %v2352 = vunpack.c.l.b16 %v885
    %v2353 = vunpack.c.h.b16 %v885
    %v2354 = vunpack.c.l.b16 %v886
    %v2355 = vunpack.c.h.b16 %v886
    %v2356 = vunpack.c.l.b16 %v887
    %v2357 = vunpack.c.h.b16 %v887
    %v2358 = vunpack.c.l.b16 %v888
    %v2359 = vunpack.c.h.b16 %v888
    %v2360 = vunpack.c.l.b16 %v889
    %v2361 = vunpack.c.h.b16 %v889
    %v2362 = vunpack.c.l.b16 %v890
    %v2363 = vunpack.c.h.b16 %v890
    %v2364 = vunpack.c.l.b16 %v891
    %v2365 = vunpack.c.h.b16 %v891
    %v2366 = vunpack.c.l.b16 %v892
    %v2367 = vunpack.c.h.b16 %v892
    %v2368 = vunpack.c.l.b16 %v893
    %v2369 = vunpack.c.h.b16 %v893
    %v2370 = vunpack.c.l.b16 %v894
    %v2371 = vunpack.c.h.b16 %v894
    %v2372 = vunpack.c.l.b16 %v895
    %v2373 = vunpack.c.h.b16 %v895
    %v2374 = vunpack.c.l.b16 %v896
    %v2375 = vunpack.c.h.b16 %v896
    %v2376 = vunpack.c.l.b16 %v897
    %v2377 = vunpack.c.h.b16 %v897
    %v2378 = vunpack.c.l.b16 %v898
    %v2379 = vunpack.c.h.b16 %v898
    %v2380 = vunpack.c.l.b16 %v899
    %v2381 = vunpack.c.h.b16 %v899
    %v2382 = vunpack.c.l.b16 %v900
    %v2383 = vunpack.c.h.b16 %v900
    %v2384 = vunpack.c.l.b16 %v901
    %v2385 = vunpack.c.h.b16 %v901
    %v2386 = vunpack.c.l.b16 %v902
    %v2387 = vunpack.c.h.b16 %v902
    %v2388 = vunpack.c.l.b16 %v903
    %v2389 = vunpack.c.h.b16 %v903
    %v2390 = vunpack.c.l.b16 %v904
    %v2391 = vunpack.c.h.b16 %v904
    %v2392 = vunpack.c.l.b16 %v905
    %v2393 = vunpack.c.h.b16 %v905
    %v2394 = vunpack.c.l.b16 %v906
    %v2395 = vunpack.c.h.b16 %v906
    %v2396 = vunpack.c.l.b16 %v907
    %v2397 = vunpack.c.h.b16 %v907
    %v2398 = vunpack.c.l.b16 %v908
    %v2399 = vunpack.c.h.b16 %v908
    %v2400 = vunpack.c.l.b16 %v909
    %v2401 = vunpack.c.h.b16 %v909
    %v2402 = vunpack.c.l.b16 %v910
    %v2403 = vunpack.c.h.b16 %v910
    %v2404 = vunpack.c.l.b16 %v911
    %v2405 = vunpack.c.h.b16 %v911
    %v2406 = vunpack.c.l.b16 %v912
    %v2407 = vunpack.c.h.b16 %v912
    %v2408 = vunpack.c.l.b16 %v913
    %v2409 = vunpack.c.h.b16 %v913
    %v2410 = vunpack.c.l.b16 %v914
    %v2411 = vunpack.c.h.b16 %v914
    %v2412 = vunpack.c.l.b16 %v915
    %v2413 = vunpack.c.h.b16 %v915
    %v2414 = vunpack.c.l.b16 %v916
    %v2415 = vunpack.c.h.b16 %v916
    %v2416 = vunpack.c.l.b16 %v917
    %v2417 = vunpack.c.h.b16 %v917
    %v2418 = vunpack.c.l.b16 %v918
    %v2419 = vunpack.c.h.b16 %v918
    %v2420 = vunpack.c.l.b16 %v919
    %v2421 = vunpack.c.h.b16 %v919
    %v2422 = vunpack.c.l.b16 %v920
    %v2423 = vunpack.c.h.b16 %v920
    %v2424 = vunpack.c.l.b16 %v921
    %v2425 = vunpack.c.h.b16 %v921
    %v2426 = vunpack.c.l.b16 %v922
    %v2427 = vunpack.c.h.b16 %v922
    %v2428 = vunpack.c.l.b16 %v923
    %v2429 = vunpack.c.h.b16 %v923
    %v2430 = vunpack.c.l.b16 %v924
    %v2431 = vunpack.c.h.b16 %v924
    %v2432 = vunpack.c.l.b16 %v925
    %v2433 = vunpack.c.h.b16 %v925
    %v2434 = vunpack.c.l.b16 %v926
    %v2435 = vunpack.c.h.b16 %v926
    %v2436 = vunpack.c.l.b16 %v927
    %v2437 = vunpack.c.h.b16 %v927
    %v2438 = vunpack.c.l.b16 %v928
    %v2439 = vunpack.c.h.b16 %v928
    %v2440 = vunpack.c.l.b16 %v929
    %v2441 = vunpack.c.h.b16 %v929
    %v2442 = vunpack.c.l.b16 %v930
    %v2443 = vunpack.c.h.b16 %v930
    %v2444 = vunpack.c.l.b16 %v931
    %v2445 = vunpack.c.h.b16 %v931
    %v2446 = vunpack.c.l.b16 %v932
    %v2447 = vunpack.c.h.b16 %v932
    %v2448 = vunpack.c.l.b16 %v933
    %v2449 = vunpack.c.h.b16 %v933
    %v2450 = vunpack.c.l.b16 %v934
    %v2451 = vunpack.c.h.b16 %v934
    %v2452 = vunpack.c.l.b16 %v935
    %v2453 = vunpack.c.h.b16 %v935
    %v2454 = vunpack.c.l.b16 %v936
    %v2455 = vunpack.c.h.b16 %v936
    %v2456 = vunpack.c.l.b16 %v937
    %v2457 = vunpack.c.h.b16 %v937
    %v2458 = vunpack.c.l.b16 %v938
    %v2459 = vunpack.c.h.b16 %v938
    %v2460 = vunpack.c.l.b16 %v939
    %v2461 = vunpack.c.h.b16 %v939
    %v2462 = vunpack.c.l.b16 %v940
    %v2463 = vunpack.c.h.b16 %v940
    %v2464 = vunpack.c.l.b16 %v941
    %v2465 = vunpack.c.h.b16 %v941
    %v2466 = vunpack.c.l.b16 %v942
    %v2467 = vunpack.c.h.b16 %v942
    %v2468 = vunpack.c.l.b16 %v943
    %v2469 = vunpack.c.h.b16 %v943
    %v2470 = vunpack.c.l.b16 %v944
    %v2471 = vunpack.c.h.b16 %v944
    %v2472 = vunpack.c.l.b16 %v945
    %v2473 = vunpack.c.h.b16 %v945
    %v2474 = vunpack.c.l.b16 %v946
    %v2475 = vunpack.c.h.b16 %v946
    %v2476 = vunpack.c.l.b16 %v947
    %v2477 = vunpack.c.h.b16 %v947
    %v2478 = vunpack.c.l.b16 %v948
    %v2479 = vunpack.c.h.b16 %v948
    %v2480 = vunpack.c.l.b16 %v949
    %v2481 = vunpack.c.h.b16 %v949
    %v2482 = vunpack.c.l.b16 %v950
    %v2483 = vunpack.c.h.b16 %v950
    %v2484 = vunpack.c.l.b16 %v951
    %v2485 = vunpack.c.h.b16 %v951
    %v2486 = vunpack.c.l.b16 %v952
    %v2487 = vunpack.c.h.b16 %v952
    %v2488 = vunpack.c.l.b16 %v953
    %v2489 = vunpack.c.h.b16 %v953
    %v2490 = vpack.c.b16 %v1482, %v1466
    %v2491 = vpack.c.b16 %v1483, %v1467
    %v2492 = vpack.c.b16 %v1484, %v1468
    %v2493 = vpack.c.b16 %v1485, %v1469
    %v2494 = vpack.c.b16 %v1486, %v1470
    %v2495 = vpack.c.b16 %v1487, %v1471
    %v2496 = vpack.c.b16 %v1488, %v1472
    %v2497 = vpack.c.b16 %v1489, %v1473
    %v2498 = vpack.c.b16 %v1490, %v1474
    %v2499 = vpack.c.b16 %v1491, %v1475
    %v2500 = vpack.c.b16 %v1492, %v1476
    %v2501 = vpack.c.b16 %v1493, %v1477
    %v2502 = vpack.c.b16 %v1494, %v1478
    %v2503 = vpack.c.b16 %v1495, %v1479
    %v2504 = vpack.c.b16 %v1496, %v1480
    %v2505 = vpack.c.b16 %v1497, %v1481
    %v2506 = vpack.c.b16 %v1514, %v1498
    %v2507 = vpack.c.b16 %v1515, %v1499
    %v2508 = vpack.c.b16 %v1516, %v1500
    %v2509 = vpack.c.b16 %v1517, %v1501
    %v2510 = vpack.c.b16 %v1518, %v1502
    %v2511 = vpack.c.b16 %v1519, %v1503
    %v2512 = vpack.c.b16 %v1520, %v1504
    %v2513 = vpack.c.b16 %v1521, %v1505
    %v2514 = vpack.c.b16 %v1522, %v1506
    %v2515 = vpack.c.b16 %v1523, %v1507
    %v2516 = vpack.c.b16 %v1524, %v1508
    %v2517 = vpack.c.b16 %v1525, %v1509
    %v2518 = vpack.c.b16 %v1526, %v1510
    %v2519 = vpack.c.b16 %v1527, %v1511
    %v2520 = vpack.c.b16 %v1528, %v1512
    %v2521 = vpack.c.b16 %v1529, %v1513
    %v2522 = vpack.c.b16 %v1546, %v1530
    %v2523 = vpack.c.b16 %v1547, %v1531
    %v2524 = vpack.c.b16 %v1548, %v1532
    %v2525 = vpack.c.b16 %v1549, %v1533
    %v2526 = vpack.c.b16 %v1550, %v1534
    %v2527 = vpack.c.b16 %v1551, %v1535
    %v2528 = vpack.c.b16 %v1552, %v1536
    %v2529 = vpack.c.b16 %v1553, %v1537
    %v2530 = vpack.c.b16 %v1554, %v1538
    %v2531 = vpack.c.b16 %v1555, %v1539
    %v2532 = vpack.c.b16 %v1556, %v1540
    %v2533 = vpack.c.b16 %v1557, %v1541
    %v2534 = vpack.c.b16 %v1558, %v1542
    %v2535 = vpack.c.b16 %v1559, %v1543
    %v2536 = vpack.c.b16 %v1560, %v1544
    %v2537 = vpack.c.b16 %v1561, %v1545
    %v2538 = vpack.c.b16 %v1578, %v1562
    %v2539 = vpack.c.b16 %v1579, %v1563
    %v2540 = vpack.c.b16 %v1580, %v1564
    %v2541 = vpack.c.b16 %v1581, %v1565
    %v2542 = vpack.c.b16 %v1582, %v1566
    %v2543 = vpack.c.b16 %v1583, %v1567
    %v2544 = vpack.c.b16 %v1584, %v1568
    %v2545 = vpack.c.b16 %v1585, %v1569
    %v2546 = vpack.c.b16 %v1586, %v1570
    %v2547 = vpack.c.b16 %v1587, %v1571
    %v2548 = vpack.c.b16 %v1588, %v1572
    %v2549 = vpack.c.b16 %v1589, %v1573
    %v2550 = vpack.c.b16 %v1590, %v1574
    %v2551 = vpack.c.b16 %v1591, %v1575
    %v2552 = vpack.c.b16 %v1592, %v1576
    %v2553 = vpack.c.b16 %v1593, %v1577
    %v2554 = vpack.c.b16 %v1610, %v1594
    %v2555 = vpack.c.b16 %v1611, %v1595
    %v2556 = vpack.c.b16 %v1612, %v1596
    %v2557 = vpack.c.b16 %v1613, %v1597
    %v2558 = vpack.c.b16 %v1614, %v1598
    %v2559 = vpack.c.b16 %v1615, %v1599
    %v2560 = vpack.c.b16 %v1616, %v1600
    %v2561 = vpack.c.b16 %v1617, %v1601
    %v2562 = vpack.c.b16 %v1618, %v1602
    %v2563 = vpack.c.b16 %v1619, %v1603
    %v2564 = vpack.c.b16 %v1620, %v1604
    %v2565 = vpack.c.b16 %v1621, %v1605
    %v2566 = vpack.c.b16 %v1622, %v1606
    %v2567 = vpack.c.b16 %v1623, %v1607
    %v2568 = vpack.c.b16 %v1624, %v1608
    %v2569 = vpack.c.b16 %v1625, %v1609
    %v2570 = vpack.c.b16 %v1642, %v1626
    %v2571 = vpack.c.b16 %v1643, %v1627
    %v2572 = vpack.c.b16 %v1644, %v1628
    %v2573 = vpack.c.b16 %v1645, %v1629
    %v2574 = vpack.c.b16 %v1646, %v1630
    %v2575 = vpack.c.b16 %v1647, %v1631
    %v2576 = vpack.c.b16 %v1648, %v1632
    %v2577 = vpack.c.b16 %v1649, %v1633
    %v2578 = vpack.c.b16 %v1650, %v1634
    %v2579 = vpack.c.b16 %v1651, %v1635
    %v2580 = vpack.c.b16 %v1652, %v1636
    %v2581 = vpack.c.b16 %v1653, %v1637
    %v2582 = vpack.c.b16 %v1654, %v1638
    %v2583 = vpack.c.b16 %v1655, %v1639
    %v2584 = vpack.c.b16 %v1656, %v1640
    %v2585 = vpack.c.b16 %v1657, %v1641
    %v2586 = vpack.c.b16 %v1674, %v1658
    %v2587 = vpack.c.b16 %v1675, %v1659
    %v2588 = vpack.c.b16 %v1676, %v1660
    %v2589 = vpack.c.b16 %v1677, %v1661
    %v2590 = vpack.c.b16 %v1678, %v1662
    %v2591 = vpack.c.b16 %v1679, %v1663
    %v2592 = vpack.c.b16 %v1680, %v1664
    %v2593 = vpack.c.b16 %v1681, %v1665
    %v2594 = vpack.c.b16 %v1682, %v1666
    %v2595 = vpack.c.b16 %v1683, %v1667
    %v2596 = vpack.c.b16 %v1684, %v1668
    %v2597 = vpack.c.b16 %v1685, %v1669
    %v2598 = vpack.c.b16 %v1686, %v1670
    %v2599 = vpack.c.b16 %v1687, %v1671
    %v2600 = vpack.c.b16 %v1688, %v1672
    %v2601 = vpack.c.b16 %v1689, %v1673
    %v2602 = vpack.c.b16 %v1706, %v1690
    %v2603 = vpack.c.b16 %v1707, %v1691
    %v2604 = vpack.c.b16 %v1708, %v1692
    %v2605 = vpack.c.b16 %v1709, %v1693
    %v2606 = vpack.c.b16 %v1710, %v1694
    %v2607 = vpack.c.b16 %v1711, %v1695
    %v2608 = vpack.c.b16 %v1712, %v1696
    %v2609 = vpack.c.b16 %v1713, %v1697
    %v2610 = vpack.c.b16 %v1714, %v1698
    %v2611 = vpack.c.b16 %v1715, %v1699
    %v2612 = vpack.c.b16 %v1716, %v1700
    %v2613 = vpack.c.b16 %v1717, %v1701
    %v2614 = vpack.c.b16 %v1718, %v1702
    %v2615 = vpack.c.b16 %v1719, %v1703
    %v2616 = vpack.c.b16 %v1720, %v1704
    %v2617 = vpack.c.b16 %v1721, %v1705
    %v2618 = vpack.c.b16 %v1738, %v1722
    %v2619 = vpack.c.b16 %v1739, %v1723
    %v2620 = vpack.c.b16 %v1740, %v1724
    %v2621 = vpack.c.b16 %v1741, %v1725
    %v2622 = vpack.c.b16 %v1742, %v1726
    %v2623 = vpack.c.b16 %v1743, %v1727
    %v2624 = vpack.c.b16 %v1744, %v1728
    %v2625 = vpack.c.b16 %v1745, %v1729
    %v2626 = vpack.c.b16 %v1746, %v1730
    %v2627 = vpack.c.b16 %v1747, %v1731
    %v2628 = vpack.c.b16 %v1748, %v1732
    %v2629 = vpack.c.b16 %v1749, %v1733
    %v2630 = vpack.c.b16 %v1750, %v1734
    %v2631 = vpack.c.b16 %v1751, %v1735
    %v2632 = vpack.c.b16 %v1752, %v1736
    %v2633 = vpack.c.b16 %v1753, %v1737
    %v2634 = vpack.c.b16 %v1770, %v1754
    %v2635 = vpack.c.b16 %v1771, %v1755
    %v2636 = vpack.c.b16 %v1772, %v1756
    %v2637 = vpack.c.b16 %v1773, %v1757
    %v2638 = vpack.c.b16 %v1774, %v1758
    %v2639 = vpack.c.b16 %v1775, %v1759
    %v2640 = vpack.c.b16 %v1776, %v1760
    %v2641 = vpack.c.b16 %v1777, %v1761
    %v2642 = vpack.c.b16 %v1778, %v1762
    %v2643 = vpack.c.b16 %v1779, %v1763
    %v2644 = vpack.c.b16 %v1780, %v1764
    %v2645 = vpack.c.b16 %v1781, %v1765
    %v2646 = vpack.c.b16 %v1782, %v1766
    %v2647 = vpack.c.b16 %v1783, %v1767
    %v2648 = vpack.c.b16 %v1784, %v1768
    %v2649 = vpack.c.b16 %v1785, %v1769
    %v2650 = vpack.c.b16 %v1802, %v1786
    %v2651 = vpack.c.b16 %v1803, %v1787
    %v2652 = vpack.c.b16 %v1804, %v1788
    %v2653 = vpack.c.b16 %v1805, %v1789
    %v2654 = vpack.c.b16 %v1806, %v1790
    %v2655 = vpack.c.b16 %v1807, %v1791
    %v2656 = vpack.c.b16 %v1808, %v1792
    %v2657 = vpack.c.b16 %v1809, %v1793
    %v2658 = vpack.c.b16 %v1810, %v1794
    %v2659 = vpack.c.b16 %v1811, %v1795
    %v2660 = vpack.c.b16 %v1812, %v1796
    %v2661 = vpack.c.b16 %v1813, %v1797
    %v2662 = vpack.c.b16 %v1814, %v1798
    %v2663 = vpack.c.b16 %v1815, %v1799
    %v2664 = vpack.c.b16 %v1816, %v1800
    %v2665 = vpack.c.b16 %v1817, %v1801
    %v2666 = vpack.c.b16 %v1834, %v1818
    %v2667 = vpack.c.b16 %v1835, %v1819
    %v2668 = vpack.c.b16 %v1836, %v1820
    %v2669 = vpack.c.b16 %v1837, %v1821
    %v2670 = vpack.c.b16 %v1838, %v1822
    %v2671 = vpack.c.b16 %v1839, %v1823
    %v2672 = vpack.c.b16 %v1840, %v1824
    %v2673 = vpack.c.b16 %v1841, %v1825
    %v2674 = vpack.c.b16 %v1842, %v1826
    %v2675 = vpack.c.b16 %v1843, %v1827
    %v2676 = vpack.c.b16 %v1844, %v1828
    %v2677 = vpack.c.b16 %v1845, %v1829
    %v2678 = vpack.c.b16 %v1846, %v1830
    %v2679 = vpack.c.b16 %v1847, %v1831
    %v2680 = vpack.c.b16 %v1848, %v1832
    %v2681 = vpack.c.b16 %v1849, %v1833
    %v2682 = vpack.c.b16 %v1866, %v1850
    %v2683 = vpack.c.b16 %v1867, %v1851
    %v2684 = vpack.c.b16 %v1868, %v1852
    %v2685 = vpack.c.b16 %v1869, %v1853
    %v2686 = vpack.c.b16 %v1870, %v1854
    %v2687 = vpack.c.b16 %v1871, %v1855
    %v2688 = vpack.c.b16 %v1872, %v1856
    %v2689 = vpack.c.b16 %v1873, %v1857
    %v2690 = vpack.c.b16 %v1874, %v1858
    %v2691 = vpack.c.b16 %v1875, %v1859
    %v2692 = vpack.c.b16 %v1876, %v1860
    %v2693 = vpack.c.b16 %v1877, %v1861
    %v2694 = vpack.c.b16 %v1878, %v1862
    %v2695 = vpack.c.b16 %v1879, %v1863
    %v2696 = vpack.c.b16 %v1880, %v1864
    %v2697 = vpack.c.b16 %v1881, %v1865
    %v2698 = vpack.c.b16 %v1898, %v1882
    %v2699 = vpack.c.b16 %v1899, %v1883
    %v2700 = vpack.c.b16 %v1900, %v1884
    %v2701 = vpack.c.b16 %v1901, %v1885
    %v2702 = vpack.c.b16 %v1902, %v1886
    %v2703 = vpack.c.b16 %v1903, %v1887
    %v2704 = vpack.c.b16 %v1904, %v1888
    %v2705 = vpack.c.b16 %v1905, %v1889
    %v2706 = vpack.c.b16 %v1906, %v1890
    %v2707 = vpack.c.b16 %v1907, %v1891
    %v2708 = vpack.c.b16 %v1908, %v1892
    %v2709 = vpack.c.b16 %v1909, %v1893
    %v2710 = vpack.c.b16 %v1910, %v1894
    %v2711 = vpack.c.b16 %v1911, %v1895
    %v2712 = vpack.c.b16 %v1912, %v1896
    %v2713 = vpack.c.b16 %v1913, %v1897
    %v2714 = vpack.c.b16 %v1930, %v1914
    %v2715 = vpack.c.b16 %v1931, %v1915
    %v2716 = vpack.c.b16 %v1932, %v1916
    %v2717 = vpack.c.b16 %v1933, %v1917
    %v2718 = vpack.c.b16 %v1934, %v1918
    %v2719 = vpack.c.b16 %v1935, %v1919
    %v2720 = vpack.c.b16 %v1936, %v1920
    %v2721 = vpack.c.b16 %v1937, %v1921
    %v2722 = vpack.c.b16 %v1938, %v1922
    %v2723 = vpack.c.b16 %v1939, %v1923
    %v2724 = vpack.c.b16 %v1940, %v1924
    %v2725 = vpack.c.b16 %v1941, %v1925
    %v2726 = vpack.c.b16 %v1942, %v1926
    %v2727 = vpack.c.b16 %v1943, %v1927
    %v2728 = vpack.c.b16 %v1944, %v1928
    %v2729 = vpack.c.b16 %v1945, %v1929
    %v2730 = vpack.c.b16 %v1962, %v1946
    %v2731 = vpack.c.b16 %v1963, %v1947
    %v2732 = vpack.c.b16 %v1964, %v1948
    %v2733 = vpack.c.b16 %v1965, %v1949
    %v2734 = vpack.c.b16 %v1966, %v1950
    %v2735 = vpack.c.b16 %v1967, %v1951
    %v2736 = vpack.c.b16 %v1968, %v1952
    %v2737 = vpack.c.b16 %v1969, %v1953
    %v2738 = vpack.c.b16 %v1970, %v1954
    %v2739 = vpack.c.b16 %v1971, %v1955
    %v2740 = vpack.c.b16 %v1972, %v1956
    %v2741 = vpack.c.b16 %v1973, %v1957
    %v2742 = vpack.c.b16 %v1974, %v1958
    %v2743 = vpack.c.b16 %v1975, %v1959
    %v2744 = vpack.c.b16 %v1976, %v1960
    %v2745 = vpack.c.b16 %v1977, %v1961
    %v2746 = vpack.c.b16 %v1994, %v1978
    %v2747 = vpack.c.b16 %v1995, %v1979
    %v2748 = vpack.c.b16 %v1996, %v1980
    %v2749 = vpack.c.b16 %v1997, %v1981
    %v2750 = vpack.c.b16 %v1998, %v1982
    %v2751 = vpack.c.b16 %v1999, %v1983
    %v2752 = vpack.c.b16 %v2000, %v1984
    %v2753 = vpack.c.b16 %v2001, %v1985
    %v2754 = vpack.c.b16 %v2002, %v1986
    %v2755 = vpack.c.b16 %v2003, %v1987
    %v2756 = vpack.c.b16 %v2004, %v1988
    %v2757 = vpack.c.b16 %v2005, %v1989
    %v2758 = vpack.c.b16 %v2006, %v1990
    %v2759 = vpack.c.b16 %v2007, %v1991
    %v2760 = vpack.c.b16 %v2008, %v1992
    %v2761 = vpack.c.b16 %v2009, %v1993
    %v2762 = vpack.c.b16 %v2026, %v2010
    %v2763 = vpack.c.b16 %v2027, %v2011
    %v2764 = vpack.c.b16 %v2028, %v2012
    %v2765 = vpack.c.b16 %v2029, %v2013
    %v2766 = vpack.c.b16 %v2030, %v2014
    %v2767 = vpack.c.b16 %v2031, %v2015
    %v2768 = vpack.c.b16 %v2032, %v2016
    %v2769 = vpack.c.b16 %v2033, %v2017
    %v2770 = vpack.c.b16 %v2034, %v2018
    %v2771 = vpack.c.b16 %v2035, %v2019
    %v2772 = vpack.c.b16 %v2036, %v2020
    %v2773 = vpack.c.b16 %v2037, %v2021
    %v2774 = vpack.c.b16 %v2038, %v2022
    %v2775 = vpack.c.b16 %v2039, %v2023
    %v2776 = vpack.c.b16 %v2040, %v2024
    %v2777 = vpack.c.b16 %v2041, %v2025
    %v2778 = vpack.c.b16 %v2058, %v2042
    %v2779 = vpack.c.b16 %v2059, %v2043
    %v2780 = vpack.c.b16 %v2060, %v2044
    %v2781 = vpack.c.b16 %v2061, %v2045
    %v2782 = vpack.c.b16 %v2062, %v2046
    %v2783 = vpack.c.b16 %v2063, %v2047
    %v2784 = vpack.c.b16 %v2064, %v2048
    %v2785 = vpack.c.b16 %v2065, %v2049
    %v2786 = vpack.c.b16 %v2066, %v2050
    %v2787 = vpack.c.b16 %v2067, %v2051
    %v2788 = vpack.c.b16 %v2068, %v2052
    %v2789 = vpack.c.b16 %v2069, %v2053
    %v2790 = vpack.c.b16 %v2070, %v2054
    %v2791 = vpack.c.b16 %v2071, %v2055
    %v2792 = vpack.c.b16 %v2072, %v2056
    %v2793 = vpack.c.b16 %v2073, %v2057
    %v2794 = vpack.c.b16 %v2090, %v2074
    %v2795 = vpack.c.b16 %v2091, %v2075
    %v2796 = vpack.c.b16 %v2092, %v2076
    %v2797 = vpack.c.b16 %v2093, %v2077
    %v2798 = vpack.c.b16 %v2094, %v2078
    %v2799 = vpack.c.b16 %v2095, %v2079
    %v2800 = vpack.c.b16 %v2096, %v2080
    %v2801 = vpack.c.b16 %v2097, %v2081
    %v2802 = vpack.c.b16 %v2098, %v2082
    %v2803 = vpack.c.b16 %v2099, %v2083
    %v2804 = vpack.c.b16 %v2100, %v2084
    %v2805 = vpack.c.b16 %v2101, %v2085
    %v2806 = vpack.c.b16 %v2102, %v2086
    %v2807 = vpack.c.b16 %v2103, %v2087
    %v2808 = vpack.c.b16 %v2104, %v2088
    %v2809 = vpack.c.b16 %v2105, %v2089
    %v2810 = vpack.c.b16 %v2122, %v2106
    %v2811 = vpack.c.b16 %v2123, %v2107
    %v2812 = vpack.c.b16 %v2124, %v2108
    %v2813 = vpack.c.b16 %v2125, %v2109
    %v2814 = vpack.c.b16 %v2126, %v2110
    %v2815 = vpack.c.b16 %v2127, %v2111
    %v2816 = vpack.c.b16 %v2128, %v2112
    %v2817 = vpack.c.b16 %v2129, %v2113
    %v2818 = vpack.c.b16 %v2130, %v2114
    %v2819 = vpack.c.b16 %v2131, %v2115
    %v2820 = vpack.c.b16 %v2132, %v2116
    %v2821 = vpack.c.b16 %v2133, %v2117
    %v2822 = vpack.c.b16 %v2134, %v2118
    %v2823 = vpack.c.b16 %v2135, %v2119
    %v2824 = vpack.c.b16 %v2136, %v2120
    %v2825 = vpack.c.b16 %v2137, %v2121
    %v2826 = vpack.c.b16 %v2154, %v2138
    %v2827 = vpack.c.b16 %v2155, %v2139
    %v2828 = vpack.c.b16 %v2156, %v2140
    %v2829 = vpack.c.b16 %v2157, %v2141
    %v2830 = vpack.c.b16 %v2158, %v2142
    %v2831 = vpack.c.b16 %v2159, %v2143
    %v2832 = vpack.c.b16 %v2160, %v2144
    %v2833 = vpack.c.b16 %v2161, %v2145
    %v2834 = vpack.c.b16 %v2162, %v2146
    %v2835 = vpack.c.b16 %v2163, %v2147
    %v2836 = vpack.c.b16 %v2164, %v2148
    %v2837 = vpack.c.b16 %v2165, %v2149
    %v2838 = vpack.c.b16 %v2166, %v2150
    %v2839 = vpack.c.b16 %v2167, %v2151
    %v2840 = vpack.c.b16 %v2168, %v2152
    %v2841 = vpack.c.b16 %v2169, %v2153
    %v2842 = vpack.c.b16 %v2186, %v2170
    %v2843 = vpack.c.b16 %v2187, %v2171
    %v2844 = vpack.c.b16 %v2188, %v2172
    %v2845 = vpack.c.b16 %v2189, %v2173
    %v2846 = vpack.c.b16 %v2190, %v2174
    %v2847 = vpack.c.b16 %v2191, %v2175
    %v2848 = vpack.c.b16 %v2192, %v2176
    %v2849 = vpack.c.b16 %v2193, %v2177
    %v2850 = vpack.c.b16 %v2194, %v2178
    %v2851 = vpack.c.b16 %v2195, %v2179
    %v2852 = vpack.c.b16 %v2196, %v2180
    %v2853 = vpack.c.b16 %v2197, %v2181
    %v2854 = vpack.c.b16 %v2198, %v2182
    %v2855 = vpack.c.b16 %v2199, %v2183
    %v2856 = vpack.c.b16 %v2200, %v2184
    %v2857 = vpack.c.b16 %v2201, %v2185
    %v2858 = vpack.c.b16 %v2218, %v2202
    %v2859 = vpack.c.b16 %v2219, %v2203
    %v2860 = vpack.c.b16 %v2220, %v2204
    %v2861 = vpack.c.b16 %v2221, %v2205
    %v2862 = vpack.c.b16 %v2222, %v2206
    %v2863 = vpack.c.b16 %v2223, %v2207
    %v2864 = vpack.c.b16 %v2224, %v2208
    %v2865 = vpack.c.b16 %v2225, %v2209
    %v2866 = vpack.c.b16 %v2226, %v2210
    %v2867 = vpack.c.b16 %v2227, %v2211
    %v2868 = vpack.c.b16 %v2228, %v2212
    %v2869 = vpack.c.b16 %v2229, %v2213
    %v2870 = vpack.c.b16 %v2230, %v2214
    %v2871 = vpack.c.b16 %v2231, %v2215
    %v2872 = vpack.c.b16 %v2232, %v2216
    %v2873 = vpack.c.b16 %v2233, %v2217
    %v2874 = vpack.c.b16 %v2250, %v2234
    %v2875 = vpack.c.b16 %v2251, %v2235
    %v2876 = vpack.c.b16 %v2252, %v2236
    %v2877 = vpack.c.b16 %v2253, %v2237
    %v2878 = vpack.c.b16 %v2254, %v2238
    %v2879 = vpack.c.b16 %v2255, %v2239
    %v2880 = vpack.c.b16 %v2256, %v2240
    %v2881 = vpack.c.b16 %v2257, %v2241
    %v2882 = vpack.c.b16 %v2258, %v2242
    %v2883 = vpack.c.b16 %v2259, %v2243
    %v2884 = vpack.c.b16 %v2260, %v2244
    %v2885 = vpack.c.b16 %v2261, %v2245
    %v2886 = vpack.c.b16 %v2262, %v2246
    %v2887 = vpack.c.b16 %v2263, %v2247
    %v2888 = vpack.c.b16 %v2264, %v2248
    %v2889 = vpack.c.b16 %v2265, %v2249
    %v2890 = vpack.c.b16 %v2282, %v2266
    %v2891 = vpack.c.b16 %v2283, %v2267
    %v2892 = vpack.c.b16 %v2284, %v2268
    %v2893 = vpack.c.b16 %v2285, %v2269
    %v2894 = vpack.c.b16 %v2286, %v2270
    %v2895 = vpack.c.b16 %v2287, %v2271
    %v2896 = vpack.c.b16 %v2288, %v2272
    %v2897 = vpack.c.b16 %v2289, %v2273
    %v2898 = vpack.c.b16 %v2290, %v2274
    %v2899 = vpack.c.b16 %v2291, %v2275
    %v2900 = vpack.c.b16 %v2292, %v2276
    %v2901 = vpack.c.b16 %v2293, %v2277
    %v2902 = vpack.c.b16 %v2294, %v2278
    %v2903 = vpack.c.b16 %v2295, %v2279
    %v2904 = vpack.c.b16 %v2296, %v2280
    %v2905 = vpack.c.b16 %v2297, %v2281
    %v2906 = vpack.c.b16 %v2314, %v2298
    %v2907 = vpack.c.b16 %v2315, %v2299
    %v2908 = vpack.c.b16 %v2316, %v2300
    %v2909 = vpack.c.b16 %v2317, %v2301
    %v2910 = vpack.c.b16 %v2318, %v2302
    %v2911 = vpack.c.b16 %v2319, %v2303
    %v2912 = vpack.c.b16 %v2320, %v2304
    %v2913 = vpack.c.b16 %v2321, %v2305
    %v2914 = vpack.c.b16 %v2322, %v2306
    %v2915 = vpack.c.b16 %v2323, %v2307
    %v2916 = vpack.c.b16 %v2324, %v2308
    %v2917 = vpack.c.b16 %v2325, %v2309
    %v2918 = vpack.c.b16 %v2326, %v2310
    %v2919 = vpack.c.b16 %v2327, %v2311
    %v2920 = vpack.c.b16 %v2328, %v2312
    %v2921 = vpack.c.b16 %v2329, %v2313
    %v2922 = vpack.c.b16 %v2346, %v2330
    %v2923 = vpack.c.b16 %v2347, %v2331
    %v2924 = vpack.c.b16 %v2348, %v2332
    %v2925 = vpack.c.b16 %v2349, %v2333
    %v2926 = vpack.c.b16 %v2350, %v2334
    %v2927 = vpack.c.b16 %v2351, %v2335
    %v2928 = vpack.c.b16 %v2352, %v2336
    %v2929 = vpack.c.b16 %v2353, %v2337
    %v2930 = vpack.c.b16 %v2354, %v2338
    %v2931 = vpack.c.b16 %v2355, %v2339
    %v2932 = vpack.c.b16 %v2356, %v2340
    %v2933 = vpack.c.b16 %v2357, %v2341
    %v2934 = vpack.c.b16 %v2358, %v2342
    %v2935 = vpack.c.b16 %v2359, %v2343
    %v2936 = vpack.c.b16 %v2360, %v2344
    %v2937 = vpack.c.b16 %v2361, %v2345
    %v2938 = vpack.c.b16 %v2378, %v2362
    %v2939 = vpack.c.b16 %v2379, %v2363
    %v2940 = vpack.c.b16 %v2380, %v2364
    %v2941 = vpack.c.b16 %v2381, %v2365
    %v2942 = vpack.c.b16 %v2382, %v2366
    %v2943 = vpack.c.b16 %v2383, %v2367
    %v2944 = vpack.c.b16 %v2384, %v2368
    %v2945 = vpack.c.b16 %v2385, %v2369
    %v2946 = vpack.c.b16 %v2386, %v2370
    %v2947 = vpack.c.b16 %v2387, %v2371
    %v2948 = vpack.c.b16 %v2388, %v2372
    %v2949 = vpack.c.b16 %v2389, %v2373
    %v2950 = vpack.c.b16 %v2390, %v2374
    %v2951 = vpack.c.b16 %v2391, %v2375
    %v2952 = vpack.c.b16 %v2392, %v2376
    %v2953 = vpack.c.b16 %v2393, %v2377
    %v2954 = vpack.c.b16 %v2410, %v2394
    %v2955 = vpack.c.b16 %v2411, %v2395
    %v2956 = vpack.c.b16 %v2412, %v2396
    %v2957 = vpack.c.b16 %v2413, %v2397
    %v2958 = vpack.c.b16 %v2414, %v2398
    %v2959 = vpack.c.b16 %v2415, %v2399
    %v2960 = vpack.c.b16 %v2416, %v2400
    %v2961 = vpack.c.b16 %v2417, %v2401
    %v2962 = vpack.c.b16 %v2418, %v2402
    %v2963 = vpack.c.b16 %v2419, %v2403
    %v2964 = vpack.c.b16 %v2420, %v2404
    %v2965 = vpack.c.b16 %v2421, %v2405
    %v2966 = vpack.c.b16 %v2422, %v2406
    %v2967 = vpack.c.b16 %v2423, %v2407
    %v2968 = vpack.c.b16 %v2424, %v2408
    %v2969 = vpack.c.b16 %v2425, %v2409
    %v2970 = vpack.c.b16 %v2442, %v2426
    %v2971 = vpack.c.b16 %v2443, %v2427
    %v2972 = vpack.c.b16 %v2444, %v2428
    %v2973 = vpack.c.b16 %v2445, %v2429
    %v2974 = vpack.c.b16 %v2446, %v2430
    %v2975 = vpack.c.b16 %v2447, %v2431
    %v2976 = vpack.c.b16 %v2448, %v2432
    %v2977 = vpack.c.b16 %v2449, %v2433
    %v2978 = vpack.c.b16 %v2450, %v2434
    %v2979 = vpack.c.b16 %v2451, %v2435
    %v2980 = vpack.c.b16 %v2452, %v2436
    %v2981 = vpack.c.b16 %v2453, %v2437
    %v2982 = vpack.c.b16 %v2454, %v2438
    %v2983 = vpack.c.b16 %v2455, %v2439
    %v2984 = vpack.c.b16 %v2456, %v2440
    %v2985 = vpack.c.b16 %v2457, %v2441
    %v2986 = vpack.c.b16 %v2474, %v2458
    %v2987 = vpack.c.b16 %v2475, %v2459
    %v2988 = vpack.c.b16 %v2476, %v2460
    %v2989 = vpack.c.b16 %v2477, %v2461
    %v2990 = vpack.c.b16 %v2478, %v2462
    %v2991 = vpack.c.b16 %v2479, %v2463
    %v2992 = vpack.c.b16 %v2480, %v2464
    %v2993 = vpack.c.b16 %v2481, %v2465
    %v2994 = vpack.c.b16 %v2482, %v2466
    %v2995 = vpack.c.b16 %v2483, %v2467
    %v2996 = vpack.c.b16 %v2484, %v2468
    %v2997 = vpack.c.b16 %v2485, %v2469
    %v2998 = vpack.c.b16 %v2486, %v2470
    %v2999 = vpack.c.b16 %v2487, %v2471
    %v3000 = vpack.c.b16 %v2488, %v2472
    %v3001 = vpack.c.b16 %v2489, %v2473
    %3514 = vmatprep.subr.bf16.mxu0 %v2491
    %3515 = vmatpush1.bf16.msra.mxu0 %v2490
    %3516 = vmatprep.subr.bf16.mxu0 %v2507
    %3517 = vmatpush1.bf16.msra.mxu0 %v2506
    %3518 = vmatprep.subr.bf16.mxu0 %v2523
    %3519 = vmatpush1.bf16.msra.mxu0 %v2522
    %3520 = vmatprep.subr.bf16.mxu0 %v2539
    %3521 = vmatpush1.bf16.msra.mxu0 %v2538
    %3522 = vmatprep.subr.bf16.mxu0 %v2555
    %3523 = vmatpush1.bf16.msra.mxu0 %v2554
    %3524 = vmatprep.subr.bf16.mxu0 %v2571
    %3525 = vmatpush1.bf16.msra.mxu0 %v2570
    %3526 = vmatprep.subr.bf16.mxu0 %v2587
    %3527 = vmatpush1.bf16.msra.mxu0 %v2586
    %3528 = vmatprep.subr.bf16.mxu0 %v2603
    %3529 = vmatpush1.bf16.msra.mxu0 %v2602
    %3530 = vmatprep.subr.bf16.mxu0 %v2619
    %3531 = vmatpush1.bf16.msra.mxu0 %v2618
    %3532 = vmatprep.subr.bf16.mxu0 %v2635
    %3533 = vmatpush1.bf16.msra.mxu0 %v2634
    %3534 = vmatprep.subr.bf16.mxu0 %v2651
    %3535 = vmatpush1.bf16.msra.mxu0 %v2650
    %3536 = vmatprep.subr.bf16.mxu0 %v2667
    %3537 = vmatpush1.bf16.msra.mxu0 %v2666
    %3538 = vmatprep.subr.bf16.mxu0 %v2683
    %3539 = vmatpush1.bf16.msra.mxu0 %v2682
    %3540 = vmatprep.subr.bf16.mxu0 %v2699
    %3541 = vmatpush1.bf16.msra.mxu0 %v2698
    %3542 = vmatprep.subr.bf16.mxu0 %v2715
    %3543 = vmatpush1.bf16.msra.mxu0 %v2714
    %3544 = vmatprep.subr.bf16.mxu0 %v2731
    %3545 = vmatpush1.bf16.msra.mxu0 %v2730
    %3546 = vmatprep.mubr.bf16.mxu0 %v439
    %3547 = vmatmul.mubr.bf16.gmra.mrb[0].mxu0 %v438
    %v3548 = vpop.f32.mrb[0].mxu0
    %v3549 = vadd.f32 0.0, %v3548
    %v3550 = vpop.f32.mrb[0].mxu0
    %v3551 = vadd.f32 0.0, %v3550
    %v3552 = vpop.f32.mrb[0].mxu0
    %v3553 = vadd.f32 0.0, %v3552
    %v3554 = vpop.f32.mrb[0].mxu0
    %v3555 = vadd.f32 0.0, %v3554
    %3556 = vdwg.mxu0
    %3557 = vmatprep.subr.bf16.mxu0 %v2747
    %3558 = vmatpush1.bf16.msra.mxu0 %v2746
    %3559 = vmatprep.subr.bf16.mxu0 %v2763
    %3560 = vmatpush1.bf16.msra.mxu0 %v2762
    %3561 = vmatprep.subr.bf16.mxu0 %v2779
    %3562 = vmatpush1.bf16.msra.mxu0 %v2778
    %3563 = vmatprep.subr.bf16.mxu0 %v2795
    %3564 = vmatpush1.bf16.msra.mxu0 %v2794
    %3565 = vmatprep.subr.bf16.mxu0 %v2811
    %3566 = vmatpush1.bf16.msra.mxu0 %v2810
    %3567 = vmatprep.subr.bf16.mxu0 %v2827
    %3568 = vmatpush1.bf16.msra.mxu0 %v2826
    %3569 = vmatprep.subr.bf16.mxu0 %v2843
    %3570 = vmatpush1.bf16.msra.mxu0 %v2842
    %3571 = vmatprep.subr.bf16.mxu0 %v2859
    %3572 = vmatpush1.bf16.msra.mxu0 %v2858
    %3573 = vmatprep.subr.bf16.mxu0 %v2875
    %3574 = vmatpush1.bf16.msra.mxu0 %v2874
    %3575 = vmatprep.subr.bf16.mxu0 %v2891
    %3576 = vmatpush1.bf16.msra.mxu0 %v2890
    %3577 = vmatprep.subr.bf16.mxu0 %v2907
    %3578 = vmatpush1.bf16.msra.mxu0 %v2906
    %3579 = vmatprep.subr.bf16.mxu0 %v2923
    %3580 = vmatpush1.bf16.msra.mxu0 %v2922
    %3581 = vmatprep.subr.bf16.mxu0 %v2939
    %3582 = vmatpush1.bf16.msra.mxu0 %v2938
    %3583 = vmatprep.subr.bf16.mxu0 %v2955
    %3584 = vmatpush1.bf16.msra.mxu0 %v2954
    %3585 = vmatprep.subr.bf16.mxu0 %v2971
    %3586 = vmatpush1.bf16.msra.mxu0 %v2970
    %3587 = vmatprep.subr.bf16.mxu0 %v2987
    %3588 = vmatpush1.bf16.msra.mxu0 %v2986
    %3589 = vmatprep.mubr.bf16.mxu0 %v441
    %3590 = vmatmul.mubr.bf16.gmra.mrb[0].mxu0 %v440
    %v3591 = vpop.f32.mrb[0].mxu0
    %v3592 = vadd.f32 %v3549, %v3591
    %v3593 = vpop.f32.mrb[0].mxu0
    %v3594 = vadd.f32 %v3551, %v3593
    %v3595 = vpop.f32.mrb[0].mxu0
    %v3596 = vadd.f32 %v3553, %v3595
    %v3597 = vpop.f32.mrb[0].mxu0
    %v3598 = vadd.f32 %v3555, %v3597
    %3599 = vdwg.mxu0
    %3600 = vmatprep.subr.bf16.mxu0 %v2493
    %3601 = vmatpush1.bf16.msra.mxu0 %v2492
    %3602 = vmatprep.subr.bf16.mxu0 %v2509
    %3603 = vmatpush1.bf16.msra.mxu0 %v2508
    %3604 = vmatprep.subr.bf16.mxu0 %v2525
    %3605 = vmatpush1.bf16.msra.mxu0 %v2524
    %3606 = vmatprep.subr.bf16.mxu0 %v2541
    %3607 = vmatpush1.bf16.msra.mxu0 %v2540
    %3608 = vmatprep.subr.bf16.mxu0 %v2557
    %3609 = vmatpush1.bf16.msra.mxu0 %v2556
    %3610 = vmatprep.subr.bf16.mxu0 %v2573
    %3611 = vmatpush1.bf16.msra.mxu0 %v2572
    %3612 = vmatprep.subr.bf16.mxu0 %v2589
    %3613 = vmatpush1.bf16.msra.mxu0 %v2588
    %3614 = vmatprep.subr.bf16.mxu0 %v2605
    %3615 = vmatpush1.bf16.msra.mxu0 %v2604
    %3616 = vmatprep.subr.bf16.mxu0 %v2621
    %3617 = vmatpush1.bf16.msra.mxu0 %v2620
    %3618 = vmatprep.subr.bf16.mxu0 %v2637
    %3619 = vmatpush1.bf16.msra.mxu0 %v2636
    %3620 = vmatprep.subr.bf16.mxu0 %v2653
    %3621 = vmatpush1.bf16.msra.mxu0 %v2652
    %3622 = vmatprep.subr.bf16.mxu0 %v2669
    %3623 = vmatpush1.bf16.msra.mxu0 %v2668
    %3624 = vmatprep.subr.bf16.mxu0 %v2685
    %3625 = vmatpush1.bf16.msra.mxu0 %v2684
    %3626 = vmatprep.subr.bf16.mxu0 %v2701
    %3627 = vmatpush1.bf16.msra.mxu0 %v2700
    %3628 = vmatprep.subr.bf16.mxu0 %v2717
    %3629 = vmatpush1.bf16.msra.mxu0 %v2716
    %3630 = vmatprep.subr.bf16.mxu0 %v2733
    %3631 = vmatpush1.bf16.msra.mxu0 %v2732
    %3632 = vmatprep.mubr.bf16.mxu0 %v439
    %3633 = vmatmul.mubr.bf16.gmra.mrb[0].mxu0 %v438
    %v3634 = vpop.f32.mrb[0].mxu0
    %v3635 = vadd.f32 0.0, %v3634
    %v3636 = vpop.f32.mrb[0].mxu0
    %v3637 = vadd.f32 0.0, %v3636
    %v3638 = vpop.f32.mrb[0].mxu0
    %v3639 = vadd.f32 0.0, %v3638
    %v3640 = vpop.f32.mrb[0].mxu0
    %v3641 = vadd.f32 0.0, %v3640
    %3642 = vdwg.mxu0
    %3643 = vmatprep.subr.bf16.mxu0 %v2749
    %3644 = vmatpush1.bf16.msra.mxu0 %v2748
    %3645 = vmatprep.subr.bf16.mxu0 %v2765
    %3646 = vmatpush1.bf16.msra.mxu0 %v2764
    %3647 = vmatprep.subr.bf16.mxu0 %v2781
    %3648 = vmatpush1.bf16.msra.mxu0 %v2780
    %3649 = vmatprep.subr.bf16.mxu0 %v2797
    %3650 = vmatpush1.bf16.msra.mxu0 %v2796
    %3651 = vmatprep.subr.bf16.mxu0 %v2813
    %3652 = vmatpush1.bf16.msra.mxu0 %v2812
    %3653 = vmatprep.subr.bf16.mxu0 %v2829
    %3654 = vmatpush1.bf16.msra.mxu0 %v2828
    %3655 = vmatprep.subr.bf16.mxu0 %v2845
    %3656 = vmatpush1.bf16.msra.mxu0 %v2844
    %3657 = vmatprep.subr.bf16.mxu0 %v2861
    %3658 = vmatpush1.bf16.msra.mxu0 %v2860
    %3659 = vmatprep.subr.bf16.mxu0 %v2877
    %3660 = vmatpush1.bf16.msra.mxu0 %v2876
    %3661 = vmatprep.subr.bf16.mxu0 %v2893
    %3662 = vmatpush1.bf16.msra.mxu0 %v2892
    %3663 = vmatprep.subr.bf16.mxu0 %v2909
    %3664 = vmatpush1.bf16.msra.mxu0 %v2908
    %3665 = vmatprep.subr.bf16.mxu0 %v2925
    %3666 = vmatpush1.bf16.msra.mxu0 %v2924
    %3667 = vmatprep.subr.bf16.mxu0 %v2941
    %3668 = vmatpush1.bf16.msra.mxu0 %v2940
    %3669 = vmatprep.subr.bf16.mxu0 %v2957
    %3670 = vmatpush1.bf16.msra.mxu0 %v2956
    %3671 = vmatprep.subr.bf16.mxu0 %v2973
    %3672 = vmatpush1.bf16.msra.mxu0 %v2972
    %3673 = vmatprep.subr.bf16.mxu0 %v2989
    %3674 = vmatpush1.bf16.msra.mxu0 %v2988
    %3675 = vmatprep.mubr.bf16.mxu0 %v441
    %3676 = vmatmul.mubr.bf16.gmra.mrb[0].mxu0 %v440
    %v3677 = vpop.f32.mrb[0].mxu0
    %v3678 = vadd.f32 %v3635, %v3677
    %v3679 = vpop.f32.mrb[0].mxu0
    %v3680 = vadd.f32 %v3637, %v3679
    %v3681 = vpop.f32.mrb[0].mxu0
    %v3682 = vadd.f32 %v3639, %v3681
    %v3683 = vpop.f32.mrb[0].mxu0
    %v3684 = vadd.f32 %v3641, %v3683
    %3685 = vdwg.mxu0
    %3686 = vmatprep.subr.bf16.mxu0 %v2495
    %3687 = vmatpush1.bf16.msra.mxu0 %v2494
    %3688 = vmatprep.subr.bf16.mxu0 %v2511
    %3689 = vmatpush1.bf16.msra.mxu0 %v2510
    %3690 = vmatprep.subr.bf16.mxu0 %v2527
    %3691 = vmatpush1.bf16.msra.mxu0 %v2526
    %3692 = vmatprep.subr.bf16.mxu0 %v2543
    %3693 = vmatpush1.bf16.msra.mxu0 %v2542
    %3694 = vmatprep.subr.bf16.mxu0 %v2559
    %3695 = vmatpush1.bf16.msra.mxu0 %v2558
    %3696 = vmatprep.subr.bf16.mxu0 %v2575
    %3697 = vmatpush1.bf16.msra.mxu0 %v2574
    %3698 = vmatprep.subr.bf16.mxu0 %v2591
    %3699 = vmatpush1.bf16.msra.mxu0 %v2590
    %3700 = vmatprep.subr.bf16.mxu0 %v2607
    %3701 = vmatpush1.bf16.msra.mxu0 %v2606
    %3702 = vmatprep.subr.bf16.mxu0 %v2623
    %3703 = vmatpush1.bf16.msra.mxu0 %v2622
    %3704 = vmatprep.subr.bf16.mxu0 %v2639
    %3705 = vmatpush1.bf16.msra.mxu0 %v2638
    %3706 = vmatprep.subr.bf16.mxu0 %v2655
    %3707 = vmatpush1.bf16.msra.mxu0 %v2654
    %3708 = vmatprep.subr.bf16.mxu0 %v2671
    %3709 = vmatpush1.bf16.msra.mxu0 %v2670
    %3710 = vmatprep.subr.bf16.mxu0 %v2687
    %3711 = vmatpush1.bf16.msra.mxu0 %v2686
    %3712 = vmatprep.subr.bf16.mxu0 %v2703
    %3713 = vmatpush1.bf16.msra.mxu0 %v2702
    %3714 = vmatprep.subr.bf16.mxu0 %v2719
    %3715 = vmatpush1.bf16.msra.mxu0 %v2718
    %3716 = vmatprep.subr.bf16.mxu0 %v2735
    %3717 = vmatpush1.bf16.msra.mxu0 %v2734
    %3718 = vmatprep.mubr.bf16.mxu0 %v439
    %3719 = vmatmul.mubr.bf16.gmra.mrb[0].mxu0 %v438
    %v3720 = vpop.f32.mrb[0].mxu0
    %v3721 = vadd.f32 0.0, %v3720
    %v3722 = vpop.f32.mrb[0].mxu0
    %v3723 = vadd.f32 0.0, %v3722
    %v3724 = vpop.f32.mrb[0].mxu0
    %v3725 = vadd.f32 0.0, %v3724
    %v3726 = vpop.f32.mrb[0].mxu0
    %v3727 = vadd.f32 0.0, %v3726
    %3728 = vdwg.mxu0
    %3729 = vmatprep.subr.bf16.mxu0 %v2751
    %3730 = vmatpush1.bf16.msra.mxu0 %v2750
    %3731 = vmatprep.subr.bf16.mxu0 %v2767
    %3732 = vmatpush1.bf16.msra.mxu0 %v2766
    %3733 = vmatprep.subr.bf16.mxu0 %v2783
    %3734 = vmatpush1.bf16.msra.mxu0 %v2782
    %3735 = vmatprep.subr.bf16.mxu0 %v2799
    %3736 = vmatpush1.bf16.msra.mxu0 %v2798
    %3737 = vmatprep.subr.bf16.mxu0 %v2815
    %3738 = vmatpush1.bf16.msra.mxu0 %v2814
    %3739 = vmatprep.subr.bf16.mxu0 %v2831
    %3740 = vmatpush1.bf16.msra.mxu0 %v2830
    %3741 = vmatprep.subr.bf16.mxu0 %v2847
    %3742 = vmatpush1.bf16.msra.mxu0 %v2846
    %3743 = vmatprep.subr.bf16.mxu0 %v2863
    %3744 = vmatpush1.bf16.msra.mxu0 %v2862
    %3745 = vmatprep.subr.bf16.mxu0 %v2879
    %3746 = vmatpush1.bf16.msra.mxu0 %v2878
    %3747 = vmatprep.subr.bf16.mxu0 %v2895
    %3748 = vmatpush1.bf16.msra.mxu0 %v2894
    %3749 = vmatprep.subr.bf16.mxu0 %v2911
    %3750 = vmatpush1.bf16.msra.mxu0 %v2910
    %3751 = vmatprep.subr.bf16.mxu0 %v2927
    %3752 = vmatpush1.bf16.msra.mxu0 %v2926
    %3753 = vmatprep.subr.bf16.mxu0 %v2943
    %3754 = vmatpush1.bf16.msra.mxu0 %v2942
    %3755 = vmatprep.subr.bf16.mxu0 %v2959
    %3756 = vmatpush1.bf16.msra.mxu0 %v2958
    %3757 = vmatprep.subr.bf16.mxu0 %v2975
    %3758 = vmatpush1.bf16.msra.mxu0 %v2974
    %3759 = vmatprep.subr.bf16.mxu0 %v2991
    %3760 = vmatpush1.bf16.msra.mxu0 %v2990
    %3761 = vmatprep.mubr.bf16.mxu0 %v441
    %3762 = vmatmul.mubr.bf16.gmra.mrb[0].mxu0 %v440
    %v3763 = vpop.f32.mrb[0].mxu0
    %v3764 = vadd.f32 %v3721, %v3763
    %v3765 = vpop.f32.mrb[0].mxu0
    %v3766 = vadd.f32 %v3723, %v3765
    %v3767 = vpop.f32.mrb[0].mxu0
    %v3768 = vadd.f32 %v3725, %v3767
    %v3769 = vpop.f32.mrb[0].mxu0
    %v3770 = vadd.f32 %v3727, %v3769
    %3771 = vdwg.mxu0
    %3772 = vmatprep.subr.bf16.mxu0 %v2497
    %3773 = vmatpush1.bf16.msra.mxu0 %v2496
    %3774 = vmatprep.subr.bf16.mxu0 %v2513
    %3775 = vmatpush1.bf16.msra.mxu0 %v2512
    %3776 = vmatprep.subr.bf16.mxu0 %v2529
    %3777 = vmatpush1.bf16.msra.mxu0 %v2528
    %3778 = vmatprep.subr.bf16.mxu0 %v2545
    %3779 = vmatpush1.bf16.msra.mxu0 %v2544
    %3780 = vmatprep.subr.bf16.mxu0 %v2561
    %3781 = vmatpush1.bf16.msra.mxu0 %v2560
    %3782 = vmatprep.subr.bf16.mxu0 %v2577
    %3783 = vmatpush1.bf16.msra.mxu0 %v2576
    %3784 = vmatprep.subr.bf16.mxu0 %v2593
    %3785 = vmatpush1.bf16.msra.mxu0 %v2592
    %3786 = vmatprep.subr.bf16.mxu0 %v2609
    %3787 = vmatpush1.bf16.msra.mxu0 %v2608
    %3788 = vmatprep.subr.bf16.mxu0 %v2625
    %3789 = vmatpush1.bf16.msra.mxu0 %v2624
    %3790 = vmatprep.subr.bf16.mxu0 %v2641
    %3791 = vmatpush1.bf16.msra.mxu0 %v2640
    %3792 = vmatprep.subr.bf16.mxu0 %v2657
    %3793 = vmatpush1.bf16.msra.mxu0 %v2656
    %3794 = vmatprep.subr.bf16.mxu0 %v2673
    %3795 = vmatpush1.bf16.msra.mxu0 %v2672
    %3796 = vmatprep.subr.bf16.mxu0 %v2689
    %3797 = vmatpush1.bf16.msra.mxu0 %v2688
    %3798 = vmatprep.subr.bf16.mxu0 %v2705
    %3799 = vmatpush1.bf16.msra.mxu0 %v2704
    %3800 = vmatprep.subr.bf16.mxu0 %v2721
    %3801 = vmatpush1.bf16.msra.mxu0 %v2720
    %3802 = vmatprep.subr.bf16.mxu0 %v2737
    %3803 = vmatpush1.bf16.msra.mxu0 %v2736
    %3804 = vmatprep.mubr.bf16.mxu0 %v439
    %3805 = vmatmul.mubr.bf16.gmra.mrb[0].mxu0 %v438
    %v3806 = vpop.f32.mrb[0].mxu0
    %v3807 = vadd.f32 0.0, %v3806
    %v3808 = vpop.f32.mrb[0].mxu0
    %v3809 = vadd.f32 0.0, %v3808
    %v3810 = vpop.f32.mrb[0].mxu0
    %v3811 = vadd.f32 0.0, %v3810
    %v3812 = vpop.f32.mrb[0].mxu0
    %v3813 = vadd.f32 0.0, %v3812
    %3814 = vdwg.mxu0
    %3815 = vmatprep.subr.bf16.mxu0 %v2753
    %3816 = vmatpush1.bf16.msra.mxu0 %v2752
    %3817 = vmatprep.subr.bf16.mxu0 %v2769
    %3818 = vmatpush1.bf16.msra.mxu0 %v2768
    %3819 = vmatprep.subr.bf16.mxu0 %v2785
    %3820 = vmatpush1.bf16.msra.mxu0 %v2784
    %3821 = vmatprep.subr.bf16.mxu0 %v2801
    %3822 = vmatpush1.bf16.msra.mxu0 %v2800
    %3823 = vmatprep.subr.bf16.mxu0 %v2817
    %3824 = vmatpush1.bf16.msra.mxu0 %v2816
    %3825 = vmatprep.subr.bf16.mxu0 %v2833
    %3826 = vmatpush1.bf16.msra.mxu0 %v2832
    %3827 = vmatprep.subr.bf16.mxu0 %v2849
    %3828 = vmatpush1.bf16.msra.mxu0 %v2848
    %3829 = vmatprep.subr.bf16.mxu0 %v2865
    %3830 = vmatpush1.bf16.msra.mxu0 %v2864
    %3831 = vmatprep.subr.bf16.mxu0 %v2881
    %3832 = vmatpush1.bf16.msra.mxu0 %v2880
    %3833 = vmatprep.subr.bf16.mxu0 %v2897
    %3834 = vmatpush1.bf16.msra.mxu0 %v2896
    %3835 = vmatprep.subr.bf16.mxu0 %v2913
    %3836 = vmatpush1.bf16.msra.mxu0 %v2912
    %3837 = vmatprep.subr.bf16.mxu0 %v2929
    %3838 = vmatpush1.bf16.msra.mxu0 %v2928
    %3839 = vmatprep.subr.bf16.mxu0 %v2945
    %3840 = vmatpush1.bf16.msra.mxu0 %v2944
    %3841 = vmatprep.subr.bf16.mxu0 %v2961
    %3842 = vmatpush1.bf16.msra.mxu0 %v2960
    %3843 = vmatprep.subr.bf16.mxu0 %v2977
    %3844 = vmatpush1.bf16.msra.mxu0 %v2976
    %3845 = vmatprep.subr.bf16.mxu0 %v2993
    %3846 = vmatpush1.bf16.msra.mxu0 %v2992
    %3847 = vmatprep.mubr.bf16.mxu0 %v441
    %3848 = vmatmul.mubr.bf16.gmra.mrb[0].mxu0 %v440
    %v3849 = vpop.f32.mrb[0].mxu0
    %v3850 = vadd.f32 %v3807, %v3849
    %v3851 = vpop.f32.mrb[0].mxu0
    %v3852 = vadd.f32 %v3809, %v3851
    %v3853 = vpop.f32.mrb[0].mxu0
    %v3854 = vadd.f32 %v3811, %v3853
    %v3855 = vpop.f32.mrb[0].mxu0
    %v3856 = vadd.f32 %v3813, %v3855
    %3857 = vdwg.mxu0
    %3858 = vmatprep.subr.bf16.mxu0 %v2499
    %3859 = vmatpush1.bf16.msra.mxu0 %v2498
    %3860 = vmatprep.subr.bf16.mxu0 %v2515
    %3861 = vmatpush1.bf16.msra.mxu0 %v2514
    %3862 = vmatprep.subr.bf16.mxu0 %v2531
    %3863 = vmatpush1.bf16.msra.mxu0 %v2530
    %3864 = vmatprep.subr.bf16.mxu0 %v2547
    %3865 = vmatpush1.bf16.msra.mxu0 %v2546
    %3866 = vmatprep.subr.bf16.mxu0 %v2563
    %3867 = vmatpush1.bf16.msra.mxu0 %v2562
    %3868 = vmatprep.subr.bf16.mxu0 %v2579
    %3869 = vmatpush1.bf16.msra.mxu0 %v2578
    %3870 = vmatprep.subr.bf16.mxu0 %v2595
    %3871 = vmatpush1.bf16.msra.mxu0 %v2594
    %3872 = vmatprep.subr.bf16.mxu0 %v2611
    %3873 = vmatpush1.bf16.msra.mxu0 %v2610
    %3874 = vmatprep.subr.bf16.mxu0 %v2627
    %3875 = vmatpush1.bf16.msra.mxu0 %v2626
    %3876 = vmatprep.subr.bf16.mxu0 %v2643
    %3877 = vmatpush1.bf16.msra.mxu0 %v2642
    %3878 = vmatprep.subr.bf16.mxu0 %v2659
    %3879 = vmatpush1.bf16.msra.mxu0 %v2658
    %3880 = vmatprep.subr.bf16.mxu0 %v2675
    %3881 = vmatpush1.bf16.msra.mxu0 %v2674
    %3882 = vmatprep.subr.bf16.mxu0 %v2691
    %3883 = vmatpush1.bf16.msra.mxu0 %v2690
    %3884 = vmatprep.subr.bf16.mxu0 %v2707
    %3885 = vmatpush1.bf16.msra.mxu0 %v2706
    %3886 = vmatprep.subr.bf16.mxu0 %v2723
    %3887 = vmatpush1.bf16.msra.mxu0 %v2722
    %3888 = vmatprep.subr.bf16.mxu0 %v2739
    %3889 = vmatpush1.bf16.msra.mxu0 %v2738
    %3890 = vmatprep.mubr.bf16.mxu0 %v439
    %3891 = vmatmul.mubr.bf16.gmra.mrb[0].mxu0 %v438
    %v3892 = vpop.f32.mrb[0].mxu0
    %v3893 = vadd.f32 0.0, %v3892
    %v3894 = vpop.f32.mrb[0].mxu0
    %v3895 = vadd.f32 0.0, %v3894
    %v3896 = vpop.f32.mrb[0].mxu0
    %v3897 = vadd.f32 0.0, %v3896
    %v3898 = vpop.f32.mrb[0].mxu0
    %v3899 = vadd.f32 0.0, %v3898
    %3900 = vdwg.mxu0
    %3901 = vmatprep.subr.bf16.mxu0 %v2755
    %3902 = vmatpush1.bf16.msra.mxu0 %v2754
    %3903 = vmatprep.subr.bf16.mxu0 %v2771
    %3904 = vmatpush1.bf16.msra.mxu0 %v2770
    %3905 = vmatprep.subr.bf16.mxu0 %v2787
    %3906 = vmatpush1.bf16.msra.mxu0 %v2786
    %3907 = vmatprep.subr.bf16.mxu0 %v2803
    %3908 = vmatpush1.bf16.msra.mxu0 %v2802
    %3909 = vmatprep.subr.bf16.mxu0 %v2819
    %3910 = vmatpush1.bf16.msra.mxu0 %v2818
    %3911 = vmatprep.subr.bf16.mxu0 %v2835
    %3912 = vmatpush1.bf16.msra.mxu0 %v2834
    %3913 = vmatprep.subr.bf16.mxu0 %v2851
    %3914 = vmatpush1.bf16.msra.mxu0 %v2850
    %3915 = vmatprep.subr.bf16.mxu0 %v2867
    %3916 = vmatpush1.bf16.msra.mxu0 %v2866
    %3917 = vmatprep.subr.bf16.mxu0 %v2883
    %3918 = vmatpush1.bf16.msra.mxu0 %v2882
    %3919 = vmatprep.subr.bf16.mxu0 %v2899
    %3920 = vmatpush1.bf16.msra.mxu0 %v2898
    %3921 = vmatprep.subr.bf16.mxu0 %v2915
    %3922 = vmatpush1.bf16.msra.mxu0 %v2914
    %3923 = vmatprep.subr.bf16.mxu0 %v2931
    %3924 = vmatpush1.bf16.msra.mxu0 %v2930
    %3925 = vmatprep.subr.bf16.mxu0 %v2947
    %3926 = vmatpush1.bf16.msra.mxu0 %v2946
    %3927 = vmatprep.subr.bf16.mxu0 %v2963
    %3928 = vmatpush1.bf16.msra.mxu0 %v2962
    %3929 = vmatprep.subr.bf16.mxu0 %v2979
    %3930 = vmatpush1.bf16.msra.mxu0 %v2978
    %3931 = vmatprep.subr.bf16.mxu0 %v2995
    %3932 = vmatpush1.bf16.msra.mxu0 %v2994
    %3933 = vmatprep.mubr.bf16.mxu0 %v441
    %3934 = vmatmul.mubr.bf16.gmra.mrb[0].mxu0 %v440
    %v3935 = vpop.f32.mrb[0].mxu0
    %v3936 = vadd.f32 %v3893, %v3935
    %v3937 = vpop.f32.mrb[0].mxu0
    %v3938 = vadd.f32 %v3895, %v3937
    %v3939 = vpop.f32.mrb[0].mxu0
    %v3940 = vadd.f32 %v3897, %v3939
    %v3941 = vpop.f32.mrb[0].mxu0
    %v3942 = vadd.f32 %v3899, %v3941
    %3943 = vdwg.mxu0
    %3944 = vmatprep.subr.bf16.mxu0 %v2501
    %3945 = vmatpush1.bf16.msra.mxu0 %v2500
    %3946 = vmatprep.subr.bf16.mxu0 %v2517
    %3947 = vmatpush1.bf16.msra.mxu0 %v2516
    %3948 = vmatprep.subr.bf16.mxu0 %v2533
    %3949 = vmatpush1.bf16.msra.mxu0 %v2532
    %3950 = vmatprep.subr.bf16.mxu0 %v2549
    %3951 = vmatpush1.bf16.msra.mxu0 %v2548
    %3952 = vmatprep.subr.bf16.mxu0 %v2565
    %3953 = vmatpush1.bf16.msra.mxu0 %v2564
    %3954 = vmatprep.subr.bf16.mxu0 %v2581
    %3955 = vmatpush1.bf16.msra.mxu0 %v2580
    %3956 = vmatprep.subr.bf16.mxu0 %v2597
    %3957 = vmatpush1.bf16.msra.mxu0 %v2596
    %3958 = vmatprep.subr.bf16.mxu0 %v2613
    %3959 = vmatpush1.bf16.msra.mxu0 %v2612
    %3960 = vmatprep.subr.bf16.mxu0 %v2629
    %3961 = vmatpush1.bf16.msra.mxu0 %v2628
    %3962 = vmatprep.subr.bf16.mxu0 %v2645
    %3963 = vmatpush1.bf16.msra.mxu0 %v2644
    %3964 = vmatprep.subr.bf16.mxu0 %v2661
    %3965 = vmatpush1.bf16.msra.mxu0 %v2660
    %3966 = vmatprep.subr.bf16.mxu0 %v2677
    %3967 = vmatpush1.bf16.msra.mxu0 %v2676
    %3968 = vmatprep.subr.bf16.mxu0 %v2693
    %3969 = vmatpush1.bf16.msra.mxu0 %v2692
    %3970 = vmatprep.subr.bf16.mxu0 %v2709
    %3971 = vmatpush1.bf16.msra.mxu0 %v2708
    %3972 = vmatprep.subr.bf16.mxu0 %v2725
    %3973 = vmatpush1.bf16.msra.mxu0 %v2724
    %3974 = vmatprep.subr.bf16.mxu0 %v2741
    %3975 = vmatpush1.bf16.msra.mxu0 %v2740
    %3976 = vmatprep.mubr.bf16.mxu0 %v439
    %3977 = vmatmul.mubr.bf16.gmra.mrb[0].mxu0 %v438
    %v3978 = vpop.f32.mrb[0].mxu0
    %v3979 = vadd.f32 0.0, %v3978
    %v3980 = vpop.f32.mrb[0].mxu0
    %v3981 = vadd.f32 0.0, %v3980
    %v3982 = vpop.f32.mrb[0].mxu0
    %v3983 = vadd.f32 0.0, %v3982
    %v3984 = vpop.f32.mrb[0].mxu0
    %v3985 = vadd.f32 0.0, %v3984
    %3986 = vdwg.mxu0
    %3987 = vmatprep.subr.bf16.mxu0 %v2757
    %3988 = vmatpush1.bf16.msra.mxu0 %v2756
    %3989 = vmatprep.subr.bf16.mxu0 %v2773
    %3990 = vmatpush1.bf16.msra.mxu0 %v2772
    %3991 = vmatprep.subr.bf16.mxu0 %v2789
    %3992 = vmatpush1.bf16.msra.mxu0 %v2788
    %3993 = vmatprep.subr.bf16.mxu0 %v2805
    %3994 = vmatpush1.bf16.msra.mxu0 %v2804
    %3995 = vmatprep.subr.bf16.mxu0 %v2821
    %3996 = vmatpush1.bf16.msra.mxu0 %v2820
    %3997 = vmatprep.subr.bf16.mxu0 %v2837
    %3998 = vmatpush1.bf16.msra.mxu0 %v2836
    %3999 = vmatprep.subr.bf16.mxu0 %v2853
    %4000 = vmatpush1.bf16.msra.mxu0 %v2852
    %4001 = vmatprep.subr.bf16.mxu0 %v2869
    %4002 = vmatpush1.bf16.msra.mxu0 %v2868
    %4003 = vmatprep.subr.bf16.mxu0 %v2885
    %4004 = vmatpush1.bf16.msra.mxu0 %v2884
    %4005 = vmatprep.subr.bf16.mxu0 %v2901
    %4006 = vmatpush1.bf16.msra.mxu0 %v2900
    %4007 = vmatprep.subr.bf16.mxu0 %v2917
    %4008 = vmatpush1.bf16.msra.mxu0 %v2916
    %4009 = vmatprep.subr.bf16.mxu0 %v2933
    %4010 = vmatpush1.bf16.msra.mxu0 %v2932
    %4011 = vmatprep.subr.bf16.mxu0 %v2949
    %4012 = vmatpush1.bf16.msra.mxu0 %v2948
    %4013 = vmatprep.subr.bf16.mxu0 %v2965
    %4014 = vmatpush1.bf16.msra.mxu0 %v2964
    %4015 = vmatprep.subr.bf16.mxu0 %v2981
    %4016 = vmatpush1.bf16.msra.mxu0 %v2980
    %4017 = vmatprep.subr.bf16.mxu0 %v2997
    %4018 = vmatpush1.bf16.msra.mxu0 %v2996
    %4019 = vmatprep.mubr.bf16.mxu0 %v441
    %4020 = vmatmul.mubr.bf16.gmra.mrb[0].mxu0 %v440
    %v4021 = vpop.f32.mrb[0].mxu0
    %v4022 = vadd.f32 %v3979, %v4021
    %v4023 = vpop.f32.mrb[0].mxu0
    %v4024 = vadd.f32 %v3981, %v4023
    %v4025 = vpop.f32.mrb[0].mxu0
    %v4026 = vadd.f32 %v3983, %v4025
    %v4027 = vpop.f32.mrb[0].mxu0
    %v4028 = vadd.f32 %v3985, %v4027
    %4029 = vdwg.mxu0
    %4030 = vmatprep.subr.bf16.mxu0 %v2503
    %4031 = vmatpush1.bf16.msra.mxu0 %v2502
    %4032 = vmatprep.subr.bf16.mxu0 %v2519
    %4033 = vmatpush1.bf16.msra.mxu0 %v2518
    %4034 = vmatprep.subr.bf16.mxu0 %v2535
    %4035 = vmatpush1.bf16.msra.mxu0 %v2534
    %4036 = vmatprep.subr.bf16.mxu0 %v2551
    %4037 = vmatpush1.bf16.msra.mxu0 %v2550
    %4038 = vmatprep.subr.bf16.mxu0 %v2567
    %4039 = vmatpush1.bf16.msra.mxu0 %v2566
    %4040 = vmatprep.subr.bf16.mxu0 %v2583
    %4041 = vmatpush1.bf16.msra.mxu0 %v2582
    %4042 = vmatprep.subr.bf16.mxu0 %v2599
    %4043 = vmatpush1.bf16.msra.mxu0 %v2598
    %4044 = vmatprep.subr.bf16.mxu0 %v2615
    %4045 = vmatpush1.bf16.msra.mxu0 %v2614
    %4046 = vmatprep.subr.bf16.mxu0 %v2631
    %4047 = vmatpush1.bf16.msra.mxu0 %v2630
    %4048 = vmatprep.subr.bf16.mxu0 %v2647
    %4049 = vmatpush1.bf16.msra.mxu0 %v2646
    %4050 = vmatprep.subr.bf16.mxu0 %v2663
    %4051 = vmatpush1.bf16.msra.mxu0 %v2662
    %4052 = vmatprep.subr.bf16.mxu0 %v2679
    %4053 = vmatpush1.bf16.msra.mxu0 %v2678
    %4054 = vmatprep.subr.bf16.mxu0 %v2695
    %4055 = vmatpush1.bf16.msra.mxu0 %v2694
    %4056 = vmatprep.subr.bf16.mxu0 %v2711
    %4057 = vmatpush1.bf16.msra.mxu0 %v2710
    %4058 = vmatprep.subr.bf16.mxu0 %v2727
    %4059 = vmatpush1.bf16.msra.mxu0 %v2726
    %4060 = vmatprep.subr.bf16.mxu0 %v2743
    %4061 = vmatpush1.bf16.msra.mxu0 %v2742
    %4062 = vmatprep.mubr.bf16.mxu0 %v439
    %4063 = vmatmul.mubr.bf16.gmra.mrb[0].mxu0 %v438
    %v4064 = vpop.f32.mrb[0].mxu0
    %v4065 = vadd.f32 0.0, %v4064
    %v4066 = vpop.f32.mrb[0].mxu0
    %v4067 = vadd.f32 0.0, %v4066
    %v4068 = vpop.f32.mrb[0].mxu0
    %v4069 = vadd.f32 0.0, %v4068
    %v4070 = vpop.f32.mrb[0].mxu0
    %v4071 = vadd.f32 0.0, %v4070
    %4072 = vdwg.mxu0
    %4073 = vmatprep.subr.bf16.mxu0 %v2759
    %4074 = vmatpush1.bf16.msra.mxu0 %v2758
    %4075 = vmatprep.subr.bf16.mxu0 %v2775
    %4076 = vmatpush1.bf16.msra.mxu0 %v2774
    %4077 = vmatprep.subr.bf16.mxu0 %v2791
    %4078 = vmatpush1.bf16.msra.mxu0 %v2790
    %4079 = vmatprep.subr.bf16.mxu0 %v2807
    %4080 = vmatpush1.bf16.msra.mxu0 %v2806
    %4081 = vmatprep.subr.bf16.mxu0 %v2823
    %4082 = vmatpush1.bf16.msra.mxu0 %v2822
    %4083 = vmatprep.subr.bf16.mxu0 %v2839
    %4084 = vmatpush1.bf16.msra.mxu0 %v2838
    %4085 = vmatprep.subr.bf16.mxu0 %v2855
    %4086 = vmatpush1.bf16.msra.mxu0 %v2854
    %4087 = vmatprep.subr.bf16.mxu0 %v2871
    %4088 = vmatpush1.bf16.msra.mxu0 %v2870
    %4089 = vmatprep.subr.bf16.mxu0 %v2887
    %4090 = vmatpush1.bf16.msra.mxu0 %v2886
    %4091 = vmatprep.subr.bf16.mxu0 %v2903
    %4092 = vmatpush1.bf16.msra.mxu0 %v2902
    %4093 = vmatprep.subr.bf16.mxu0 %v2919
    %4094 = vmatpush1.bf16.msra.mxu0 %v2918
    %4095 = vmatprep.subr.bf16.mxu0 %v2935
    %4096 = vmatpush1.bf16.msra.mxu0 %v2934
    %4097 = vmatprep.subr.bf16.mxu0 %v2951
    %4098 = vmatpush1.bf16.msra.mxu0 %v2950
    %4099 = vmatprep.subr.bf16.mxu0 %v2967
    %4100 = vmatpush1.bf16.msra.mxu0 %v2966
    %4101 = vmatprep.subr.bf16.mxu0 %v2983
    %4102 = vmatpush1.bf16.msra.mxu0 %v2982
    %4103 = vmatprep.subr.bf16.mxu0 %v2999
    %4104 = vmatpush1.bf16.msra.mxu0 %v2998
    %4105 = vmatprep.mubr.bf16.mxu0 %v441
    %4106 = vmatmul.mubr.bf16.gmra.mrb[0].mxu0 %v440
    %v4107 = vpop.f32.mrb[0].mxu0
    %v4108 = vadd.f32 %v4065, %v4107
    %v4109 = vpop.f32.mrb[0].mxu0
    %v4110 = vadd.f32 %v4067, %v4109
    %v4111 = vpop.f32.mrb[0].mxu0
    %v4112 = vadd.f32 %v4069, %v4111
    %v4113 = vpop.f32.mrb[0].mxu0
    %v4114 = vadd.f32 %v4071, %v4113
    %4115 = vdwg.mxu0
    %4116 = vmatprep.subr.bf16.mxu0 %v2505
    %4117 = vmatpush1.bf16.msra.mxu0 %v2504
    %4118 = vmatprep.subr.bf16.mxu0 %v2521
    %4119 = vmatpush1.bf16.msra.mxu0 %v2520
    %4120 = vmatprep.subr.bf16.mxu0 %v2537
    %4121 = vmatpush1.bf16.msra.mxu0 %v2536
    %4122 = vmatprep.subr.bf16.mxu0 %v2553
    %4123 = vmatpush1.bf16.msra.mxu0 %v2552
    %4124 = vmatprep.subr.bf16.mxu0 %v2569
    %4125 = vmatpush1.bf16.msra.mxu0 %v2568
    %4126 = vmatprep.subr.bf16.mxu0 %v2585
    %4127 = vmatpush1.bf16.msra.mxu0 %v2584
    %4128 = vmatprep.subr.bf16.mxu0 %v2601
    %4129 = vmatpush1.bf16.msra.mxu0 %v2600
    %4130 = vmatprep.subr.bf16.mxu0 %v2617
    %4131 = vmatpush1.bf16.msra.mxu0 %v2616
    %4132 = vmatprep.subr.bf16.mxu0 %v2633
    %4133 = vmatpush1.bf16.msra.mxu0 %v2632
    %4134 = vmatprep.subr.bf16.mxu0 %v2649
    %4135 = vmatpush1.bf16.msra.mxu0 %v2648
    %4136 = vmatprep.subr.bf16.mxu0 %v2665
    %4137 = vmatpush1.bf16.msra.mxu0 %v2664
    %4138 = vmatprep.subr.bf16.mxu0 %v2681
    %4139 = vmatpush1.bf16.msra.mxu0 %v2680
    %4140 = vmatprep.subr.bf16.mxu0 %v2697
    %4141 = vmatpush1.bf16.msra.mxu0 %v2696
    %4142 = vmatprep.subr.bf16.mxu0 %v2713
    %4143 = vmatpush1.bf16.msra.mxu0 %v2712
    %4144 = vmatprep.subr.bf16.mxu0 %v2729
    %4145 = vmatpush1.bf16.msra.mxu0 %v2728
    %4146 = vmatprep.subr.bf16.mxu0 %v2745
    %4147 = vmatpush1.bf16.msra.mxu0 %v2744
    %4148 = vmatprep.mubr.bf16.mxu0 %v439
    %4149 = vmatmul.mubr.bf16.gmra.mrb[0].mxu0 %v438
    %v4150 = vpop.f32.mrb[0].mxu0
    %v4151 = vadd.f32 0.0, %v4150
    %v4152 = vpop.f32.mrb[0].mxu0
    %v4153 = vadd.f32 0.0, %v4152
    %v4154 = vpop.f32.mrb[0].mxu0
    %v4155 = vadd.f32 0.0, %v4154
    %v4156 = vpop.f32.mrb[0].mxu0
    %v4157 = vadd.f32 0.0, %v4156
    %4158 = vdwg.mxu0
    %4159 = vmatprep.subr.bf16.mxu0 %v2761
    %4160 = vmatpush1.bf16.msra.mxu0 %v2760
    %4161 = vmatprep.subr.bf16.mxu0 %v2777
    %4162 = vmatpush1.bf16.msra.mxu0 %v2776
    %4163 = vmatprep.subr.bf16.mxu0 %v2793
    %4164 = vmatpush1.bf16.msra.mxu0 %v2792
    %4165 = vmatprep.subr.bf16.mxu0 %v2809
    %4166 = vmatpush1.bf16.msra.mxu0 %v2808
    %4167 = vmatprep.subr.bf16.mxu0 %v2825
    %4168 = vmatpush1.bf16.msra.mxu0 %v2824
    %4169 = vmatprep.subr.bf16.mxu0 %v2841
    %4170 = vmatpush1.bf16.msra.mxu0 %v2840
    %4171 = vmatprep.subr.bf16.mxu0 %v2857
    %4172 = vmatpush1.bf16.msra.mxu0 %v2856
    %4173 = vmatprep.subr.bf16.mxu0 %v2873
    %4174 = vmatpush1.bf16.msra.mxu0 %v2872
    %4175 = vmatprep.subr.bf16.mxu0 %v2889
    %4176 = vmatpush1.bf16.msra.mxu0 %v2888
    %4177 = vmatprep.subr.bf16.mxu0 %v2905
    %4178 = vmatpush1.bf16.msra.mxu0 %v2904
    %4179 = vmatprep.subr.bf16.mxu0 %v2921
    %4180 = vmatpush1.bf16.msra.mxu0 %v2920
    %4181 = vmatprep.subr.bf16.mxu0 %v2937
    %4182 = vmatpush1.bf16.msra.mxu0 %v2936
    %4183 = vmatprep.subr.bf16.mxu0 %v2953
    %4184 = vmatpush1.bf16.msra.mxu0 %v2952
    %4185 = vmatprep.subr.bf16.mxu0 %v2969
    %4186 = vmatpush1.bf16.msra.mxu0 %v2968
    %4187 = vmatprep.subr.bf16.mxu0 %v2985
    %4188 = vmatpush1.bf16.msra.mxu0 %v2984
    %4189 = vmatprep.subr.bf16.mxu0 %v3001
    %4190 = vmatpush1.bf16.msra.mxu0 %v3000
    %4191 = vmatprep.mubr.bf16.mxu0 %v441
    %4192 = vmatmul.mubr.bf16.gmra.mrb[0].mxu0 %v440
    %v4193 = vpop.f32.mrb[0].mxu0
    %v4194 = vadd.f32 %v4151, %v4193
    %v4195 = vpop.f32.mrb[0].mxu0
    %v4196 = vadd.f32 %v4153, %v4195
    %v4197 = vpop.f32.mrb[0].mxu0
    %v4198 = vadd.f32 %v4155, %v4197
    %v4199 = vpop.f32.mrb[0].mxu0
    %v4200 = vadd.f32 %v4157, %v4199
    %4201 = vdwg.mxu0
    %v4202 = vpack.c.bf16 %v3596, %v3592
    %v4203 = vpack.c.bf16 %v3598, %v3594
    %v4204 = vpack.c.bf16 %v3682, %v3678
    %v4205 = vpack.c.bf16 %v3684, %v3680
    %v4206 = vpack.c.bf16 %v3768, %v3764
    %v4207 = vpack.c.bf16 %v3770, %v3766
    %v4208 = vpack.c.bf16 %v3854, %v3850
    %v4209 = vpack.c.bf16 %v3856, %v3852
    %v4210 = vpack.c.bf16 %v3940, %v3936
    %v4211 = vpack.c.bf16 %v3942, %v3938
    %v4212 = vpack.c.bf16 %v4026, %v4022
    %v4213 = vpack.c.bf16 %v4028, %v4024
    %v4214 = vpack.c.bf16 %v4112, %v4108
    %v4215 = vpack.c.bf16 %v4114, %v4110
    %v4216 = vpack.c.bf16 %v4198, %v4194
    %v4217 = vpack.c.bf16 %v4200, %v4196
    %v4218 = vld [vmem:[%s5] sm:$0xff]
    %v4219 = vld [vmem:[%s5 + $0x8] sm:$0xff]
    %v4220 = vld [vmem:[%s5 + $0x10] sm:$0xff]
    %v4221 = vld [vmem:[%s5 + $0x18] sm:$0xff]
    %v4226 = vunpack.c.l.b16 %v4218
    %v4227 = vunpack.c.h.b16 %v4218
    %v4228 = vunpack.c.l.b16 %v4219
    %v4229 = vunpack.c.h.b16 %v4219
    %v4230 = vunpack.c.l.b16 %v4220
    %v4231 = vunpack.c.h.b16 %v4220
    %v4232 = vunpack.c.l.b16 %v4221
    %v4233 = vunpack.c.h.b16 %v4221
    %v4234 = vpack.c.b16 %v4228, %v4226
    %v4235 = vpack.c.b16 %v4229, %v4227
    %v4236 = vpack.c.b16 %v4232, %v4230
    %v4237 = vpack.c.b16 %v4233, %v4231
    %4242 = vmatprep.subr.bf16.mxu0 0
    %4243 = vmatpush1.bf16.msra.mxu0 %v4202
    %4244 = vmatprep.subr.bf16.mxu0 0
    %4245 = vmatpush1.bf16.msra.mxu0 %v4203
    %4246 = vmatprep.subr.bf16.mxu0 0
    %4247 = vmatpush1.bf16.msra.mxu0 %v4204
    %4248 = vmatprep.subr.bf16.mxu0 0
    %4249 = vmatpush1.bf16.msra.mxu0 %v4205
    %4250 = vmatprep.subr.bf16.mxu0 0
    %4251 = vmatpush1.bf16.msra.mxu0 %v4206
    %4252 = vmatprep.subr.bf16.mxu0 0
    %4253 = vmatpush1.bf16.msra.mxu0 %v4207
    %4254 = vmatprep.subr.bf16.mxu0 0
    %4255 = vmatpush1.bf16.msra.mxu0 %v4208
    %4256 = vmatprep.subr.bf16.mxu0 0
    %4257 = vmatpush1.bf16.msra.mxu0 %v4209
    %4258 = vmatprep.subr.bf16.mxu0 0
    %4259 = vmatpush1.bf16.msra.mxu0 %v4210
    %4260 = vmatprep.subr.bf16.mxu0 0
    %4261 = vmatpush1.bf16.msra.mxu0 %v4211
    %4262 = vmatprep.subr.bf16.mxu0 0
    %4263 = vmatpush1.bf16.msra.mxu0 %v4212
    %4264 = vmatprep.subr.bf16.mxu0 0
    %4265 = vmatpush1.bf16.msra.mxu0 %v4213
    %4266 = vmatprep.subr.bf16.mxu0 0
    %4267 = vmatpush1.bf16.msra.mxu0 %v4214
    %4268 = vmatprep.subr.bf16.mxu0 0
    %4269 = vmatpush1.bf16.msra.mxu0 %v4215
    %4270 = vmatprep.subr.bf16.mxu0 0
    %4271 = vmatpush1.bf16.msra.mxu0 %v4216
    %4272 = vmatprep.subr.bf16.mxu0 0
    %4273 = vmatpush1.bf16.msra.mxu0 %v4217
    %4274 = vmatprep.mubr.bf16.mxu0 %v4235
    %4275 = vmatmul.mubr.bf16.gmra.mrb[0].mxu0 %v4234
    %v4276 = vpop.f32.mrb[0].mxu0
    %v4277 = vadd.f32 0.0, %v4276
    %v4278 = vpop.f32.mrb[0].mxu0
    %v4279 = vpop.f32.mrb[0].mxu0
    %v4280 = vadd.f32 0.0, %v4279
    %v4281 = vpop.f32.mrb[0].mxu0
    %4282 = vmatprep.mubr.bf16.mxu0 %v4237
    %4283 = vmatmul.mubr.bf16.gmra.mrb[0].mxu0 %v4236
    %v4284 = vpop.f32.mrb[0].mxu0
    %v4285 = vadd.f32 0.0, %v4284
    %v4286 = vpop.f32.mrb[0].mxu0
    %v4287 = vpop.f32.mrb[0].mxu0
    %v4288 = vadd.f32 0.0, %v4287
    %v4289 = vpop.f32.mrb[0].mxu0
    %4290 = vdwg.mxu0
    %v4291 = vld [vmem:[%s6] sm:$0xff]
    %v4292 = vld [vmem:[%s6 + $0x8] sm:$0xff]
    %v4293 = vld [vmem:[%s6 + $0x10] sm:$0xff]
    %v4294 = vld [vmem:[%s6 + $0x18] sm:$0xff]
    %v4295 = vld [vmem:[%s7] sm:$0xff]
    %v4296 = vld [vmem:[%s7 + $0x8] sm:$0xff]
    %v4297 = vld [vmem:[%s7 + $0x10] sm:$0xff]
    %v4298 = vld [vmem:[%s7 + $0x18] sm:$0xff]
    %4299 = vadd.xlane.f32.xlu0 %v4277
    %v4300 = vpop.xlane.xlu0 %4299
    %4301 = vadd.xlane.f32.xlu0 %v4280
    %v4302 = vpop.xlane.xlu0 %4301
    %4303 = vadd.xlane.f32.xlu0 %v4285
    %v4304 = vpop.xlane.xlu0 %4303
    %4305 = vadd.xlane.f32.xlu0 %v4288
    %v4306 = vpop.xlane.xlu0 %4305
    %v4307 = vmul.f32 %v4300, 0.0078125
    %v4308 = vmul.f32 %v4302, 0.0078125
    %v4309 = vmul.f32 %v4304, 0.0078125
    %v4310 = vmul.f32 %v4306, 0.0078125
    %v4311 = vmul.f32 %v4277, %v4277
    %v4312 = vmul.f32 %v4280, %v4280
    %v4313 = vmul.f32 %v4285, %v4285
    %v4314 = vmul.f32 %v4288, %v4288
    %4315 = vadd.xlane.f32.xlu0 %v4311
    %v4316 = vpop.xlane.xlu0 %4315
    %4317 = vadd.xlane.f32.xlu0 %v4312
    %v4318 = vpop.xlane.xlu0 %4317
    %4319 = vadd.xlane.f32.xlu0 %v4313
    %v4320 = vpop.xlane.xlu0 %4319
    %4321 = vadd.xlane.f32.xlu0 %v4314
    %v4322 = vpop.xlane.xlu0 %4321
    %v4323 = vmul.f32 %v4316, 0.0078125
    %v4324 = vmul.f32 %v4318, 0.0078125
    %v4325 = vmul.f32 %v4320, 0.0078125
    %v4326 = vmul.f32 %v4322, 0.0078125
    %v4327 = vmul.f32 %v4307, %v4307
    %v4328 = vmul.f32 %v4308, %v4308
    %v4329 = vmul.f32 %v4309, %v4309
    %v4330 = vmul.f32 %v4310, %v4310
    %v4331 = vsub.f32 %v4323, %v4327
    %v4332 = vsub.f32 %v4324, %v4328
    %v4333 = vsub.f32 %v4325, %v4329
    %v4334 = vsub.f32 %v4326, %v4330
    %v4335 = vsub.f32 %v4277, %v4307
    %v4336 = vsub.f32 %v4280, %v4308
    %v4337 = vsub.f32 %v4285, %v4309
    %v4338 = vsub.f32 %v4288, %v4310
    %v4339 = vadd.f32 %v4331, 1e-05
    %v4340 = vadd.f32 %v4332, 1e-05
    %v4341 = vadd.f32 %v4333, 1e-05
    %v4342 = vadd.f32 %v4334, 1e-05
    %v4343 = vrsqrt.pop %v4339
    %v4344 = vrsqrt.pop %v4340
    %v4345 = vrsqrt.pop %v4341
    %v4346 = vrsqrt.pop %v4342
    %v4347 = vmul.f32 %v4291, %v4343
    %v4348 = vmul.f32 %v4292, %v4344
    %v4349 = vmul.f32 %v4293, %v4345
    %v4350 = vmul.f32 %v4294, %v4346
    %4352 = vset.pattern.permute.xlu0 0
    %4353 = vperm.xlu0 %4352, %v4347
    %v4354 = vpop.permute.xlu0 %4353
    %4357 = vset.pattern.permute.xlu0 0
    %4358 = vperm.xlu0 %4357, %v4348
    %v4359 = vpop.permute.xlu0 %4358
    %4362 = vset.pattern.permute.xlu0 0
    %4363 = vperm.xlu0 %4362, %v4349
    %v4364 = vpop.permute.xlu0 %4363
    %4367 = vset.pattern.permute.xlu0 0
    %4368 = vperm.xlu0 %4367, %v4350
    %v4369 = vpop.permute.xlu0 %4368
    %v4371 = vmul.f32 %v4335, %v4354
    %v4372 = vmul.f32 %v4336, %v4359
    %v4373 = vmul.f32 %v4337, %v4364
    %v4374 = vmul.f32 %v4338, %v4369
    %4376 = vset.pattern.permute.xlu0 0
    %4377 = vperm.xlu0 %4376, %v4295
    %v4378 = vpop.permute.xlu0 %4377
    %4381 = vset.pattern.permute.xlu0 0
    %4382 = vperm.xlu0 %4381, %v4296
    %v4383 = vpop.permute.xlu0 %4382
    %4386 = vset.pattern.permute.xlu0 0
    %4387 = vperm.xlu0 %4386, %v4297
    %v4388 = vpop.permute.xlu0 %4387
    %4391 = vset.pattern.permute.xlu0 0
    %4392 = vperm.xlu0 %4391, %v4298
    %v4393 = vpop.permute.xlu0 %4392
    %v4395 = vadd.f32 %v4371, %v4378
    %v4396 = vadd.f32 %v4372, %v4383
    %v4397 = vadd.f32 %v4373, %v4388
    %v4398 = vadd.f32 %v4374, %v4393
    %v4399 = vmul.f32 %v4395, 0.2
    %v4400 = vmul.f32 %v4396, 0.2
    %v4401 = vmul.f32 %v4397, 0.2
    %v4402 = vmul.f32 %v4398, 0.2
    %v4403 = vmax.f32 %v4395, %v4399
    %v4404 = vmax.f32 %v4396, %v4400
    %v4405 = vmax.f32 %v4397, %v4401
    %v4406 = vmax.f32 %v4398, %v4402
    %v4407 = vpack.c.bf16 %v4404, %v4403
    %v4408 = vpack.c.bf16 %v4406, %v4405
    %v4409 = vld [vmem:[%s8] sm:$0xff]
    %v4410 = vld [vmem:[%s8 + $0x8] sm:$0xff]
    %v4411 = vld [vmem:[%s8 + $0x10] sm:$0xff]
    %v4412 = vld [vmem:[%s8 + $0x18] sm:$0xff]
    %v4413 = vld [vmem:[%s8 + $0x20] sm:$0xff]
    %v4414 = vld [vmem:[%s8 + $0x28] sm:$0xff]
    %v4415 = vld [vmem:[%s8 + $0x30] sm:$0xff]
    %v4416 = vld [vmem:[%s8 + $0x38] sm:$0xff]
    %v4417 = vld [vmem:[%s8 + $0x40] sm:$0xff]
    %v4418 = vld [vmem:[%s8 + $0x48] sm:$0xff]
    %v4419 = vld [vmem:[%s8 + $0x50] sm:$0xff]
    %v4420 = vld [vmem:[%s8 + $0x58] sm:$0xff]
    %v4421 = vld [vmem:[%s8 + $0x60] sm:$0xff]
    %v4422 = vld [vmem:[%s8 + $0x68] sm:$0xff]
    %v4423 = vld [vmem:[%s8 + $0x70] sm:$0xff]
    %v4424 = vld [vmem:[%s8 + $0x78] sm:$0xff]
    %v4425 = vld [vmem:[%s8 + $0x80] sm:$0xff]
    %v4426 = vld [vmem:[%s8 + $0x88] sm:$0xff]
    %v4427 = vld [vmem:[%s8 + $0x90] sm:$0xff]
    %v4428 = vld [vmem:[%s8 + $0x98] sm:$0xff]
    %v4429 = vld [vmem:[%s8 + $0xa0] sm:$0xff]
    %v4430 = vld [vmem:[%s8 + $0xa8] sm:$0xff]
    %v4431 = vld [vmem:[%s8 + $0xb0] sm:$0xff]
    %v4432 = vld [vmem:[%s8 + $0xb8] sm:$0xff]
    %v4433 = vld [vmem:[%s8 + $0xc0] sm:$0xff]
    %v4434 = vld [vmem:[%s8 + $0xc8] sm:$0xff]
    %v4435 = vld [vmem:[%s8 + $0xd0] sm:$0xff]
    %v4436 = vld [vmem:[%s8 + $0xd8] sm:$0xff]
    %v4437 = vld [vmem:[%s8 + $0xe0] sm:$0xff]
    %v4438 = vld [vmem:[%s8 + $0xe8] sm:$0xff]
    %v4439 = vld [vmem:[%s8 + $0xf0] sm:$0xff]
    %v4440 = vld [vmem:[%s8 + $0xf8] sm:$0xff]
    %v4473 = vunpack.c.l.b16 %v4409
    %v4474 = vunpack.c.h.b16 %v4409
    %v4475 = vunpack.c.l.b16 %v4410
    %v4476 = vunpack.c.h.b16 %v4410
    %v4477 = vunpack.c.l.b16 %v4411
    %v4478 = vunpack.c.h.b16 %v4411
    %v4479 = vunpack.c.l.b16 %v4412
    %v4480 = vunpack.c.h.b16 %v4412
    %v4481 = vunpack.c.l.b16 %v4413
    %v4482 = vunpack.c.h.b16 %v4413
    %v4483 = vunpack.c.l.b16 %v4414
    %v4484 = vunpack.c.h.b16 %v4414
    %v4485 = vunpack.c.l.b16 %v4415
    %v4486 = vunpack.c.h.b16 %v4415
    %v4487 = vunpack.c.l.b16 %v4416
    %v4488 = vunpack.c.h.b16 %v4416
    %v4489 = vunpack.c.l.b16 %v4417
    %v4490 = vunpack.c.h.b16 %v4417
    %v4491 = vunpack.c.l.b16 %v4418
    %v4492 = vunpack.c.h.b16 %v4418
    %v4493 = vunpack.c.l.b16 %v4419
    %v4494 = vunpack.c.h.b16 %v4419
    %v4495 = vunpack.c.l.b16 %v4420
    %v4496 = vunpack.c.h.b16 %v4420
    %v4497 = vunpack.c.l.b16 %v4421
    %v4498 = vunpack.c.h.b16 %v4421
    %v4499 = vunpack.c.l.b16 %v4422
    %v4500 = vunpack.c.h.b16 %v4422
    %v4501 = vunpack.c.l.b16 %v4423
    %v4502 = vunpack.c.h.b16 %v4423
    %v4503 = vunpack.c.l.b16 %v4424
    %v4504 = vunpack.c.h.b16 %v4424
    %v4505 = vunpack.c.l.b16 %v4425
    %v4506 = vunpack.c.h.b16 %v4425
    %v4507 = vunpack.c.l.b16 %v4426
    %v4508 = vunpack.c.h.b16 %v4426
    %v4509 = vunpack.c.l.b16 %v4427
    %v4510 = vunpack.c.h.b16 %v4427
    %v4511 = vunpack.c.l.b16 %v4428
    %v4512 = vunpack.c.h.b16 %v4428
    %v4513 = vunpack.c.l.b16 %v4429
    %v4514 = vunpack.c.h.b16 %v4429
    %v4515 = vunpack.c.l.b16 %v4430
    %v4516 = vunpack.c.h.b16 %v4430
    %v4517 = vunpack.c.l.b16 %v4431
    %v4518 = vunpack.c.h.b16 %v4431
    %v4519 = vunpack.c.l.b16 %v4432
    %v4520 = vunpack.c.h.b16 %v4432
    %v4521 = vunpack.c.l.b16 %v4433
    %v4522 = vunpack.c.h.b16 %v4433
    %v4523 = vunpack.c.l.b16 %v4434
    %v4524 = vunpack.c.h.b16 %v4434
    %v4525 = vunpack.c.l.b16 %v4435
    %v4526 = vunpack.c.h.b16 %v4435
    %v4527 = vunpack.c.l.b16 %v4436
    %v4528 = vunpack.c.h.b16 %v4436
    %v4529 = vunpack.c.l.b16 %v4437
    %v4530 = vunpack.c.h.b16 %v4437
    %v4531 = vunpack.c.l.b16 %v4438
    %v4532 = vunpack.c.h.b16 %v4438
    %v4533 = vunpack.c.l.b16 %v4439
    %v4534 = vunpack.c.h.b16 %v4439
    %v4535 = vunpack.c.l.b16 %v4440
    %v4536 = vunpack.c.h.b16 %v4440
    %v4537 = vpack.c.b16 %v4477, %v4473
    %v4538 = vpack.c.b16 %v4478, %v4474
    %v4539 = vpack.c.b16 %v4479, %v4475
    %v4540 = vpack.c.b16 %v4480, %v4476
    %v4541 = vpack.c.b16 %v4485, %v4481
    %v4542 = vpack.c.b16 %v4486, %v4482
    %v4543 = vpack.c.b16 %v4487, %v4483
    %v4544 = vpack.c.b16 %v4488, %v4484
    %v4545 = vpack.c.b16 %v4493, %v4489
    %v4546 = vpack.c.b16 %v4494, %v4490
    %v4547 = vpack.c.b16 %v4495, %v4491
    %v4548 = vpack.c.b16 %v4496, %v4492
    %v4549 = vpack.c.b16 %v4501, %v4497
    %v4550 = vpack.c.b16 %v4502, %v4498
    %v4551 = vpack.c.b16 %v4503, %v4499
    %v4552 = vpack.c.b16 %v4504, %v4500
    %v4553 = vpack.c.b16 %v4509, %v4505
    %v4554 = vpack.c.b16 %v4510, %v4506
    %v4555 = vpack.c.b16 %v4511, %v4507
    %v4556 = vpack.c.b16 %v4512, %v4508
    %v4557 = vpack.c.b16 %v4517, %v4513
    %v4558 = vpack.c.b16 %v4518, %v4514
    %v4559 = vpack.c.b16 %v4519, %v4515
    %v4560 = vpack.c.b16 %v4520, %v4516
    %v4561 = vpack.c.b16 %v4525, %v4521
    %v4562 = vpack.c.b16 %v4526, %v4522
    %v4563 = vpack.c.b16 %v4527, %v4523
    %v4564 = vpack.c.b16 %v4528, %v4524
    %v4565 = vpack.c.b16 %v4533, %v4529
    %v4566 = vpack.c.b16 %v4534, %v4530
    %v4567 = vpack.c.b16 %v4535, %v4531
    %v4568 = vpack.c.b16 %v4536, %v4532
    %4601 = vmatprep.subr.bf16.mxu0 %v4538
    %4602 = vmatpush1.bf16.msra.mxu0 %v4537
    %4603 = vmatprep.subr.bf16.mxu0 %v4542
    %4604 = vmatpush1.bf16.msra.mxu0 %v4541
    %4605 = vmatprep.subr.bf16.mxu0 %v4546
    %4606 = vmatpush1.bf16.msra.mxu0 %v4545
    %4607 = vmatprep.subr.bf16.mxu0 %v4550
    %4608 = vmatpush1.bf16.msra.mxu0 %v4549
    %4609 = vmatprep.subr.bf16.mxu0 %v4554
    %4610 = vmatpush1.bf16.msra.mxu0 %v4553
    %4611 = vmatprep.subr.bf16.mxu0 %v4558
    %4612 = vmatpush1.bf16.msra.mxu0 %v4557
    %4613 = vmatprep.subr.bf16.mxu0 %v4562
    %4614 = vmatpush1.bf16.msra.mxu0 %v4561
    %4615 = vmatprep.subr.bf16.mxu0 %v4566
    %4616 = vmatpush1.bf16.msra.mxu0 %v4565
    %4617 = vmatprep.subr.bf16.mxu0 0
    %4618 = vmatpush1.bf16.msra.mxu0 0
    %4619 = vmatprep.subr.bf16.mxu0 0
    %4620 = vmatpush1.bf16.msra.mxu0 0
    %4621 = vmatprep.subr.bf16.mxu0 0
    %4622 = vmatpush1.bf16.msra.mxu0 0
    %4623 = vmatprep.subr.bf16.mxu0 0
    %4624 = vmatpush1.bf16.msra.mxu0 0
    %4625 = vmatprep.subr.bf16.mxu0 0
    %4626 = vmatpush1.bf16.msra.mxu0 0
    %4627 = vmatprep.subr.bf16.mxu0 0
    %4628 = vmatpush1.bf16.msra.mxu0 0
    %4629 = vmatprep.subr.bf16.mxu0 0
    %4630 = vmatpush1.bf16.msra.mxu0 0
    %4631 = vmatprep.subr.bf16.mxu0 0
    %4632 = vmatpush1.bf16.msra.mxu0 0
    %4633 = vmatprep.mubr.bf16.mxu0 0
    %4634 = vmatmul.mubr.bf16.gmra.mrb[0].mxu0 %v4407
    %v4635 = vpop.f32.mrb[0].mxu0
    %v4636 = vadd.f32 0.0, %v4635
    %v4637 = vpop.f32.mrb[0].mxu0
    %v4638 = vadd.f32 0.0, %v4637
    %v4639 = vpop.f32.mrb[0].mxu0
    %v4640 = vadd.f32 0.0, %v4639
    %v4641 = vpop.f32.mrb[0].mxu0
    %v4642 = vadd.f32 0.0, %v4641
    %4643 = vmatprep.mubr.bf16.mxu0 0
    %4644 = vmatmul.mubr.bf16.gmra.mrb[0].mxu0 %v4408
    %v4645 = vpop.f32.mrb[0].mxu0
    %v4646 = vadd.f32 0.0, %v4645
    %v4647 = vpop.f32.mrb[0].mxu0
    %v4648 = vadd.f32 0.0, %v4647
    %v4649 = vpop.f32.mrb[0].mxu0
    %v4650 = vadd.f32 0.0, %v4649
    %v4651 = vpop.f32.mrb[0].mxu0
    %v4652 = vadd.f32 0.0, %v4651
    %4653 = vdwg.mxu0
    %4654 = vmatprep.subr.bf16.mxu0 %v4540
    %4655 = vmatpush1.bf16.msra.mxu0 %v4539
    %4656 = vmatprep.subr.bf16.mxu0 %v4544
    %4657 = vmatpush1.bf16.msra.mxu0 %v4543
    %4658 = vmatprep.subr.bf16.mxu0 %v4548
    %4659 = vmatpush1.bf16.msra.mxu0 %v4547
    %4660 = vmatprep.subr.bf16.mxu0 %v4552
    %4661 = vmatpush1.bf16.msra.mxu0 %v4551
    %4662 = vmatprep.subr.bf16.mxu0 %v4556
    %4663 = vmatpush1.bf16.msra.mxu0 %v4555
    %4664 = vmatprep.subr.bf16.mxu0 %v4560
    %4665 = vmatpush1.bf16.msra.mxu0 %v4559
    %4666 = vmatprep.subr.bf16.mxu0 %v4564
    %4667 = vmatpush1.bf16.msra.mxu0 %v4563
    %4668 = vmatprep.subr.bf16.mxu0 %v4568
    %4669 = vmatpush1.bf16.msra.mxu0 %v4567
    %4670 = vmatprep.subr.bf16.mxu0 0
    %4671 = vmatpush1.bf16.msra.mxu0 0
    %4672 = vmatprep.subr.bf16.mxu0 0
    %4673 = vmatpush1.bf16.msra.mxu0 0
    %4674 = vmatprep.subr.bf16.mxu0 0
    %4675 = vmatpush1.bf16.msra.mxu0 0
    %4676 = vmatprep.subr.bf16.mxu0 0
    %4677 = vmatpush1.bf16.msra.mxu0 0
    %4678 = vmatprep.subr.bf16.mxu0 0
    %4679 = vmatpush1.bf16.msra.mxu0 0
    %4680 = vmatprep.subr.bf16.mxu0 0
    %4681 = vmatpush1.bf16.msra.mxu0 0
    %4682 = vmatprep.subr.bf16.mxu0 0
    %4683 = vmatpush1.bf16.msra.mxu0 0
    %4684 = vmatprep.subr.bf16.mxu0 0
    %4685 = vmatpush1.bf16.msra.mxu0 0
    %4686 = vmatprep.mubr.bf16.mxu0 0
    %4687 = vmatmul.mubr.bf16.gmra.mrb[0].mxu0 %v4407
    %v4688 = vpop.f32.mrb[0].mxu0
    %v4689 = vadd.f32 0.0, %v4688
    %v4690 = vpop.f32.mrb[0].mxu0
    %v4691 = vadd.f32 0.0, %v4690
    %v4692 = vpop.f32.mrb[0].mxu0
    %v4693 = vadd.f32 0.0, %v4692
    %v4694 = vpop.f32.mrb[0].mxu0
    %v4695 = vadd.f32 0.0, %v4694
    %4696 = vmatprep.mubr.bf16.mxu0 0
    %4697 = vmatmul.mubr.bf16.gmra.mrb[0].mxu0 %v4408
    %v4698 = vpop.f32.mrb[0].mxu0
    %v4699 = vadd.f32 0.0, %v4698
    %v4700 = vpop.f32.mrb[0].mxu0
    %v4701 = vadd.f32 0.0, %v4700
    %v4702 = vpop.f32.mrb[0].mxu0
    %v4703 = vadd.f32 0.0, %v4702
    %v4704 = vpop.f32.mrb[0].mxu0
    %v4705 = vadd.f32 0.0, %v4704
    %4706 = vdwg.mxu0
    %v4707 = vpack.c.bf16 %v4640, %v4636
    %v4708 = vpack.c.bf16 %v4642, %v4638
    %v4709 = vpack.c.bf16 %v4693, %v4689
    %v4710 = vpack.c.bf16 %v4695, %v4691
    %v4711 = vpack.c.bf16 %v4650, %v4646
    %v4712 = vpack.c.bf16 %v4652, %v4648
    %v4713 = vpack.c.bf16 %v4703, %v4699
    %v4714 = vpack.c.bf16 %v4705, %v4701
    %4717 = vrot.lane.b32.xlu0 %v4707, 96
    %v4718 = vpop.permute.xlu0 %4717
    %4719 = vrot.lane.b32.xlu0 %v4711, 96
    %v4720 = vpop.permute.xlu0 %4719
    %4723 = vrot.lane.b32.xlu0 %v4707, 64
    %v4724 = vpop.permute.xlu0 %4723
    %4725 = vrot.lane.b32.xlu0 %v4711, 64
    %v4726 = vpop.permute.xlu0 %4725
    %4729 = vrot.lane.b32.xlu0 %v4707, 32
    %v4730 = vpop.permute.xlu0 %4729
    %4731 = vrot.lane.b32.xlu0 %v4711, 32
    %v4732 = vpop.permute.xlu0 %4731
    %4737 = vrot.lane.b32.xlu0 %v4708, 96
    %v4738 = vpop.permute.xlu0 %4737
    %4739 = vrot.lane.b32.xlu0 %v4712, 96
    %v4740 = vpop.permute.xlu0 %4739
    %4743 = vrot.lane.b32.xlu0 %v4708, 64
    %v4744 = vpop.permute.xlu0 %4743
    %4745 = vrot.lane.b32.xlu0 %v4712, 64
    %v4746 = vpop.permute.xlu0 %4745
    %4749 = vrot.lane.b32.xlu0 %v4708, 32
    %v4750 = vpop.permute.xlu0 %4749
    %4751 = vrot.lane.b32.xlu0 %v4712, 32
    %v4752 = vpop.permute.xlu0 %4751
    %4757 = vrot.lane.b32.xlu0 %v4709, 96
    %v4758 = vpop.permute.xlu0 %4757
    %4759 = vrot.lane.b32.xlu0 %v4713, 96
    %v4760 = vpop.permute.xlu0 %4759
    %4763 = vrot.lane.b32.xlu0 %v4709, 64
    %v4764 = vpop.permute.xlu0 %4763
    %4765 = vrot.lane.b32.xlu0 %v4713, 64
    %v4766 = vpop.permute.xlu0 %4765
    %4769 = vrot.lane.b32.xlu0 %v4709, 32
    %v4770 = vpop.permute.xlu0 %4769
    %4771 = vrot.lane.b32.xlu0 %v4713, 32
    %v4772 = vpop.permute.xlu0 %4771
    %4777 = vrot.lane.b32.xlu0 %v4710, 96
    %v4778 = vpop.permute.xlu0 %4777
    %4779 = vrot.lane.b32.xlu0 %v4714, 96
    %v4780 = vpop.permute.xlu0 %4779
    %4783 = vrot.lane.b32.xlu0 %v4710, 64
    %v4784 = vpop.permute.xlu0 %4783
    %4785 = vrot.lane.b32.xlu0 %v4714, 64
    %v4786 = vpop.permute.xlu0 %4785
    %4789 = vrot.lane.b32.xlu0 %v4710, 32
    %v4790 = vpop.permute.xlu0 %4789
    %4791 = vrot.lane.b32.xlu0 %v4714, 32
    %v4792 = vpop.permute.xlu0 %4791
    %v4795 = vld [vmem:[%s9] sm:$0xff]
    %v4796 = vld [vmem:[%s9 + $0x8] sm:$0xff]
    %v4797 = vld [vmem:[%s9 + $0x10] sm:$0xff]
    %v4798 = vld [vmem:[%s9 + $0x18] sm:$0xff]
    %v4799 = vld [vmem:[%s9 + $0x20] sm:$0xff]
    %v4800 = vld [vmem:[%s9 + $0x28] sm:$0xff]
    %v4801 = vld [vmem:[%s9 + $0x30] sm:$0xff]
    %v4802 = vld [vmem:[%s9 + $0x38] sm:$0xff]
    %v4803 = vld [vmem:[%s9 + $0x40] sm:$0xff]
    %v4804 = vld [vmem:[%s9 + $0x48] sm:$0xff]
    %v4805 = vld [vmem:[%s9 + $0x50] sm:$0xff]
    %v4806 = vld [vmem:[%s9 + $0x58] sm:$0xff]
    %v4807 = vld [vmem:[%s9 + $0x60] sm:$0xff]
    %v4808 = vld [vmem:[%s9 + $0x68] sm:$0xff]
    %v4809 = vld [vmem:[%s9 + $0x70] sm:$0xff]
    %v4810 = vld [vmem:[%s9 + $0x78] sm:$0xff]
    %v4827 = vunpack.c.l.b16 %v4795
    %v4828 = vunpack.c.h.b16 %v4795
    %v4829 = vunpack.c.l.b16 %v4796
    %v4830 = vunpack.c.h.b16 %v4796
    %v4831 = vunpack.c.l.b16 %v4797
    %v4832 = vunpack.c.h.b16 %v4797
    %v4833 = vunpack.c.l.b16 %v4798
    %v4834 = vunpack.c.h.b16 %v4798
    %v4835 = vunpack.c.l.b16 %v4799
    %v4836 = vunpack.c.h.b16 %v4799
    %v4837 = vunpack.c.l.b16 %v4800
    %v4838 = vunpack.c.h.b16 %v4800
    %v4839 = vunpack.c.l.b16 %v4801
    %v4840 = vunpack.c.h.b16 %v4801
    %v4841 = vunpack.c.l.b16 %v4802
    %v4842 = vunpack.c.h.b16 %v4802
    %v4843 = vunpack.c.l.b16 %v4803
    %v4844 = vunpack.c.h.b16 %v4803
    %v4845 = vunpack.c.l.b16 %v4804
    %v4846 = vunpack.c.h.b16 %v4804
    %v4847 = vunpack.c.l.b16 %v4805
    %v4848 = vunpack.c.h.b16 %v4805
    %v4849 = vunpack.c.l.b16 %v4806
    %v4850 = vunpack.c.h.b16 %v4806
    %v4851 = vunpack.c.l.b16 %v4807
    %v4852 = vunpack.c.h.b16 %v4807
    %v4853 = vunpack.c.l.b16 %v4808
    %v4854 = vunpack.c.h.b16 %v4808
    %v4855 = vunpack.c.l.b16 %v4809
    %v4856 = vunpack.c.h.b16 %v4809
    %v4857 = vunpack.c.l.b16 %v4810
    %v4858 = vunpack.c.h.b16 %v4810
    %v4859 = vpack.c.b16 %v4831, %v4827
    %v4860 = vpack.c.b16 %v4832, %v4828
    %v4861 = vpack.c.b16 %v4833, %v4829
    %v4862 = vpack.c.b16 %v4834, %v4830
    %v4863 = vpack.c.b16 %v4839, %v4835
    %v4864 = vpack.c.b16 %v4840, %v4836
    %v4865 = vpack.c.b16 %v4841, %v4837
    %v4866 = vpack.c.b16 %v4842, %v4838
    %v4867 = vpack.c.b16 %v4847, %v4843
    %v4868 = vpack.c.b16 %v4848, %v4844
    %v4869 = vpack.c.b16 %v4849, %v4845
    %v4870 = vpack.c.b16 %v4850, %v4846
    %v4871 = vpack.c.b16 %v4855, %v4851
    %v4872 = vpack.c.b16 %v4856, %v4852
    %v4873 = vpack.c.b16 %v4857, %v4853
    %v4874 = vpack.c.b16 %v4858, %v4854
    %4891 = vmatprep.subr.bf16.mxu0 0
    %4892 = vmatpush1.bf16.msra.mxu0 %v4707
    %4893 = vmatprep.subr.bf16.mxu0 0
    %4894 = vmatpush1.bf16.msra.mxu0 %v4711
    %4895 = vmatprep.subr.bf16.mxu0 0
    %4896 = vmatpush1.bf16.msra.mxu0 %v4718
    %4897 = vmatprep.subr.bf16.mxu0 0
    %4898 = vmatpush1.bf16.msra.mxu0 %v4720
    %4899 = vmatprep.subr.bf16.mxu0 0
    %4900 = vmatpush1.bf16.msra.mxu0 %v4724
    %4901 = vmatprep.subr.bf16.mxu0 0
    %4902 = vmatpush1.bf16.msra.mxu0 %v4726
    %4903 = vmatprep.subr.bf16.mxu0 0
    %4904 = vmatpush1.bf16.msra.mxu0 %v4730
    %4905 = vmatprep.subr.bf16.mxu0 0
    %4906 = vmatpush1.bf16.msra.mxu0 %v4732
    %4907 = vmatprep.subr.bf16.mxu0 0
    %4908 = vmatpush1.bf16.msra.mxu0 %v4708
    %4909 = vmatprep.subr.bf16.mxu0 0
    %4910 = vmatpush1.bf16.msra.mxu0 %v4712
    %4911 = vmatprep.subr.bf16.mxu0 0
    %4912 = vmatpush1.bf16.msra.mxu0 %v4738
    %4913 = vmatprep.subr.bf16.mxu0 0
    %4914 = vmatpush1.bf16.msra.mxu0 %v4740
    %4915 = vmatprep.subr.bf16.mxu0 0
    %4916 = vmatpush1.bf16.msra.mxu0 %v4744
    %4917 = vmatprep.subr.bf16.mxu0 0
    %4918 = vmatpush1.bf16.msra.mxu0 %v4746
    %4919 = vmatprep.subr.bf16.mxu0 0
    %4920 = vmatpush1.bf16.msra.mxu0 %v4750
    %4921 = vmatprep.subr.bf16.mxu0 0
    %4922 = vmatpush1.bf16.msra.mxu0 %v4752
    %4923 = vmatprep.mubr.bf16.mxu0 %v4860
    %4924 = vmatmul.mubr.bf16.gmra.mrb[0].mxu0 %v4859
    %v4925 = vpop.f32.mrb[0].mxu0
    %v4926 = vadd.f32 0.0, %v4925
    %v4927 = vpop.f32.mrb[0].mxu0
    %v4928 = vpop.f32.mrb[0].mxu0
    %v4929 = vadd.f32 0.0, %v4928
    %v4930 = vpop.f32.mrb[0].mxu0
    %4931 = vmatprep.mubr.bf16.mxu0 %v4864
    %4932 = vmatmul.mubr.bf16.gmra.mrb[0].mxu0 %v4863
    %v4933 = vpop.f32.mrb[0].mxu0
    %v4934 = vadd.f32 0.0, %v4933
    %v4935 = vpop.f32.mrb[0].mxu0
    %v4936 = vpop.f32.mrb[0].mxu0
    %v4937 = vadd.f32 0.0, %v4936
    %v4938 = vpop.f32.mrb[0].mxu0
    %4939 = vmatprep.mubr.bf16.mxu0 %v4868
    %4940 = vmatmul.mubr.bf16.gmra.mrb[0].mxu0 %v4867
    %v4941 = vpop.f32.mrb[0].mxu0
    %v4942 = vadd.f32 0.0, %v4941
    %v4943 = vpop.f32.mrb[0].mxu0
    %v4944 = vpop.f32.mrb[0].mxu0
    %v4945 = vadd.f32 0.0, %v4944
    %v4946 = vpop.f32.mrb[0].mxu0
    %4947 = vmatprep.mubr.bf16.mxu0 %v4872
    %4948 = vmatmul.mubr.bf16.gmra.mrb[0].mxu0 %v4871
    %v4949 = vpop.f32.mrb[0].mxu0
    %v4950 = vadd.f32 0.0, %v4949
    %v4951 = vpop.f32.mrb[0].mxu0
    %v4952 = vpop.f32.mrb[0].mxu0
    %v4953 = vadd.f32 0.0, %v4952
    %v4954 = vpop.f32.mrb[0].mxu0
    %4955 = vdwg.mxu0
    %4956 = vmatprep.subr.bf16.mxu0 0
    %4957 = vmatpush1.bf16.msra.mxu0 %v4709
    %4958 = vmatprep.subr.bf16.mxu0 0
    %4959 = vmatpush1.bf16.msra.mxu0 %v4713
    %4960 = vmatprep.subr.bf16.mxu0 0
    %4961 = vmatpush1.bf16.msra.mxu0 %v4758
    %4962 = vmatprep.subr.bf16.mxu0 0
    %4963 = vmatpush1.bf16.msra.mxu0 %v4760
    %4964 = vmatprep.subr.bf16.mxu0 0
    %4965 = vmatpush1.bf16.msra.mxu0 %v4764
    %4966 = vmatprep.subr.bf16.mxu0 0
    %4967 = vmatpush1.bf16.msra.mxu0 %v4766
    %4968 = vmatprep.subr.bf16.mxu0 0
    %4969 = vmatpush1.bf16.msra.mxu0 %v4770
    %4970 = vmatprep.subr.bf16.mxu0 0
    %4971 = vmatpush1.bf16.msra.mxu0 %v4772
    %4972 = vmatprep.subr.bf16.mxu0 0
    %4973 = vmatpush1.bf16.msra.mxu0 %v4710
    %4974 = vmatprep.subr.bf16.mxu0 0
    %4975 = vmatpush1.bf16.msra.mxu0 %v4714
    %4976 = vmatprep.subr.bf16.mxu0 0
    %4977 = vmatpush1.bf16.msra.mxu0 %v4778
    %4978 = vmatprep.subr.bf16.mxu0 0
    %4979 = vmatpush1.bf16.msra.mxu0 %v4780
    %4980 = vmatprep.subr.bf16.mxu0 0
    %4981 = vmatpush1.bf16.msra.mxu0 %v4784
    %4982 = vmatprep.subr.bf16.mxu0 0
    %4983 = vmatpush1.bf16.msra.mxu0 %v4786
    %4984 = vmatprep.subr.bf16.mxu0 0
    %4985 = vmatpush1.bf16.msra.mxu0 %v4790
    %4986 = vmatprep.subr.bf16.mxu0 0
    %4987 = vmatpush1.bf16.msra.mxu0 %v4792
    %4988 = vmatprep.mubr.bf16.mxu0 %v4862
    %4989 = vmatmul.mubr.bf16.gmra.mrb[0].mxu0 %v4861
    %v4990 = vpop.f32.mrb[0].mxu0
    %v4991 = vadd.f32 %v4926, %v4990
    %v4992 = vpop.f32.mrb[0].mxu0
    %v4993 = vpop.f32.mrb[0].mxu0
    %v4994 = vadd.f32 %v4929, %v4993
    %v4995 = vpop.f32.mrb[0].mxu0
    %4996 = vmatprep.mubr.bf16.mxu0 %v4866
    %4997 = vmatmul.mubr.bf16.gmra.mrb[0].mxu0 %v4865
    %v4998 = vpop.f32.mrb[0].mxu0
    %v4999 = vadd.f32 %v4934, %v4998
    %v5000 = vpop.f32.mrb[0].mxu0
    %v5001 = vpop.f32.mrb[0].mxu0
    %v5002 = vadd.f32 %v4937, %v5001
    %v5003 = vpop.f32.mrb[0].mxu0
    %5004 = vmatprep.mubr.bf16.mxu0 %v4870
    %5005 = vmatmul.mubr.bf16.gmra.mrb[0].mxu0 %v4869
    %v5006 = vpop.f32.mrb[0].mxu0
    %v5007 = vadd.f32 %v4942, %v5006
    %v5008 = vpop.f32.mrb[0].mxu0
    %v5009 = vpop.f32.mrb[0].mxu0
    %v5010 = vadd.f32 %v4945, %v5009
    %v5011 = vpop.f32.mrb[0].mxu0
    %5012 = vmatprep.mubr.bf16.mxu0 %v4874
    %5013 = vmatmul.mubr.bf16.gmra.mrb[0].mxu0 %v4873
    %v5014 = vpop.f32.mrb[0].mxu0
    %v5015 = vadd.f32 %v4950, %v5014
    %v5016 = vpop.f32.mrb[0].mxu0
    %v5017 = vpop.f32.mrb[0].mxu0
    %v5018 = vadd.f32 %v4953, %v5017
    %v5019 = vpop.f32.mrb[0].mxu0
    %5020 = vdwg.mxu0
    %v5021 = vld [vmem:[%s10] sm:$0xff]
    %v5022 = vld [vmem:[%s10 + $0x8] sm:$0xff]
    %v5023 = vld [vmem:[%s10 + $0x10] sm:$0xff]
    %v5024 = vld [vmem:[%s10 + $0x18] sm:$0xff]
    %v5025 = vld [vmem:[%s10 + $0x20] sm:$0xff]
    %v5026 = vld [vmem:[%s10 + $0x28] sm:$0xff]
    %v5027 = vld [vmem:[%s10 + $0x30] sm:$0xff]
    %v5028 = vld [vmem:[%s10 + $0x38] sm:$0xff]
    %v5029 = vld [vmem:[%s11] sm:$0xff]
    %v5030 = vld [vmem:[%s11 + $0x8] sm:$0xff]
    %v5031 = vld [vmem:[%s11 + $0x10] sm:$0xff]
    %v5032 = vld [vmem:[%s11 + $0x18] sm:$0xff]
    %v5033 = vld [vmem:[%s11 + $0x20] sm:$0xff]
    %v5034 = vld [vmem:[%s11 + $0x28] sm:$0xff]
    %v5035 = vld [vmem:[%s11 + $0x30] sm:$0xff]
    %v5036 = vld [vmem:[%s11 + $0x38] sm:$0xff]
    %vm5037 = vcmask 261120
    %v5038 = vsel %vm5037, %v4991, 0.0
    %5039 = vadd.xlane.f32.xlu0 %v5038
    %v5040 = vpop.xlane.xlu0 %5039
    %v5041 = vsel %vm5037, %v4994, 0.0
    %5042 = vadd.xlane.f32.xlu0 %v5041
    %v5043 = vpop.xlane.xlu0 %5042
    %v5044 = vsel %vm5037, %v4999, 0.0
    %5045 = vadd.xlane.f32.xlu0 %v5044
    %v5046 = vpop.xlane.xlu0 %5045
    %v5047 = vsel %vm5037, %v5002, 0.0
    %5048 = vadd.xlane.f32.xlu0 %v5047
    %v5049 = vpop.xlane.xlu0 %5048
    %v5050 = vsel %vm5037, %v5007, 0.0
    %5051 = vadd.xlane.f32.xlu0 %v5050
    %v5052 = vpop.xlane.xlu0 %5051
    %v5053 = vsel %vm5037, %v5010, 0.0
    %5054 = vadd.xlane.f32.xlu0 %v5053
    %v5055 = vpop.xlane.xlu0 %5054
    %v5056 = vsel %vm5037, %v5015, 0.0
    %5057 = vadd.xlane.f32.xlu0 %v5056
    %v5058 = vpop.xlane.xlu0 %5057
    %v5059 = vsel %vm5037, %v5018, 0.0
    %5060 = vadd.xlane.f32.xlu0 %v5059
    %v5061 = vpop.xlane.xlu0 %5060
    %v5062 = vmul.f32 %v5040, 0.03125
    %v5063 = vmul.f32 %v5043, 0.03125
    %v5064 = vmul.f32 %v5046, 0.03125
    %v5065 = vmul.f32 %v5049, 0.03125
    %v5066 = vmul.f32 %v5052, 0.03125
    %v5067 = vmul.f32 %v5055, 0.03125
    %v5068 = vmul.f32 %v5058, 0.03125
    %v5069 = vmul.f32 %v5061, 0.03125
    %v5070 = vmul.f32 %v4991, %v4991
    %v5071 = vmul.f32 %v4994, %v4994
    %v5072 = vmul.f32 %v4999, %v4999
    %v5073 = vmul.f32 %v5002, %v5002
    %v5074 = vmul.f32 %v5007, %v5007
    %v5075 = vmul.f32 %v5010, %v5010
    %v5076 = vmul.f32 %v5015, %v5015
    %v5077 = vmul.f32 %v5018, %v5018
    %v5078 = vsel %vm5037, %v5070, 0.0
    %5079 = vadd.xlane.f32.xlu0 %v5078
    %v5080 = vpop.xlane.xlu0 %5079
    %v5081 = vsel %vm5037, %v5071, 0.0
    %5082 = vadd.xlane.f32.xlu0 %v5081
    %v5083 = vpop.xlane.xlu0 %5082
    %v5084 = vsel %vm5037, %v5072, 0.0
    %5085 = vadd.xlane.f32.xlu0 %v5084
    %v5086 = vpop.xlane.xlu0 %5085
    %v5087 = vsel %vm5037, %v5073, 0.0
    %5088 = vadd.xlane.f32.xlu0 %v5087
    %v5089 = vpop.xlane.xlu0 %5088
    %v5090 = vsel %vm5037, %v5074, 0.0
    %5091 = vadd.xlane.f32.xlu0 %v5090
    %v5092 = vpop.xlane.xlu0 %5091
    %v5093 = vsel %vm5037, %v5075, 0.0
    %5094 = vadd.xlane.f32.xlu0 %v5093
    %v5095 = vpop.xlane.xlu0 %5094
    %v5096 = vsel %vm5037, %v5076, 0.0
    %5097 = vadd.xlane.f32.xlu0 %v5096
    %v5098 = vpop.xlane.xlu0 %5097
    %v5099 = vsel %vm5037, %v5077, 0.0
    %5100 = vadd.xlane.f32.xlu0 %v5099
    %v5101 = vpop.xlane.xlu0 %5100
    %v5102 = vmul.f32 %v5080, 0.03125
    %v5103 = vmul.f32 %v5083, 0.03125
    %v5104 = vmul.f32 %v5086, 0.03125
    %v5105 = vmul.f32 %v5089, 0.03125
    %v5106 = vmul.f32 %v5092, 0.03125
    %v5107 = vmul.f32 %v5095, 0.03125
    %v5108 = vmul.f32 %v5098, 0.03125
    %v5109 = vmul.f32 %v5101, 0.03125
    %v5110 = vmul.f32 %v5062, %v5062
    %v5111 = vmul.f32 %v5063, %v5063
    %v5112 = vmul.f32 %v5064, %v5064
    %v5113 = vmul.f32 %v5065, %v5065
    %v5114 = vmul.f32 %v5066, %v5066
    %v5115 = vmul.f32 %v5067, %v5067
    %v5116 = vmul.f32 %v5068, %v5068
    %v5117 = vmul.f32 %v5069, %v5069
    %v5118 = vsub.f32 %v5102, %v5110
    %v5119 = vsub.f32 %v5103, %v5111
    %v5120 = vsub.f32 %v5104, %v5112
    %v5121 = vsub.f32 %v5105, %v5113
    %v5122 = vsub.f32 %v5106, %v5114
    %v5123 = vsub.f32 %v5107, %v5115
    %v5124 = vsub.f32 %v5108, %v5116
    %v5125 = vsub.f32 %v5109, %v5117
    %v5126 = vsub.f32 %v4991, %v5062
    %v5127 = vsub.f32 %v4994, %v5063
    %v5128 = vsub.f32 %v4999, %v5064
    %v5129 = vsub.f32 %v5002, %v5065
    %v5130 = vsub.f32 %v5007, %v5066
    %v5131 = vsub.f32 %v5010, %v5067
    %v5132 = vsub.f32 %v5015, %v5068
    %v5133 = vsub.f32 %v5018, %v5069
    %v5134 = vadd.f32 %v5118, 1e-05
    %v5135 = vadd.f32 %v5119, 1e-05
    %v5136 = vadd.f32 %v5120, 1e-05
    %v5137 = vadd.f32 %v5121, 1e-05
    %v5138 = vadd.f32 %v5122, 1e-05
    %v5139 = vadd.f32 %v5123, 1e-05
    %v5140 = vadd.f32 %v5124, 1e-05
    %v5141 = vadd.f32 %v5125, 1e-05
    %v5142 = vrsqrt.pop %v5134
    %v5143 = vrsqrt.pop %v5135
    %v5144 = vrsqrt.pop %v5136
    %v5145 = vrsqrt.pop %v5137
    %v5146 = vrsqrt.pop %v5138
    %v5147 = vrsqrt.pop %v5139
    %v5148 = vrsqrt.pop %v5140
    %v5149 = vrsqrt.pop %v5141
    %v5150 = vmul.f32 %v5021, %v5142
    %v5151 = vmul.f32 %v5022, %v5143
    %v5152 = vmul.f32 %v5023, %v5144
    %v5153 = vmul.f32 %v5024, %v5145
    %v5154 = vmul.f32 %v5025, %v5146
    %v5155 = vmul.f32 %v5026, %v5147
    %v5156 = vmul.f32 %v5027, %v5148
    %v5157 = vmul.f32 %v5028, %v5149
    %5159 = vset.pattern.permute.xlu0 0
    %5160 = vperm.xlu0 %5159, %v5150
    %v5161 = vpop.permute.xlu0 %5160
    %5164 = vset.pattern.permute.xlu0 0
    %5165 = vperm.xlu0 %5164, %v5151
    %v5166 = vpop.permute.xlu0 %5165
    %5169 = vset.pattern.permute.xlu0 0
    %5170 = vperm.xlu0 %5169, %v5152
    %v5171 = vpop.permute.xlu0 %5170
    %5174 = vset.pattern.permute.xlu0 0
    %5175 = vperm.xlu0 %5174, %v5153
    %v5176 = vpop.permute.xlu0 %5175
    %5179 = vset.pattern.permute.xlu0 0
    %5180 = vperm.xlu0 %5179, %v5154
    %v5181 = vpop.permute.xlu0 %5180
    %5184 = vset.pattern.permute.xlu0 0
    %5185 = vperm.xlu0 %5184, %v5155
    %v5186 = vpop.permute.xlu0 %5185
    %5189 = vset.pattern.permute.xlu0 0
    %5190 = vperm.xlu0 %5189, %v5156
    %v5191 = vpop.permute.xlu0 %5190
    %5194 = vset.pattern.permute.xlu0 0
    %5195 = vperm.xlu0 %5194, %v5157
    %v5196 = vpop.permute.xlu0 %5195
    %v5198 = vmul.f32 %v5126, %v5161
    %v5199 = vmul.f32 %v5127, %v5166
    %v5200 = vmul.f32 %v5128, %v5171
    %v5201 = vmul.f32 %v5129, %v5176
    %v5202 = vmul.f32 %v5130, %v5181
    %v5203 = vmul.f32 %v5131, %v5186
    %v5204 = vmul.f32 %v5132, %v5191
    %v5205 = vmul.f32 %v5133, %v5196
    %5207 = vset.pattern.permute.xlu0 0
    %5208 = vperm.xlu0 %5207, %v5029
    %v5209 = vpop.permute.xlu0 %5208
    %5212 = vset.pattern.permute.xlu0 0
    %5213 = vperm.xlu0 %5212, %v5030
    %v5214 = vpop.permute.xlu0 %5213
    %5217 = vset.pattern.permute.xlu0 0
    %5218 = vperm.xlu0 %5217, %v5031
    %v5219 = vpop.permute.xlu0 %5218
    %5222 = vset.pattern.permute.xlu0 0
    %5223 = vperm.xlu0 %5222, %v5032
    %v5224 = vpop.permute.xlu0 %5223
    %5227 = vset.pattern.permute.xlu0 0
    %5228 = vperm.xlu0 %5227, %v5033
    %v5229 = vpop.permute.xlu0 %5228
    %5232 = vset.pattern.permute.xlu0 0
    %5233 = vperm.xlu0 %5232, %v5034
    %v5234 = vpop.permute.xlu0 %5233
    %5237 = vset.pattern.permute.xlu0 0
    %5238 = vperm.xlu0 %5237, %v5035
    %v5239 = vpop.permute.xlu0 %5238
    %5242 = vset.pattern.permute.xlu0 0
    %5243 = vperm.xlu0 %5242, %v5036
    %v5244 = vpop.permute.xlu0 %5243
    %v5246 = vadd.f32 %v5198, %v5209
    %v5247 = vadd.f32 %v5199, %v5214
    %v5248 = vadd.f32 %v5200, %v5219
    %v5249 = vadd.f32 %v5201, %v5224
    %v5250 = vadd.f32 %v5202, %v5229
    %v5251 = vadd.f32 %v5203, %v5234
    %v5252 = vadd.f32 %v5204, %v5239
    %v5253 = vadd.f32 %v5205, %v5244
    %v5254 = vmul.f32 %v5246, 0.2
    %v5255 = vmul.f32 %v5247, 0.2
    %v5256 = vmul.f32 %v5248, 0.2
    %v5257 = vmul.f32 %v5249, 0.2
    %v5258 = vmul.f32 %v5250, 0.2
    %v5259 = vmul.f32 %v5251, 0.2
    %v5260 = vmul.f32 %v5252, 0.2
    %v5261 = vmul.f32 %v5253, 0.2
    %v5262 = vmax.f32 %v5246, %v5254
    %v5263 = vmax.f32 %v5247, %v5255
    %v5264 = vmax.f32 %v5248, %v5256
    %v5265 = vmax.f32 %v5249, %v5257
    %v5266 = vmax.f32 %v5250, %v5258
    %v5267 = vmax.f32 %v5251, %v5259
    %v5268 = vmax.f32 %v5252, %v5260
    %v5269 = vmax.f32 %v5253, %v5261
    %v5270 = vpack.c.bf16 %v5263, %v5262
    %v5271 = vpack.c.bf16 %v5265, %v5264
    %v5272 = vpack.c.bf16 %v5267, %v5266
    %v5273 = vpack.c.bf16 %v5269, %v5268
    %5278 = vrot.lane.b32.xlu0 %v5270, 126
    %v5279 = vpop.permute.xlu0 %5278
    %5280 = vrot.lane.b32.xlu0 %v5271, 126
    %v5281 = vpop.permute.xlu0 %5280
    %5282 = vrot.lane.b32.xlu0 %v5272, 126
    %v5283 = vpop.permute.xlu0 %5282
    %5284 = vrot.lane.b32.xlu0 %v5273, 126
    %v5285 = vpop.permute.xlu0 %5284
    %5290 = vrot.lane.b32.xlu0 %v5270, 124
    %v5291 = vpop.permute.xlu0 %5290
    %5292 = vrot.lane.b32.xlu0 %v5271, 124
    %v5293 = vpop.permute.xlu0 %5292
    %5294 = vrot.lane.b32.xlu0 %v5272, 124
    %v5295 = vpop.permute.xlu0 %5294
    %5296 = vrot.lane.b32.xlu0 %v5273, 124
    %v5297 = vpop.permute.xlu0 %5296
    %5302 = vrot.lane.b32.xlu0 %v5270, 122
    %v5303 = vpop.permute.xlu0 %5302
    %5304 = vrot.lane.b32.xlu0 %v5271, 122
    %v5305 = vpop.permute.xlu0 %5304
    %5306 = vrot.lane.b32.xlu0 %v5272, 122
    %v5307 = vpop.permute.xlu0 %5306
    %5308 = vrot.lane.b32.xlu0 %v5273, 122
    %v5309 = vpop.permute.xlu0 %5308
    %5314 = vrot.lane.b32.xlu0 %v5270, 120
    %v5315 = vpop.permute.xlu0 %5314
    %5316 = vrot.lane.b32.xlu0 %v5271, 120
    %v5317 = vpop.permute.xlu0 %5316
    %5318 = vrot.lane.b32.xlu0 %v5272, 120
    %v5319 = vpop.permute.xlu0 %5318
    %5320 = vrot.lane.b32.xlu0 %v5273, 120
    %v5321 = vpop.permute.xlu0 %5320
    %5326 = vrot.lane.b32.xlu0 %v5270, 118
    %v5327 = vpop.permute.xlu0 %5326
    %5328 = vrot.lane.b32.xlu0 %v5271, 118
    %v5329 = vpop.permute.xlu0 %5328
    %5330 = vrot.lane.b32.xlu0 %v5272, 118
    %v5331 = vpop.permute.xlu0 %5330
    %5332 = vrot.lane.b32.xlu0 %v5273, 118
    %v5333 = vpop.permute.xlu0 %5332
    %5338 = vrot.lane.b32.xlu0 %v5270, 116
    %v5339 = vpop.permute.xlu0 %5338
    %5340 = vrot.lane.b32.xlu0 %v5271, 116
    %v5341 = vpop.permute.xlu0 %5340
    %5342 = vrot.lane.b32.xlu0 %v5272, 116
    %v5343 = vpop.permute.xlu0 %5342
    %5344 = vrot.lane.b32.xlu0 %v5273, 116
    %v5345 = vpop.permute.xlu0 %5344
    %5350 = vrot.lane.b32.xlu0 %v5270, 114
    %v5351 = vpop.permute.xlu0 %5350
    %5352 = vrot.lane.b32.xlu0 %v5271, 114
    %v5353 = vpop.permute.xlu0 %5352
    %5354 = vrot.lane.b32.xlu0 %v5272, 114
    %v5355 = vpop.permute.xlu0 %5354
    %5356 = vrot.lane.b32.xlu0 %v5273, 114
    %v5357 = vpop.permute.xlu0 %5356
    %5362 = vrot.lane.b32.xlu0 %v5270, 112
    %v5363 = vpop.permute.xlu0 %5362
    %5364 = vrot.lane.b32.xlu0 %v5271, 112
    %v5365 = vpop.permute.xlu0 %5364
    %5366 = vrot.lane.b32.xlu0 %v5272, 112
    %v5367 = vpop.permute.xlu0 %5366
    %5368 = vrot.lane.b32.xlu0 %v5273, 112
    %v5369 = vpop.permute.xlu0 %5368
    %5374 = vrot.lane.b32.xlu0 %v5270, 110
    %v5375 = vpop.permute.xlu0 %5374
    %5376 = vrot.lane.b32.xlu0 %v5271, 110
    %v5377 = vpop.permute.xlu0 %5376
    %5378 = vrot.lane.b32.xlu0 %v5272, 110
    %v5379 = vpop.permute.xlu0 %5378
    %5380 = vrot.lane.b32.xlu0 %v5273, 110
    %v5381 = vpop.permute.xlu0 %5380
    %5386 = vrot.lane.b32.xlu0 %v5270, 108
    %v5387 = vpop.permute.xlu0 %5386
    %5388 = vrot.lane.b32.xlu0 %v5271, 108
    %v5389 = vpop.permute.xlu0 %5388
    %5390 = vrot.lane.b32.xlu0 %v5272, 108
    %v5391 = vpop.permute.xlu0 %5390
    %5392 = vrot.lane.b32.xlu0 %v5273, 108
    %v5393 = vpop.permute.xlu0 %5392
    %5398 = vrot.lane.b32.xlu0 %v5270, 106
    %v5399 = vpop.permute.xlu0 %5398
    %5400 = vrot.lane.b32.xlu0 %v5271, 106
    %v5401 = vpop.permute.xlu0 %5400
    %5402 = vrot.lane.b32.xlu0 %v5272, 106
    %v5403 = vpop.permute.xlu0 %5402
    %5404 = vrot.lane.b32.xlu0 %v5273, 106
    %v5405 = vpop.permute.xlu0 %5404
    %5410 = vrot.lane.b32.xlu0 %v5270, 104
    %v5411 = vpop.permute.xlu0 %5410
    %5412 = vrot.lane.b32.xlu0 %v5271, 104
    %v5413 = vpop.permute.xlu0 %5412
    %5414 = vrot.lane.b32.xlu0 %v5272, 104
    %v5415 = vpop.permute.xlu0 %5414
    %5416 = vrot.lane.b32.xlu0 %v5273, 104
    %v5417 = vpop.permute.xlu0 %5416
    %5422 = vrot.lane.b32.xlu0 %v5270, 102
    %v5423 = vpop.permute.xlu0 %5422
    %5424 = vrot.lane.b32.xlu0 %v5271, 102
    %v5425 = vpop.permute.xlu0 %5424
    %5426 = vrot.lane.b32.xlu0 %v5272, 102
    %v5427 = vpop.permute.xlu0 %5426
    %5428 = vrot.lane.b32.xlu0 %v5273, 102
    %v5429 = vpop.permute.xlu0 %5428
    %5434 = vrot.lane.b32.xlu0 %v5270, 100
    %v5435 = vpop.permute.xlu0 %5434
    %5436 = vrot.lane.b32.xlu0 %v5271, 100
    %v5437 = vpop.permute.xlu0 %5436
    %5438 = vrot.lane.b32.xlu0 %v5272, 100
    %v5439 = vpop.permute.xlu0 %5438
    %5440 = vrot.lane.b32.xlu0 %v5273, 100
    %v5441 = vpop.permute.xlu0 %5440
    %5446 = vrot.lane.b32.xlu0 %v5270, 98
    %v5447 = vpop.permute.xlu0 %5446
    %5448 = vrot.lane.b32.xlu0 %v5271, 98
    %v5449 = vpop.permute.xlu0 %5448
    %5450 = vrot.lane.b32.xlu0 %v5272, 98
    %v5451 = vpop.permute.xlu0 %5450
    %5452 = vrot.lane.b32.xlu0 %v5273, 98
    %v5453 = vpop.permute.xlu0 %5452
    %v5458 = vld [vmem:[%s12] sm:$0xff]
    %v5460 = vcombine.high %v5458, %v5458
    %v5462 = vunpack.c.l.s4 1966171168
    %v5463 = vunpack.c.0.s8 %v5462
    %v5464 = vlaneseq
    %v5465 = vshrl.u32 %v5464, 7
    %v5466 = vsub.s32 %v5463, %v5465
    %v5467 = vrot.slane %v5458, %v5466
    %v5469 = vunpack.c.l.s4 1966171168
    %v5470 = vunpack.c.0.s8 %v5469
    %v5471 = vlaneseq
    %v5472 = vshrl.u32 %v5471, 7
    %v5473 = vsub.s32 %v5470, %v5472
    %v5474 = vrot.slane %v5460, %v5473
    %v5475 = vcombine.high %v5467, %v5467
    %v5476 = vcombine.high %v5474, %v5474
    %v5478 = vunpack.c.l.s4 1966171168
    %v5479 = vunpack.c.0.s8 %v5478
    %v5480 = vlaneseq
    %v5481 = vshrl.u32 %v5480, 7
    %v5482 = vsub.s32 %v5479, %v5481
    %v5483 = vrot.slane %v5467, %v5482
    %v5485 = vunpack.c.l.s4 1966171168
    %v5486 = vunpack.c.0.s8 %v5485
    %v5487 = vlaneseq
    %v5488 = vshrl.u32 %v5487, 7
    %v5489 = vsub.s32 %v5486, %v5488
    %v5490 = vrot.slane %v5474, %v5489
    %v5492 = vunpack.c.l.s4 1966171168
    %v5493 = vunpack.c.0.s8 %v5492
    %v5494 = vlaneseq
    %v5495 = vshrl.u32 %v5494, 7
    %v5496 = vsub.s32 %v5493, %v5495
    %v5497 = vrot.slane %v5475, %v5496
    %v5499 = vunpack.c.l.s4 1966171168
    %v5500 = vunpack.c.0.s8 %v5499
    %v5501 = vlaneseq
    %v5502 = vshrl.u32 %v5501, 7
    %v5503 = vsub.s32 %v5500, %v5502
    %v5504 = vrot.slane %v5476, %v5503
    %v5505 = vcombine.high %v5483, %v5483
    %v5506 = vcombine.high %v5490, %v5490
    %v5507 = vcombine.high %v5497, %v5497
    %v5508 = vcombine.high %v5504, %v5504
    %5517 = vmatprep.subr.bf16.mxu0 0
    %5518 = vmatpush1.bf16.msra.mxu0 %v5270
    %5519 = vmatprep.subr.bf16.mxu0 0
    %5520 = vmatpush1.bf16.msra.mxu0 %v5271
    %5521 = vmatprep.subr.bf16.mxu0 0
    %5522 = vmatpush1.bf16.msra.mxu0 %v5272
    %5523 = vmatprep.subr.bf16.mxu0 0
    %5524 = vmatpush1.bf16.msra.mxu0 %v5273
    %5525 = vmatprep.subr.bf16.mxu0 0
    %5526 = vmatpush1.bf16.msra.mxu0 %v5279
    %5527 = vmatprep.subr.bf16.mxu0 0
    %5528 = vmatpush1.bf16.msra.mxu0 %v5281
    %5529 = vmatprep.subr.bf16.mxu0 0
    %5530 = vmatpush1.bf16.msra.mxu0 %v5283
    %5531 = vmatprep.subr.bf16.mxu0 0
    %5532 = vmatpush1.bf16.msra.mxu0 %v5285
    %5533 = vmatprep.subr.bf16.mxu0 0
    %5534 = vmatpush1.bf16.msra.mxu0 %v5291
    %5535 = vmatprep.subr.bf16.mxu0 0
    %5536 = vmatpush1.bf16.msra.mxu0 %v5293
    %5537 = vmatprep.subr.bf16.mxu0 0
    %5538 = vmatpush1.bf16.msra.mxu0 %v5295
    %5539 = vmatprep.subr.bf16.mxu0 0
    %5540 = vmatpush1.bf16.msra.mxu0 %v5297
    %5541 = vmatprep.subr.bf16.mxu0 0
    %5542 = vmatpush1.bf16.msra.mxu0 %v5303
    %5543 = vmatprep.subr.bf16.mxu0 0
    %5544 = vmatpush1.bf16.msra.mxu0 %v5305
    %5545 = vmatprep.subr.bf16.mxu0 0
    %5546 = vmatpush1.bf16.msra.mxu0 %v5307
    %5547 = vmatprep.subr.bf16.mxu0 0
    %5548 = vmatpush1.bf16.msra.mxu0 %v5309
    %5549 = vmatprep.mubr.bf16.mxu0 %v5497
    %5550 = vmatmul.mubr.bf16.gmra.mrb[0].mxu0 %v5483
    %v5551 = vpop.f32.mrb[0].mxu0
    %v5552 = vadd.f32 0.0, %v5551
    %v5553 = vpop.f32.mrb[0].mxu0
    %v5554 = vpop.f32.mrb[0].mxu0
    %v5555 = vpop.f32.mrb[0].mxu0
    %5556 = vdwg.mxu0
    %5557 = vmatprep.subr.bf16.mxu0 0
    %5558 = vmatpush1.bf16.msra.mxu0 %v5315
    %5559 = vmatprep.subr.bf16.mxu0 0
    %5560 = vmatpush1.bf16.msra.mxu0 %v5317
    %5561 = vmatprep.subr.bf16.mxu0 0
    %5562 = vmatpush1.bf16.msra.mxu0 %v5319
    %5563 = vmatprep.subr.bf16.mxu0 0
    %5564 = vmatpush1.bf16.msra.mxu0 %v5321
    %5565 = vmatprep.subr.bf16.mxu0 0
    %5566 = vmatpush1.bf16.msra.mxu0 %v5327
    %5567 = vmatprep.subr.bf16.mxu0 0
    %5568 = vmatpush1.bf16.msra.mxu0 %v5329
    %5569 = vmatprep.subr.bf16.mxu0 0
    %5570 = vmatpush1.bf16.msra.mxu0 %v5331
    %5571 = vmatprep.subr.bf16.mxu0 0
    %5572 = vmatpush1.bf16.msra.mxu0 %v5333
    %5573 = vmatprep.subr.bf16.mxu0 0
    %5574 = vmatpush1.bf16.msra.mxu0 %v5339
    %5575 = vmatprep.subr.bf16.mxu0 0
    %5576 = vmatpush1.bf16.msra.mxu0 %v5341
    %5577 = vmatprep.subr.bf16.mxu0 0
    %5578 = vmatpush1.bf16.msra.mxu0 %v5343
    %5579 = vmatprep.subr.bf16.mxu0 0
    %5580 = vmatpush1.bf16.msra.mxu0 %v5345
    %5581 = vmatprep.subr.bf16.mxu0 0
    %5582 = vmatpush1.bf16.msra.mxu0 %v5351
    %5583 = vmatprep.subr.bf16.mxu0 0
    %5584 = vmatpush1.bf16.msra.mxu0 %v5353
    %5585 = vmatprep.subr.bf16.mxu0 0
    %5586 = vmatpush1.bf16.msra.mxu0 %v5355
    %5587 = vmatprep.subr.bf16.mxu0 0
    %5588 = vmatpush1.bf16.msra.mxu0 %v5357
    %5589 = vmatprep.mubr.bf16.mxu0 %v5507
    %5590 = vmatmul.mubr.bf16.gmra.mrb[0].mxu0 %v5505
    %v5591 = vpop.f32.mrb[0].mxu0
    %v5592 = vadd.f32 %v5552, %v5591
    %v5593 = vpop.f32.mrb[0].mxu0
    %v5594 = vpop.f32.mrb[0].mxu0
    %v5595 = vpop.f32.mrb[0].mxu0
    %5596 = vdwg.mxu0
    %5597 = vmatprep.subr.bf16.mxu0 0
    %5598 = vmatpush1.bf16.msra.mxu0 %v5363
    %5599 = vmatprep.subr.bf16.mxu0 0
    %5600 = vmatpush1.bf16.msra.mxu0 %v5365
    %5601 = vmatprep.subr.bf16.mxu0 0
    %5602 = vmatpush1.bf16.msra.mxu0 %v5367
    %5603 = vmatprep.subr.bf16.mxu0 0
    %5604 = vmatpush1.bf16.msra.mxu0 %v5369
    %5605 = vmatprep.subr.bf16.mxu0 0
    %5606 = vmatpush1.bf16.msra.mxu0 %v5375
    %5607 = vmatprep.subr.bf16.mxu0 0
    %5608 = vmatpush1.bf16.msra.mxu0 %v5377
    %5609 = vmatprep.subr.bf16.mxu0 0
    %5610 = vmatpush1.bf16.msra.mxu0 %v5379
    %5611 = vmatprep.subr.bf16.mxu0 0
    %5612 = vmatpush1.bf16.msra.mxu0 %v5381
    %5613 = vmatprep.subr.bf16.mxu0 0
    %5614 = vmatpush1.bf16.msra.mxu0 %v5387
    %5615 = vmatprep.subr.bf16.mxu0 0
    %5616 = vmatpush1.bf16.msra.mxu0 %v5389
    %5617 = vmatprep.subr.bf16.mxu0 0
    %5618 = vmatpush1.bf16.msra.mxu0 %v5391
    %5619 = vmatprep.subr.bf16.mxu0 0
    %5620 = vmatpush1.bf16.msra.mxu0 %v5393
    %5621 = vmatprep.subr.bf16.mxu0 0
    %5622 = vmatpush1.bf16.msra.mxu0 %v5399
    %5623 = vmatprep.subr.bf16.mxu0 0
    %5624 = vmatpush1.bf16.msra.mxu0 %v5401
    %5625 = vmatprep.subr.bf16.mxu0 0
    %5626 = vmatpush1.bf16.msra.mxu0 %v5403
    %5627 = vmatprep.subr.bf16.mxu0 0
    %5628 = vmatpush1.bf16.msra.mxu0 %v5405
    %5629 = vmatprep.mubr.bf16.mxu0 %v5504
    %5630 = vmatmul.mubr.bf16.gmra.mrb[0].mxu0 %v5490
    %v5631 = vpop.f32.mrb[0].mxu0
    %v5632 = vadd.f32 %v5592, %v5631
    %v5633 = vpop.f32.mrb[0].mxu0
    %v5634 = vpop.f32.mrb[0].mxu0
    %v5635 = vpop.f32.mrb[0].mxu0
    %5636 = vdwg.mxu0
    %5637 = vmatprep.subr.bf16.mxu0 0
    %5638 = vmatpush1.bf16.msra.mxu0 %v5411
    %5639 = vmatprep.subr.bf16.mxu0 0
    %5640 = vmatpush1.bf16.msra.mxu0 %v5413
    %5641 = vmatprep.subr.bf16.mxu0 0
    %5642 = vmatpush1.bf16.msra.mxu0 %v5415
    %5643 = vmatprep.subr.bf16.mxu0 0
    %5644 = vmatpush1.bf16.msra.mxu0 %v5417
    %5645 = vmatprep.subr.bf16.mxu0 0
    %5646 = vmatpush1.bf16.msra.mxu0 %v5423
    %5647 = vmatprep.subr.bf16.mxu0 0
    %5648 = vmatpush1.bf16.msra.mxu0 %v5425
    %5649 = vmatprep.subr.bf16.mxu0 0
    %5650 = vmatpush1.bf16.msra.mxu0 %v5427
    %5651 = vmatprep.subr.bf16.mxu0 0
    %5652 = vmatpush1.bf16.msra.mxu0 %v5429
    %5653 = vmatprep.subr.bf16.mxu0 0
    %5654 = vmatpush1.bf16.msra.mxu0 %v5435
    %5655 = vmatprep.subr.bf16.mxu0 0
    %5656 = vmatpush1.bf16.msra.mxu0 %v5437
    %5657 = vmatprep.subr.bf16.mxu0 0
    %5658 = vmatpush1.bf16.msra.mxu0 %v5439
    %5659 = vmatprep.subr.bf16.mxu0 0
    %5660 = vmatpush1.bf16.msra.mxu0 %v5441
    %5661 = vmatprep.subr.bf16.mxu0 0
    %5662 = vmatpush1.bf16.msra.mxu0 %v5447
    %5663 = vmatprep.subr.bf16.mxu0 0
    %5664 = vmatpush1.bf16.msra.mxu0 %v5449
    %5665 = vmatprep.subr.bf16.mxu0 0
    %5666 = vmatpush1.bf16.msra.mxu0 %v5451
    %5667 = vmatprep.subr.bf16.mxu0 0
    %5668 = vmatpush1.bf16.msra.mxu0 %v5453
    %5669 = vmatprep.mubr.bf16.mxu0 %v5508
    %5670 = vmatmul.mubr.bf16.gmra.mrb[0].mxu0 %v5506
    %v5671 = vpop.f32.mrb[0].mxu0
    %v5672 = vadd.f32 %v5632, %v5671
    %v5673 = vpop.f32.mrb[0].mxu0
    %v5674 = vpop.f32.mrb[0].mxu0
    %v5675 = vpop.f32.mrb[0].mxu0
    %5676 = vdwg.mxu0
    %v5677 = vsub.f32 0.0, %v5672
    %v5678 = vmul.f32 %v5677, 1.442695
    %v5679 = vpow.pop %v5678
    %v5680 = vadd.f32 %v5679, 1.0
    %v5681 = vrcp.pop %v5680
    %vm5682 = vcmask 8192
    %5683 = vst.msk [vmem:[#allocation2] sm:$0x1] %vm5682, %v5681
    // Predicated region
    $region54: #{discriminator_128_forward.3} parent=1 // pred_check
      _
    $region55: #{discriminator_128_forward.3} parent=1 // pred_check_branch
      %5685 = sbr.rel (0) target = $region57
    $region56: #{discriminator_128_forward.3} parent=1 // pred_region
      %s5687 = ssub.s32 16, 16
      %5688 = vsyncadd [#allocation3], %s5687
      %s5690 = sshll.u32 [#allocation2], 4
      %s5691 = int_to_ptr.vmem [resolvable:$true] %s5690
      %5693 = dma.vmem_to_hbm [thread:$0]  %s5691, 16, %s13, [#allocation3]
    $region57: #{discriminator_128_forward.3} parent=1 // pred_fallthru
      _
    // Predicated region
    $region58: #{discriminator_128_forward.3} parent=1 // pred_check
      _
    $region59: #{discriminator_128_forward.3} parent=1 // pred_check_branch
      %5695 = sbr.rel (0) target = $region61
    $region60: #{discriminator_128_forward.3} parent=1 // pred_region
      %5696 = dma.done [#allocation3], 16
    $region61: #{discriminator_128_forward.3} parent=1 // pred_fallthru
      _
    %5697 = vsyncpa [#allocation3], 1

</llo_original>
